<compile_context>
chip_gen: v6e
topology: v6e:2x2x1
jax: 0.10.0
libtpu: 0.0.40
codegen_flags: <defaults>
</compile_context>

<pallas_src>
import math
import functools

import jax
import jax.numpy as jnp
from jax.experimental import pallas as pl
from jax.experimental.pallas import tpu as pltpu


# ----------------------------------------------------------------------------
# Pallas kernel: full transformer stack for one batch block
# ----------------------------------------------------------------------------
def _layer_norm(x, g, b, eps=1e-5):
    mu = jnp.mean(x, axis=-1, keepdims=True)
    var = jnp.mean((x - mu) ** 2, axis=-1, keepdims=True)
    return (x - mu) * jax.lax.rsqrt(var + eps) * g + b


def _transformer_kernel(num_heads, num_layers, head_dim, batch_block, seq_len,
                        x_ref, pe_ref, w_in_ref,
                        w_qkv_ref, b_qkv_ref, w_o_ref, w_ffn_ref, vec_ref,
                        w_out_ref, b_out_ref, o_ref):
    H, L, hd = num_heads, num_layers, head_dim
    Bb, S = batch_block, seq_len
    D = H * hd

    # (Bb, S, Cin) -> (Bb*S, Cin); position-wise matmuls run on the flat slab.
    x = x_ref[...].reshape(Bb * S, -1).astype(jnp.bfloat16)

    # input projection (sqrt(d_model) already folded into w_in) + pos-emb
    # (in-proj bias, also pre-scaled, is folded into pe).
    h = jnp.dot(x, w_in_ref[...], preferred_element_type=jnp.float32)
    h = (h.reshape(Bb, S, D) + pe_ref[...]).reshape(Bb * S, D)

    for l in range(L):
        # ---- fused QKV projection: one full-width matmul ----
        qkv = jnp.dot(h.astype(jnp.bfloat16), w_qkv_ref[l],
                      preferred_element_type=jnp.float32) + b_qkv_ref[l]
        qkv = qkv.reshape(Bb, S, 3 * D).astype(jnp.bfloat16)

        # ---- per-head (S, S) attention, batched over the Bb batch slices ----
        # (1/sqrt(hd) already folded into Wq / bq)
        ctx_heads = []
        for hh in range(H):
            q = qkv[:, :, hh * hd:(hh + 1) * hd]                    # (Bb, S, hd)
            k = qkv[:, :, D + hh * hd:D + (hh + 1) * hd]
            v = qkv[:, :, 2 * D + hh * hd:2 * D + (hh + 1) * hd]
            sc = jnp.einsum('bqd,bkd->bqk', q, k,
                            preferred_element_type=jnp.float32)      # (Bb, S, S)
            p = jnp.exp(sc - jnp.max(sc, axis=-1, keepdims=True))
            p = p * pl.reciprocal(jnp.sum(p, axis=-1, keepdims=True),
                                  approx=True)
            ctx_heads.append(
                jnp.einsum('bqk,bkd->bqd', p.astype(jnp.bfloat16), v,
                           preferred_element_type=jnp.float32))       # (Bb, S, hd)
        ctx = jnp.concatenate(ctx_heads, axis=-1).reshape(Bb * S, D)   # lane concat

        # ---- single full-width out-projection ----
        attn = jnp.dot(ctx.astype(jnp.bfloat16), w_o_ref[l],
                       preferred_element_type=jnp.float32) + vec_ref[l, 0]  # + bo
        h = _layer_norm(h + attn, vec_ref[l, 1], vec_ref[l, 2])             # ln1

        # ---- position-wise feed-forward (ReLU) ----
        ff = jnp.dot(h.astype(jnp.bfloat16), w_ffn_ref[l, 0],
                     preferred_element_type=jnp.float32) + vec_ref[l, 3]
        ff = jnp.maximum(ff, 0.0)
        ff = jnp.dot(ff.astype(jnp.bfloat16), w_ffn_ref[l, 1],
                     preferred_element_type=jnp.float32) + vec_ref[l, 4]
        h = _layer_norm(h + ff, vec_ref[l, 5], vec_ref[l, 6])               # ln2

    # lane-dense (padded to 128-lane multiple) output projection + store
    out = jnp.dot(h.astype(jnp.bfloat16), w_out_ref[...],
                  preferred_element_type=jnp.float32) + b_out_ref[...]
    o_ref[...] = out.reshape(Bb, S, -1)


def transformer_forward(x_bsc, params, num_heads, num_layers):
    """x_bsc: (B, S, Cin) float32 -> (B, S, Dout_pad) float32."""
    B, S, Cin = x_bsc.shape
    Dout_pad = params["w_out"].shape[1]
    D = params["w_in"].shape[1]
    hd = D // num_heads

    # <=2 grid steps: keeps both v7x TCs busy while amortizing per-step overhead;
    # on v5e/v6e the one extra step costs ~0.35us, negligible.
    G = 2 if (B >= 2 and B % 2 == 0) else 1
    Bb = B // G

    def full_spec(arr):
        n = arr.ndim
        return pl.BlockSpec(arr.shape, lambda g, _n=n: (0,) * _n)

    order = ["pe", "w_in", "w_qkv", "b_qkv", "w_o", "w_ffn", "vec",
             "w_out", "b_out"]

    in_specs = [pl.BlockSpec((Bb, S, Cin), lambda g: (g, 0, 0))]
    in_specs += [full_spec(params[name]) for name in order]

    kernel = functools.partial(_transformer_kernel, num_heads, num_layers,
                               hd, Bb, S)
    return pl.pallas_call(
        kernel,
        out_shape=jax.ShapeDtypeStruct((B, S, Dout_pad), jnp.float32),
        grid=(G,),
        in_specs=in_specs,
        out_specs=pl.BlockSpec((Bb, S, Dout_pad), lambda g: (g, 0, 0)),
        compiler_params=pltpu.CompilerParams(
            dimension_semantics=("parallel",)),   # batch blocks independent
    )(x_bsc, *[params[name] for name in order])


# ----------------------------------------------------------------------------
# Module wrapper (parameter packing + permute/reshape/split glue in plain JAX)
# ----------------------------------------------------------------------------
def _sinusoidal_pe(S, D):
    pos = jnp.arange(S, dtype=jnp.float32)[:, None]
    i = jnp.arange(0, D, 2, dtype=jnp.float32)
    div = jnp.exp(-math.log(10000.0) * i / D)
    pe = jnp.zeros((S, D), dtype=jnp.float32)
    pe = pe.at[:, 0::2].set(jnp.sin(pos * div))
    pe = pe.at[:, 1::2].set(jnp.cos(pos * div))
    return pe


class TransformerNNPallas:
    def __init__(self, in_channels, out_channels, num_channels, num_layers,
                 num_heads, num_components, drop_prob, use_pos_emb,
                 use_rel_pos_emb, input_length, concat_dims, output_length, key):
        assert num_channels % num_heads == 0
        self.k = num_components
        self.out_channels = out_channels
        self.concat_dims = concat_dims
        self.output_length = output_length
        self.num_heads = num_heads
        self.num_layers = num_layers
        del drop_prob, use_rel_pos_emb  # dropout no-op in eval; rel-pos not used

        D = num_channels
        Dout = out_channels * (2 + 3 * self.k)
        self.dout = Dout
        Dout_pad = ((Dout + 127) // 128) * 128   # lane-dense output block
        L = num_layers
        H = num_heads
        hd = D // H
        S = input_length

        keys = jax.random.split(key, 16)

        def w(k_, shape, fan_in):
            return (jax.random.normal(k_, shape, jnp.float32)
                    * (1.0 / math.sqrt(fan_in))).astype(jnp.float32)

        # raw parameters (right-multiply layout: (in_dim, out_dim))
        w_in = w(keys[0], (in_channels, D), in_channels)
        b_in = jnp.zeros((1, D), jnp.float32)
        wq = w(keys[1], (L, D, D), D)
        wk = w(keys[2], (L, D, D), D)
        wv = w(keys[3], (L, D, D), D)
        wo = w(keys[4], (L, D, D), D)
        bq = jnp.zeros((L, 1, D), jnp.float32)
        bk = jnp.zeros((L, 1, D), jnp.float32)
        bv = jnp.zeros((L, 1, D), jnp.float32)
        bo = jnp.zeros((L, 1, D), jnp.float32)
        ln1g = jnp.ones((L, 1, D), jnp.float32)
        ln1b = jnp.zeros((L, 1, D), jnp.float32)
        w1 = w(keys[5], (L, D, D), D)          # dim_feedforward = num_channels
        b1 = jnp.zeros((L, 1, D), jnp.float32)
        w2 = w(keys[6], (L, D, D), D)
        b2 = jnp.zeros((L, 1, D), jnp.float32)
        ln2g = jnp.ones((L, 1, D), jnp.float32)
        ln2b = jnp.zeros((L, 1, D), jnp.float32)
        w_out = w(keys[7], (D, Dout), D)
        b_out = jnp.zeros((1, Dout), jnp.float32)
        pe = (_sinusoidal_pe(S, D) if use_pos_emb
              else jnp.zeros((S, D), jnp.float32))

        sqrt_d = jnp.float32(math.sqrt(D))
        attn_scale = jnp.float32(1.0 / math.sqrt(hd))

        # fused QKV with attention scale folded into the Q columns
        w_qkv = jnp.concatenate([wq * attn_scale, wk, wv], axis=-1)   # (L, D, 3D)
        b_qkv = jnp.concatenate([bq * attn_scale, bk, bv], axis=-1)   # (L, 1, 3D)
        w_ffn = jnp.stack([w1, w2], axis=1)                           # (L, 2, D, D)
        vec = jnp.stack([bo, ln1g, ln1b, b1, b2, ln2g, ln2b],
                        axis=1)                                       # (L, 7, 1, D)

        # pad out-projection to a 128-lane multiple (unmasked stores)
        w_out_p = jnp.zeros((D, Dout_pad), jnp.float32).at[:, :Dout].set(w_out)
        b_out_p = jnp.zeros((1, Dout_pad), jnp.float32).at[:, :Dout].set(b_out)

        self.params = dict(
            pe=pe + b_in * sqrt_d,                       # fold scaled in-proj bias
            w_in=(w_in * sqrt_d).astype(jnp.bfloat16),   # fold sqrt(d_model)
            w_qkv=w_qkv.astype(jnp.bfloat16),
            b_qkv=b_qkv,                                 # biases / LN params in f32
            w_o=wo.astype(jnp.bfloat16),
            w_ffn=w_ffn.astype(jnp.bfloat16),
            vec=vec,
            w_out=w_out_p.astype(jnp.bfloat16),
            b_out=b_out_p,
        )

        # weight_norm(Rescale(out_channels)): v = ones(C,1,1), g = ||v|| per
        # channel -> effective weight = g * v / ||v||
        v = jnp.ones((out_channels, 1, 1), jnp.float32)
        g = jnp.sqrt(jnp.sum(v * v, axis=(1, 2), keepdims=True))
        self.rescale_weight = g * v / jnp.sqrt(jnp.sum(v * v, axis=(1, 2),
                                                       keepdims=True))

    def __call__(self, x):
        b, c, h, w = x.shape
        assert w == 1, "reference does x.squeeze(-1); w must be 1"
        x_bsc = jnp.transpose(x[..., 0], (0, 2, 1))           # (b, h, c)

        out = transformer_forward(x_bsc, self.params,
                                  self.num_heads, self.num_layers)
        out = out[:, :, :self.dout]                            # drop lane padding
        if not self.concat_dims:
            out = out[:, :self.output_length]

        # torch: (seq,b,Dout).permute(1,2,0).view(b, 2+3k, C, L, w)
        y = jnp.transpose(out, (0, 2, 1))                      # (b, Dout, L)
        Lseq = y.shape[-1]
        y = y.reshape(b, 2 + 3 * self.k, self.out_channels, Lseq, w)

        s = y[:, 0]
        t = y[:, 1]
        pi = y[:, 2:2 + self.k]
        mu = y[:, 2 + self.k:2 + 2 * self.k]
        scales = y[:, 2 + 2 * self.k:2 + 3 * self.k]

        s = self.rescale_weight[None] * jnp.tanh(s)
        scales = jnp.maximum(scales, -7.0)
        return s, t, pi, mu, scales


# ----------------------------------------------------------------------------
if __name__ == "__main__":
    key = jax.random.PRNGKey(0)
    k_param, k_x = jax.random.split(key)

    B, Cin, Hs, W = 2, 4, 16, 1           # x is (b, c, h, w) with w == 1
    model = TransformerNNPallas(
        in_channels=Cin, out_channels=4, num_channels=32, num_layers=2,
        num_heads=4, num_components=2, drop_prob=0.0, use_pos_emb=True,
        use_rel_pos_emb=False, input_length=Hs, concat_dims=True,
        output_length=Hs, key=k_param)

    x = jax.random.normal(k_x, (B, Cin, Hs, W), dtype=jnp.float32)

    s, t, pi, mu, scales = model(x)
    jax.block_until_ready((s, t, pi, mu, scales))

    assert s.shape == (B, 4, Hs, W)
    assert t.shape == (B, 4, Hs, W)
    assert pi.shape == (B, 2, 4, Hs, W)
    assert mu.shape == (B, 2, 4, Hs, W)
    assert scales.shape == (B, 2, 4, Hs, W)
    print("KERNEL_OK")
</pallas_src>

<mosaic_0001>
module attributes {stable_mosaic.version = 11 : i64} {
  func.func @_transformer_kernel(%arg0: i32, %arg1: memref<1x16x4xf32, #tpu.memory_space<vmem>>, %arg2: memref<16x32xf32, #tpu.memory_space<vmem>>, %arg3: memref<4x32xbf16, #tpu.memory_space<vmem>>, %arg4: memref<2x32x96xbf16, #tpu.memory_space<vmem>>, %arg5: memref<2x1x96xf32, #tpu.memory_space<vmem>>, %arg6: memref<2x32x32xbf16, #tpu.memory_space<vmem>>, %arg7: memref<2x2x32x32xbf16, #tpu.memory_space<vmem>>, %arg8: memref<2x7x1x32xf32, #tpu.memory_space<vmem>>, %arg9: memref<32x128xbf16, #tpu.memory_space<vmem>>, %arg10: memref<1x128xf32, #tpu.memory_space<vmem>>, %arg11: memref<1x16x128xf32, #tpu.memory_space<vmem>>) attributes {dimension_semantics = [#tpu.dimension_semantics<parallel>], iteration_bounds = array<i64: 2>, scalar_prefetch = 0 : i64, scratch_operands = 0 : i64, tpu.core_type = #tpu.core_type<tc>, window_params = [{transform_indices = @transform_0, window_bounds = array<i64: 1, 16, 4>}, {pipeline_mode = #tpu.pipeline_mode<synchronous>, transform_indices = @transform_1, window_bounds = array<i64: 16, 32>}, {pipeline_mode = #tpu.pipeline_mode<synchronous>, transform_indices = @transform_2, window_bounds = array<i64: 4, 32>}, {pipeline_mode = #tpu.pipeline_mode<synchronous>, transform_indices = @transform_3, window_bounds = array<i64: 2, 32, 96>}, {pipeline_mode = #tpu.pipeline_mode<synchronous>, transform_indices = @transform_4, window_bounds = array<i64: 2, 1, 96>}, {pipeline_mode = #tpu.pipeline_mode<synchronous>, transform_indices = @transform_5, window_bounds = array<i64: 2, 32, 32>}, {pipeline_mode = #tpu.pipeline_mode<synchronous>, transform_indices = @transform_6, window_bounds = array<i64: 2, 2, 32, 32>}, {pipeline_mode = #tpu.pipeline_mode<synchronous>, transform_indices = @transform_7, window_bounds = array<i64: 2, 7, 1, 32>}, {pipeline_mode = #tpu.pipeline_mode<synchronous>, transform_indices = @transform_8, window_bounds = array<i64: 32, 128>}, {pipeline_mode = #tpu.pipeline_mode<synchronous>, transform_indices = @transform_9, window_bounds = array<i64: 1, 128>}, {transform_indices = @transform_10, window_bounds = array<i64: 1, 16, 128>}]} {
    %c0 = arith.constant 0 : index
    %c0_0 = arith.constant 0 : index
    %c0_1 = arith.constant 0 : index
    %0 = vector.load %arg1[%c0, %c0_0, %c0_1] : memref<1x16x4xf32, #tpu.memory_space<vmem>>, vector<1x16x4xf32>
    %1 = vector.shape_cast %0 : vector<1x16x4xf32> to vector<16x4xf32>
    %2 = arith.truncf %1 : vector<16x4xf32> to vector<16x4xbf16>
    %c0_2 = arith.constant 0 : index
    %c0_3 = arith.constant 0 : index
    %3 = vector.load %arg3[%c0_2, %c0_3] : memref<4x32xbf16, #tpu.memory_space<vmem>>, vector<4x32xbf16>
    %cst = arith.constant dense<0.000000e+00> : vector<16x32xf32>
    %4 = tpu.matmul %2, %3, %cst {dimension_numbers = #tpu.dot_dimension_numbers<[1], [0], [0], [1], [0, 0, 1, 1], [], []>} : vector<16x4xbf16>, vector<4x32xbf16>, vector<16x32xf32> -> vector<16x32xf32>
    %5 = vector.shape_cast %4 : vector<16x32xf32> to vector<1x16x32xf32>
    %c0_4 = arith.constant 0 : index
    %c0_5 = arith.constant 0 : index
    %6 = vector.load %arg2[%c0_4, %c0_5] : memref<16x32xf32, #tpu.memory_space<vmem>>, vector<16x32xf32>
    %7 = vector.shape_cast %6 : vector<16x32xf32> to vector<1x16x32xf32>
    %8 = arith.addf %5, %7 : vector<1x16x32xf32>
    %9 = vector.shape_cast %8 : vector<1x16x32xf32> to vector<16x32xf32>
    %10 = arith.truncf %9 : vector<16x32xf32> to vector<16x32xbf16>
    %c0_6 = arith.constant 0 : index
    %c0_7 = arith.constant 0 : index
    %c0_8 = arith.constant 0 : index
    %11 = vector.load %arg4[%c0_6, %c0_7, %c0_8] : memref<2x32x96xbf16, #tpu.memory_space<vmem>>, vector<1x32x96xbf16>
    %12 = vector.shape_cast %11 : vector<1x32x96xbf16> to vector<32x96xbf16>
    %cst_9 = arith.constant dense<0.000000e+00> : vector<16x96xf32>
    %13 = tpu.matmul %10, %12, %cst_9 {dimension_numbers = #tpu.dot_dimension_numbers<[1], [0], [0], [1], [0, 0, 1, 1], [], []>} : vector<16x32xbf16>, vector<32x96xbf16>, vector<16x96xf32> -> vector<16x96xf32>
    %c0_10 = arith.constant 0 : index
    %c0_11 = arith.constant 0 : index
    %c0_12 = arith.constant 0 : index
    %14 = vector.load %arg5[%c0_10, %c0_11, %c0_12] : memref<2x1x96xf32, #tpu.memory_space<vmem>>, vector<1x1x96xf32>
    %15 = vector.shape_cast %14 : vector<1x1x96xf32> to vector<1x96xf32>
    %16 = vector.broadcast %15 : vector<1x96xf32> to vector<16x96xf32>
    %17 = arith.addf %13, %16 : vector<16x96xf32>
    %18 = vector.shape_cast %17 : vector<16x96xf32> to vector<1x16x96xf32>
    %19 = arith.truncf %18 : vector<1x16x96xf32> to vector<1x16x96xbf16>
    %20 = vector.extract_strided_slice %19 {offsets = [0, 0, 0], sizes = [1, 16, 8], strides = [1, 1, 1]} : vector<1x16x96xbf16> to vector<1x16x8xbf16>
    %21 = vector.extract_strided_slice %19 {offsets = [0, 0, 32], sizes = [1, 16, 8], strides = [1, 1, 1]} : vector<1x16x96xbf16> to vector<1x16x8xbf16>
    %22 = vector.extract_strided_slice %19 {offsets = [0, 0, 64], sizes = [1, 16, 8], strides = [1, 1, 1]} : vector<1x16x96xbf16> to vector<1x16x8xbf16>
    "tpu.trace_start"() <{level = 10 : i32, message = "bqd,bkd->bqk"}> : () -> ()
    %cst_13 = arith.constant dense<0.000000e+00> : vector<1x16x16xf32>
    %23 = tpu.matmul %20, %21, %cst_13 {dimension_numbers = #tpu.dot_dimension_numbers<[2], [2], [1], [1], [0, 0, 0, 1, 1, 1], [0], [0]>} : vector<1x16x8xbf16>, vector<1x16x8xbf16>, vector<1x16x16xf32> -> vector<1x16x16xf32>
    "tpu.trace_stop"() : () -> ()
    %cst_14 = arith.constant dense<0xFF800000> : vector<1x16xf32>
    %24 = vector.multi_reduction <maximumf>, %23, %cst_14 [2] : vector<1x16x16xf32> to vector<1x16xf32>
    %25 = vector.shape_cast %24 : vector<1x16xf32> to vector<1x16x1xf32>
    %26 = vector.broadcast %25 : vector<1x16x1xf32> to vector<1x16x16xf32>
    %27 = arith.subf %23, %26 : vector<1x16x16xf32>
    %28 = math.exp %27 : vector<1x16x16xf32>
    %cst_15 = arith.constant dense<0.000000e+00> : vector<1x16xf32>
    %29 = vector.multi_reduction <add>, %28, %cst_15 [2] : vector<1x16x16xf32> to vector<1x16xf32>
    %30 = vector.shape_cast %29 : vector<1x16xf32> to vector<1x16x1xf32>
    %31 = tpu.reciprocal %30 {approx = true} : vector<1x16x1xf32> -> vector<1x16x1xf32>
    %32 = vector.broadcast %31 : vector<1x16x1xf32> to vector<1x16x16xf32>
    %33 = arith.mulf %28, %32 : vector<1x16x16xf32>
    %34 = arith.truncf %33 : vector<1x16x16xf32> to vector<1x16x16xbf16>
    "tpu.trace_start"() <{level = 10 : i32, message = "bqk,bkd->bqd"}> : () -> ()
    %cst_16 = arith.constant dense<0.000000e+00> : vector<1x16x8xf32>
    %35 = tpu.matmul %34, %22, %cst_16 {dimension_numbers = #tpu.dot_dimension_numbers<[2], [1], [1], [2], [0, 0, 0, 1, 1, 2], [0], [0]>} : vector<1x16x16xbf16>, vector<1x16x8xbf16>, vector<1x16x8xf32> -> vector<1x16x8xf32>
    "tpu.trace_stop"() : () -> ()
    %36 = vector.extract_strided_slice %19 {offsets = [0, 0, 8], sizes = [1, 16, 8], strides = [1, 1, 1]} : vector<1x16x96xbf16> to vector<1x16x8xbf16>
    %37 = vector.extract_strided_slice %19 {offsets = [0, 0, 40], sizes = [1, 16, 8], strides = [1, 1, 1]} : vector<1x16x96xbf16> to vector<1x16x8xbf16>
    %38 = vector.extract_strided_slice %19 {offsets = [0, 0, 72], sizes = [1, 16, 8], strides = [1, 1, 1]} : vector<1x16x96xbf16> to vector<1x16x8xbf16>
    "tpu.trace_start"() <{level = 10 : i32, message = "bqd,bkd->bqk"}> : () -> ()
    %cst_17 = arith.constant dense<0.000000e+00> : vector<1x16x16xf32>
    %39 = tpu.matmul %36, %37, %cst_17 {dimension_numbers = #tpu.dot_dimension_numbers<[2], [2], [1], [1], [0, 0, 0, 1, 1, 1], [0], [0]>} : vector<1x16x8xbf16>, vector<1x16x8xbf16>, vector<1x16x16xf32> -> vector<1x16x16xf32>
    "tpu.trace_stop"() : () -> ()
    %cst_18 = arith.constant dense<0xFF800000> : vector<1x16xf32>
    %40 = vector.multi_reduction <maximumf>, %39, %cst_18 [2] : vector<1x16x16xf32> to vector<1x16xf32>
    %41 = vector.shape_cast %40 : vector<1x16xf32> to vector<1x16x1xf32>
    %42 = vector.broadcast %41 : vector<1x16x1xf32> to vector<1x16x16xf32>
    %43 = arith.subf %39, %42 : vector<1x16x16xf32>
    %44 = math.exp %43 : vector<1x16x16xf32>
    %cst_19 = arith.constant dense<0.000000e+00> : vector<1x16xf32>
    %45 = vector.multi_reduction <add>, %44, %cst_19 [2] : vector<1x16x16xf32> to vector<1x16xf32>
    %46 = vector.shape_cast %45 : vector<1x16xf32> to vector<1x16x1xf32>
    %47 = tpu.reciprocal %46 {approx = true} : vector<1x16x1xf32> -> vector<1x16x1xf32>
    %48 = vector.broadcast %47 : vector<1x16x1xf32> to vector<1x16x16xf32>
    %49 = arith.mulf %44, %48 : vector<1x16x16xf32>
    %50 = arith.truncf %49 : vector<1x16x16xf32> to vector<1x16x16xbf16>
    "tpu.trace_start"() <{level = 10 : i32, message = "bqk,bkd->bqd"}> : () -> ()
    %cst_20 = arith.constant dense<0.000000e+00> : vector<1x16x8xf32>
    %51 = tpu.matmul %50, %38, %cst_20 {dimension_numbers = #tpu.dot_dimension_numbers<[2], [1], [1], [2], [0, 0, 0, 1, 1, 2], [0], [0]>} : vector<1x16x16xbf16>, vector<1x16x8xbf16>, vector<1x16x8xf32> -> vector<1x16x8xf32>
    "tpu.trace_stop"() : () -> ()
    %52 = vector.extract_strided_slice %19 {offsets = [0, 0, 16], sizes = [1, 16, 8], strides = [1, 1, 1]} : vector<1x16x96xbf16> to vector<1x16x8xbf16>
    %53 = vector.extract_strided_slice %19 {offsets = [0, 0, 48], sizes = [1, 16, 8], strides = [1, 1, 1]} : vector<1x16x96xbf16> to vector<1x16x8xbf16>
    %54 = vector.extract_strided_slice %19 {offsets = [0, 0, 80], sizes = [1, 16, 8], strides = [1, 1, 1]} : vector<1x16x96xbf16> to vector<1x16x8xbf16>
    "tpu.trace_start"() <{level = 10 : i32, message = "bqd,bkd->bqk"}> : () -> ()
    %cst_21 = arith.constant dense<0.000000e+00> : vector<1x16x16xf32>
    %55 = tpu.matmul %52, %53, %cst_21 {dimension_numbers = #tpu.dot_dimension_numbers<[2], [2], [1], [1], [0, 0, 0, 1, 1, 1], [0], [0]>} : vector<1x16x8xbf16>, vector<1x16x8xbf16>, vector<1x16x16xf32> -> vector<1x16x16xf32>
    "tpu.trace_stop"() : () -> ()
    %cst_22 = arith.constant dense<0xFF800000> : vector<1x16xf32>
    %56 = vector.multi_reduction <maximumf>, %55, %cst_22 [2] : vector<1x16x16xf32> to vector<1x16xf32>
    %57 = vector.shape_cast %56 : vector<1x16xf32> to vector<1x16x1xf32>
    %58 = vector.broadcast %57 : vector<1x16x1xf32> to vector<1x16x16xf32>
    %59 = arith.subf %55, %58 : vector<1x16x16xf32>
    %60 = math.exp %59 : vector<1x16x16xf32>
    %cst_23 = arith.constant dense<0.000000e+00> : vector<1x16xf32>
    %61 = vector.multi_reduction <add>, %60, %cst_23 [2] : vector<1x16x16xf32> to vector<1x16xf32>
    %62 = vector.shape_cast %61 : vector<1x16xf32> to vector<1x16x1xf32>
    %63 = tpu.reciprocal %62 {approx = true} : vector<1x16x1xf32> -> vector<1x16x1xf32>
    %64 = vector.broadcast %63 : vector<1x16x1xf32> to vector<1x16x16xf32>
    %65 = arith.mulf %60, %64 : vector<1x16x16xf32>
    %66 = arith.truncf %65 : vector<1x16x16xf32> to vector<1x16x16xbf16>
    "tpu.trace_start"() <{level = 10 : i32, message = "bqk,bkd->bqd"}> : () -> ()
    %cst_24 = arith.constant dense<0.000000e+00> : vector<1x16x8xf32>
    %67 = tpu.matmul %66, %54, %cst_24 {dimension_numbers = #tpu.dot_dimension_numbers<[2], [1], [1], [2], [0, 0, 0, 1, 1, 2], [0], [0]>} : vector<1x16x16xbf16>, vector<1x16x8xbf16>, vector<1x16x8xf32> -> vector<1x16x8xf32>
    "tpu.trace_stop"() : () -> ()
    %68 = vector.extract_strided_slice %19 {offsets = [0, 0, 24], sizes = [1, 16, 8], strides = [1, 1, 1]} : vector<1x16x96xbf16> to vector<1x16x8xbf16>
    %69 = vector.extract_strided_slice %19 {offsets = [0, 0, 56], sizes = [1, 16, 8], strides = [1, 1, 1]} : vector<1x16x96xbf16> to vector<1x16x8xbf16>
    %70 = vector.extract_strided_slice %19 {offsets = [0, 0, 88], sizes = [1, 16, 8], strides = [1, 1, 1]} : vector<1x16x96xbf16> to vector<1x16x8xbf16>
    "tpu.trace_start"() <{level = 10 : i32, message = "bqd,bkd->bqk"}> : () -> ()
    %cst_25 = arith.constant dense<0.000000e+00> : vector<1x16x16xf32>
    %71 = tpu.matmul %68, %69, %cst_25 {dimension_numbers = #tpu.dot_dimension_numbers<[2], [2], [1], [1], [0, 0, 0, 1, 1, 1], [0], [0]>} : vector<1x16x8xbf16>, vector<1x16x8xbf16>, vector<1x16x16xf32> -> vector<1x16x16xf32>
    "tpu.trace_stop"() : () -> ()
    %cst_26 = arith.constant dense<0xFF800000> : vector<1x16xf32>
    %72 = vector.multi_reduction <maximumf>, %71, %cst_26 [2] : vector<1x16x16xf32> to vector<1x16xf32>
    %73 = vector.shape_cast %72 : vector<1x16xf32> to vector<1x16x1xf32>
    %74 = vector.broadcast %73 : vector<1x16x1xf32> to vector<1x16x16xf32>
    %75 = arith.subf %71, %74 : vector<1x16x16xf32>
    %76 = math.exp %75 : vector<1x16x16xf32>
    %cst_27 = arith.constant dense<0.000000e+00> : vector<1x16xf32>
    %77 = vector.multi_reduction <add>, %76, %cst_27 [2] : vector<1x16x16xf32> to vector<1x16xf32>
    %78 = vector.shape_cast %77 : vector<1x16xf32> to vector<1x16x1xf32>
    %79 = tpu.reciprocal %78 {approx = true} : vector<1x16x1xf32> -> vector<1x16x1xf32>
    %80 = vector.broadcast %79 : vector<1x16x1xf32> to vector<1x16x16xf32>
    %81 = arith.mulf %76, %80 : vector<1x16x16xf32>
    %82 = arith.truncf %81 : vector<1x16x16xf32> to vector<1x16x16xbf16>
    "tpu.trace_start"() <{level = 10 : i32, message = "bqk,bkd->bqd"}> : () -> ()
    %cst_28 = arith.constant dense<0.000000e+00> : vector<1x16x8xf32>
    %83 = tpu.matmul %82, %70, %cst_28 {dimension_numbers = #tpu.dot_dimension_numbers<[2], [1], [1], [2], [0, 0, 0, 1, 1, 2], [0], [0]>} : vector<1x16x16xbf16>, vector<1x16x8xbf16>, vector<1x16x8xf32> -> vector<1x16x8xf32>
    "tpu.trace_stop"() : () -> ()
    %84 = tpu.concatenate %35, %51, %67, %83 in 2 : vector<1x16x8xf32>, vector<1x16x8xf32>, vector<1x16x8xf32>, vector<1x16x8xf32> -> vector<1x16x32xf32>
    %85 = vector.shape_cast %84 : vector<1x16x32xf32> to vector<16x32xf32>
    %86 = arith.truncf %85 : vector<16x32xf32> to vector<16x32xbf16>
    %c0_29 = arith.constant 0 : index
    %c0_30 = arith.constant 0 : index
    %c0_31 = arith.constant 0 : index
    %87 = vector.load %arg6[%c0_29, %c0_30, %c0_31] : memref<2x32x32xbf16, #tpu.memory_space<vmem>>, vector<1x32x32xbf16>
    %88 = vector.shape_cast %87 : vector<1x32x32xbf16> to vector<32x32xbf16>
    %cst_32 = arith.constant dense<0.000000e+00> : vector<16x32xf32>
    %89 = tpu.matmul %86, %88, %cst_32 {dimension_numbers = #tpu.dot_dimension_numbers<[1], [0], [0], [1], [0, 0, 1, 1], [], []>} : vector<16x32xbf16>, vector<32x32xbf16>, vector<16x32xf32> -> vector<16x32xf32>
    %c0_33 = arith.constant 0 : index
    %c0_34 = arith.constant 0 : index
    %c0_35 = arith.constant 0 : index
    %c0_36 = arith.constant 0 : index
    %90 = vector.load %arg8[%c0_33, %c0_34, %c0_35, %c0_36] : memref<2x7x1x32xf32, #tpu.memory_space<vmem>>, vector<1x1x1x32xf32>
    %91 = vector.shape_cast %90 : vector<1x1x1x32xf32> to vector<1x32xf32>
    %92 = vector.broadcast %91 : vector<1x32xf32> to vector<16x32xf32>
    %93 = arith.addf %89, %92 : vector<16x32xf32>
    %94 = arith.addf %9, %93 : vector<16x32xf32>
    %c0_37 = arith.constant 0 : index
    %c1 = arith.constant 1 : index
    %c0_38 = arith.constant 0 : index
    %c0_39 = arith.constant 0 : index
    %95 = vector.load %arg8[%c0_37, %c1, %c0_38, %c0_39] : memref<2x7x1x32xf32, #tpu.memory_space<vmem>>, vector<1x1x1x32xf32>
    %96 = vector.shape_cast %95 : vector<1x1x1x32xf32> to vector<1x32xf32>
    %c0_40 = arith.constant 0 : index
    %c2 = arith.constant 2 : index
    %c0_41 = arith.constant 0 : index
    %c0_42 = arith.constant 0 : index
    %97 = vector.load %arg8[%c0_40, %c2, %c0_41, %c0_42] : memref<2x7x1x32xf32, #tpu.memory_space<vmem>>, vector<1x1x1x32xf32>
    %98 = vector.shape_cast %97 : vector<1x1x1x32xf32> to vector<1x32xf32>
    %cst_43 = arith.constant dense<0.000000e+00> : vector<16xf32>
    %99 = vector.multi_reduction <add>, %94, %cst_43 [1] : vector<16x32xf32> to vector<16xf32>
    %100 = vector.shape_cast %99 : vector<16xf32> to vector<16x1xf32>
    %cst_44 = arith.constant 3.200000e+01 : f32
    %101 = vector.broadcast %cst_44 : f32 to vector<16x1xf32>
    %102 = arith.divf %100, %101 : vector<16x1xf32>
    %103 = vector.broadcast %102 : vector<16x1xf32> to vector<16x32xf32>
    %104 = arith.subf %94, %103 : vector<16x32xf32>
    %105 = arith.mulf %104, %104 : vector<16x32xf32>
    %cst_45 = arith.constant dense<0.000000e+00> : vector<16xf32>
    %106 = vector.multi_reduction <add>, %105, %cst_45 [1] : vector<16x32xf32> to vector<16xf32>
    %107 = vector.shape_cast %106 : vector<16xf32> to vector<16x1xf32>
    %cst_46 = arith.constant 3.200000e+01 : f32
    %108 = vector.broadcast %cst_46 : f32 to vector<16x1xf32>
    %109 = arith.divf %107, %108 : vector<16x1xf32>
    %110 = vector.broadcast %102 : vector<16x1xf32> to vector<16x32xf32>
    %111 = arith.subf %94, %110 : vector<16x32xf32>
    %cst_47 = arith.constant 9.99999974E-6 : f32
    %112 = vector.broadcast %cst_47 : f32 to vector<16x1xf32>
    %113 = arith.addf %109, %112 : vector<16x1xf32>
    %114 = math.rsqrt %113 : vector<16x1xf32>
    %115 = vector.broadcast %114 : vector<16x1xf32> to vector<16x32xf32>
    %116 = arith.mulf %111, %115 : vector<16x32xf32>
    %117 = vector.broadcast %96 : vector<1x32xf32> to vector<16x32xf32>
    %118 = arith.mulf %116, %117 : vector<16x32xf32>
    %119 = vector.broadcast %98 : vector<1x32xf32> to vector<16x32xf32>
    %120 = arith.addf %118, %119 : vector<16x32xf32>
    %121 = arith.truncf %120 : vector<16x32xf32> to vector<16x32xbf16>
    %c0_48 = arith.constant 0 : index
    %c0_49 = arith.constant 0 : index
    %c0_50 = arith.constant 0 : index
    %c0_51 = arith.constant 0 : index
    %122 = vector.load %arg7[%c0_48, %c0_49, %c0_50, %c0_51] : memref<2x2x32x32xbf16, #tpu.memory_space<vmem>>, vector<1x1x32x32xbf16>
    %123 = vector.shape_cast %122 : vector<1x1x32x32xbf16> to vector<32x32xbf16>
    %cst_52 = arith.constant dense<0.000000e+00> : vector<16x32xf32>
    %124 = tpu.matmul %121, %123, %cst_52 {dimension_numbers = #tpu.dot_dimension_numbers<[1], [0], [0], [1], [0, 0, 1, 1], [], []>} : vector<16x32xbf16>, vector<32x32xbf16>, vector<16x32xf32> -> vector<16x32xf32>
    %c0_53 = arith.constant 0 : index
    %c3 = arith.constant 3 : index
    %c0_54 = arith.constant 0 : index
    %c0_55 = arith.constant 0 : index
    %125 = vector.load %arg8[%c0_53, %c3, %c0_54, %c0_55] : memref<2x7x1x32xf32, #tpu.memory_space<vmem>>, vector<1x1x1x32xf32>
    %126 = vector.shape_cast %125 : vector<1x1x1x32xf32> to vector<1x32xf32>
    %127 = vector.broadcast %126 : vector<1x32xf32> to vector<16x32xf32>
    %128 = arith.addf %124, %127 : vector<16x32xf32>
    %cst_56 = arith.constant 0.000000e+00 : f32
    %129 = vector.broadcast %cst_56 : f32 to vector<16x32xf32>
    %130 = arith.maximumf %128, %129 : vector<16x32xf32>
    %131 = arith.truncf %130 : vector<16x32xf32> to vector<16x32xbf16>
    %c0_57 = arith.constant 0 : index
    %c1_58 = arith.constant 1 : index
    %c0_59 = arith.constant 0 : index
    %c0_60 = arith.constant 0 : index
    %132 = vector.load %arg7[%c0_57, %c1_58, %c0_59, %c0_60] : memref<2x2x32x32xbf16, #tpu.memory_space<vmem>>, vector<1x1x32x32xbf16>
    %133 = vector.shape_cast %132 : vector<1x1x32x32xbf16> to vector<32x32xbf16>
    %cst_61 = arith.constant dense<0.000000e+00> : vector<16x32xf32>
    %134 = tpu.matmul %131, %133, %cst_61 {dimension_numbers = #tpu.dot_dimension_numbers<[1], [0], [0], [1], [0, 0, 1, 1], [], []>} : vector<16x32xbf16>, vector<32x32xbf16>, vector<16x32xf32> -> vector<16x32xf32>
    %c0_62 = arith.constant 0 : index
    %c4 = arith.constant 4 : index
    %c0_63 = arith.constant 0 : index
    %c0_64 = arith.constant 0 : index
    %135 = vector.load %arg8[%c0_62, %c4, %c0_63, %c0_64] : memref<2x7x1x32xf32, #tpu.memory_space<vmem>>, vector<1x1x1x32xf32>
    %136 = vector.shape_cast %135 : vector<1x1x1x32xf32> to vector<1x32xf32>
    %137 = vector.broadcast %136 : vector<1x32xf32> to vector<16x32xf32>
    %138 = arith.addf %134, %137 : vector<16x32xf32>
    %139 = arith.addf %120, %138 : vector<16x32xf32>
    %c0_65 = arith.constant 0 : index
    %c5 = arith.constant 5 : index
    %c0_66 = arith.constant 0 : index
    %c0_67 = arith.constant 0 : index
    %140 = vector.load %arg8[%c0_65, %c5, %c0_66, %c0_67] : memref<2x7x1x32xf32, #tpu.memory_space<vmem>>, vector<1x1x1x32xf32>
    %141 = vector.shape_cast %140 : vector<1x1x1x32xf32> to vector<1x32xf32>
    %c0_68 = arith.constant 0 : index
    %c6 = arith.constant 6 : index
    %c0_69 = arith.constant 0 : index
    %c0_70 = arith.constant 0 : index
    %142 = vector.load %arg8[%c0_68, %c6, %c0_69, %c0_70] : memref<2x7x1x32xf32, #tpu.memory_space<vmem>>, vector<1x1x1x32xf32>
    %143 = vector.shape_cast %142 : vector<1x1x1x32xf32> to vector<1x32xf32>
    %cst_71 = arith.constant dense<0.000000e+00> : vector<16xf32>
    %144 = vector.multi_reduction <add>, %139, %cst_71 [1] : vector<16x32xf32> to vector<16xf32>
    %145 = vector.shape_cast %144 : vector<16xf32> to vector<16x1xf32>
    %cst_72 = arith.constant 3.200000e+01 : f32
    %146 = vector.broadcast %cst_72 : f32 to vector<16x1xf32>
    %147 = arith.divf %145, %146 : vector<16x1xf32>
    %148 = vector.broadcast %147 : vector<16x1xf32> to vector<16x32xf32>
    %149 = arith.subf %139, %148 : vector<16x32xf32>
    %150 = arith.mulf %149, %149 : vector<16x32xf32>
    %cst_73 = arith.constant dense<0.000000e+00> : vector<16xf32>
    %151 = vector.multi_reduction <add>, %150, %cst_73 [1] : vector<16x32xf32> to vector<16xf32>
    %152 = vector.shape_cast %151 : vector<16xf32> to vector<16x1xf32>
    %cst_74 = arith.constant 3.200000e+01 : f32
    %153 = vector.broadcast %cst_74 : f32 to vector<16x1xf32>
    %154 = arith.divf %152, %153 : vector<16x1xf32>
    %155 = vector.broadcast %147 : vector<16x1xf32> to vector<16x32xf32>
    %156 = arith.subf %139, %155 : vector<16x32xf32>
    %cst_75 = arith.constant 9.99999974E-6 : f32
    %157 = vector.broadcast %cst_75 : f32 to vector<16x1xf32>
    %158 = arith.addf %154, %157 : vector<16x1xf32>
    %159 = math.rsqrt %158 : vector<16x1xf32>
    %160 = vector.broadcast %159 : vector<16x1xf32> to vector<16x32xf32>
    %161 = arith.mulf %156, %160 : vector<16x32xf32>
    %162 = vector.broadcast %141 : vector<1x32xf32> to vector<16x32xf32>
    %163 = arith.mulf %161, %162 : vector<16x32xf32>
    %164 = vector.broadcast %143 : vector<1x32xf32> to vector<16x32xf32>
    %165 = arith.addf %163, %164 : vector<16x32xf32>
    %166 = arith.truncf %165 : vector<16x32xf32> to vector<16x32xbf16>
    %c1_76 = arith.constant 1 : index
    %c0_77 = arith.constant 0 : index
    %c0_78 = arith.constant 0 : index
    %167 = vector.load %arg4[%c1_76, %c0_77, %c0_78] : memref<2x32x96xbf16, #tpu.memory_space<vmem>>, vector<1x32x96xbf16>
    %168 = vector.shape_cast %167 : vector<1x32x96xbf16> to vector<32x96xbf16>
    %cst_79 = arith.constant dense<0.000000e+00> : vector<16x96xf32>
    %169 = tpu.matmul %166, %168, %cst_79 {dimension_numbers = #tpu.dot_dimension_numbers<[1], [0], [0], [1], [0, 0, 1, 1], [], []>} : vector<16x32xbf16>, vector<32x96xbf16>, vector<16x96xf32> -> vector<16x96xf32>
    %c1_80 = arith.constant 1 : index
    %c0_81 = arith.constant 0 : index
    %c0_82 = arith.constant 0 : index
    %170 = vector.load %arg5[%c1_80, %c0_81, %c0_82] : memref<2x1x96xf32, #tpu.memory_space<vmem>>, vector<1x1x96xf32>
    %171 = vector.shape_cast %170 : vector<1x1x96xf32> to vector<1x96xf32>
    %172 = vector.broadcast %171 : vector<1x96xf32> to vector<16x96xf32>
    %173 = arith.addf %169, %172 : vector<16x96xf32>
    %174 = vector.shape_cast %173 : vector<16x96xf32> to vector<1x16x96xf32>
    %175 = arith.truncf %174 : vector<1x16x96xf32> to vector<1x16x96xbf16>
    %176 = vector.extract_strided_slice %175 {offsets = [0, 0, 0], sizes = [1, 16, 8], strides = [1, 1, 1]} : vector<1x16x96xbf16> to vector<1x16x8xbf16>
    %177 = vector.extract_strided_slice %175 {offsets = [0, 0, 32], sizes = [1, 16, 8], strides = [1, 1, 1]} : vector<1x16x96xbf16> to vector<1x16x8xbf16>
    %178 = vector.extract_strided_slice %175 {offsets = [0, 0, 64], sizes = [1, 16, 8], strides = [1, 1, 1]} : vector<1x16x96xbf16> to vector<1x16x8xbf16>
    "tpu.trace_start"() <{level = 10 : i32, message = "bqd,bkd->bqk"}> : () -> ()
    %cst_83 = arith.constant dense<0.000000e+00> : vector<1x16x16xf32>
    %179 = tpu.matmul %176, %177, %cst_83 {dimension_numbers = #tpu.dot_dimension_numbers<[2], [2], [1], [1], [0, 0, 0, 1, 1, 1], [0], [0]>} : vector<1x16x8xbf16>, vector<1x16x8xbf16>, vector<1x16x16xf32> -> vector<1x16x16xf32>
    "tpu.trace_stop"() : () -> ()
    %cst_84 = arith.constant dense<0xFF800000> : vector<1x16xf32>
    %180 = vector.multi_reduction <maximumf>, %179, %cst_84 [2] : vector<1x16x16xf32> to vector<1x16xf32>
    %181 = vector.shape_cast %180 : vector<1x16xf32> to vector<1x16x1xf32>
    %182 = vector.broadcast %181 : vector<1x16x1xf32> to vector<1x16x16xf32>
    %183 = arith.subf %179, %182 : vector<1x16x16xf32>
    %184 = math.exp %183 : vector<1x16x16xf32>
    %cst_85 = arith.constant dense<0.000000e+00> : vector<1x16xf32>
    %185 = vector.multi_reduction <add>, %184, %cst_85 [2] : vector<1x16x16xf32> to vector<1x16xf32>
    %186 = vector.shape_cast %185 : vector<1x16xf32> to vector<1x16x1xf32>
    %187 = tpu.reciprocal %186 {approx = true} : vector<1x16x1xf32> -> vector<1x16x1xf32>
    %188 = vector.broadcast %187 : vector<1x16x1xf32> to vector<1x16x16xf32>
    %189 = arith.mulf %184, %188 : vector<1x16x16xf32>
    %190 = arith.truncf %189 : vector<1x16x16xf32> to vector<1x16x16xbf16>
    "tpu.trace_start"() <{level = 10 : i32, message = "bqk,bkd->bqd"}> : () -> ()
    %cst_86 = arith.constant dense<0.000000e+00> : vector<1x16x8xf32>
    %191 = tpu.matmul %190, %178, %cst_86 {dimension_numbers = #tpu.dot_dimension_numbers<[2], [1], [1], [2], [0, 0, 0, 1, 1, 2], [0], [0]>} : vector<1x16x16xbf16>, vector<1x16x8xbf16>, vector<1x16x8xf32> -> vector<1x16x8xf32>
    "tpu.trace_stop"() : () -> ()
    %192 = vector.extract_strided_slice %175 {offsets = [0, 0, 8], sizes = [1, 16, 8], strides = [1, 1, 1]} : vector<1x16x96xbf16> to vector<1x16x8xbf16>
    %193 = vector.extract_strided_slice %175 {offsets = [0, 0, 40], sizes = [1, 16, 8], strides = [1, 1, 1]} : vector<1x16x96xbf16> to vector<1x16x8xbf16>
    %194 = vector.extract_strided_slice %175 {offsets = [0, 0, 72], sizes = [1, 16, 8], strides = [1, 1, 1]} : vector<1x16x96xbf16> to vector<1x16x8xbf16>
    "tpu.trace_start"() <{level = 10 : i32, message = "bqd,bkd->bqk"}> : () -> ()
    %cst_87 = arith.constant dense<0.000000e+00> : vector<1x16x16xf32>
    %195 = tpu.matmul %192, %193, %cst_87 {dimension_numbers = #tpu.dot_dimension_numbers<[2], [2], [1], [1], [0, 0, 0, 1, 1, 1], [0], [0]>} : vector<1x16x8xbf16>, vector<1x16x8xbf16>, vector<1x16x16xf32> -> vector<1x16x16xf32>
    "tpu.trace_stop"() : () -> ()
    %cst_88 = arith.constant dense<0xFF800000> : vector<1x16xf32>
    %196 = vector.multi_reduction <maximumf>, %195, %cst_88 [2] : vector<1x16x16xf32> to vector<1x16xf32>
    %197 = vector.shape_cast %196 : vector<1x16xf32> to vector<1x16x1xf32>
    %198 = vector.broadcast %197 : vector<1x16x1xf32> to vector<1x16x16xf32>
    %199 = arith.subf %195, %198 : vector<1x16x16xf32>
    %200 = math.exp %199 : vector<1x16x16xf32>
    %cst_89 = arith.constant dense<0.000000e+00> : vector<1x16xf32>
    %201 = vector.multi_reduction <add>, %200, %cst_89 [2] : vector<1x16x16xf32> to vector<1x16xf32>
    %202 = vector.shape_cast %201 : vector<1x16xf32> to vector<1x16x1xf32>
    %203 = tpu.reciprocal %202 {approx = true} : vector<1x16x1xf32> -> vector<1x16x1xf32>
    %204 = vector.broadcast %203 : vector<1x16x1xf32> to vector<1x16x16xf32>
    %205 = arith.mulf %200, %204 : vector<1x16x16xf32>
    %206 = arith.truncf %205 : vector<1x16x16xf32> to vector<1x16x16xbf16>
    "tpu.trace_start"() <{level = 10 : i32, message = "bqk,bkd->bqd"}> : () -> ()
    %cst_90 = arith.constant dense<0.000000e+00> : vector<1x16x8xf32>
    %207 = tpu.matmul %206, %194, %cst_90 {dimension_numbers = #tpu.dot_dimension_numbers<[2], [1], [1], [2], [0, 0, 0, 1, 1, 2], [0], [0]>} : vector<1x16x16xbf16>, vector<1x16x8xbf16>, vector<1x16x8xf32> -> vector<1x16x8xf32>
    "tpu.trace_stop"() : () -> ()
    %208 = vector.extract_strided_slice %175 {offsets = [0, 0, 16], sizes = [1, 16, 8], strides = [1, 1, 1]} : vector<1x16x96xbf16> to vector<1x16x8xbf16>
    %209 = vector.extract_strided_slice %175 {offsets = [0, 0, 48], sizes = [1, 16, 8], strides = [1, 1, 1]} : vector<1x16x96xbf16> to vector<1x16x8xbf16>
    %210 = vector.extract_strided_slice %175 {offsets = [0, 0, 80], sizes = [1, 16, 8], strides = [1, 1, 1]} : vector<1x16x96xbf16> to vector<1x16x8xbf16>
    "tpu.trace_start"() <{level = 10 : i32, message = "bqd,bkd->bqk"}> : () -> ()
    %cst_91 = arith.constant dense<0.000000e+00> : vector<1x16x16xf32>
    %211 = tpu.matmul %208, %209, %cst_91 {dimension_numbers = #tpu.dot_dimension_numbers<[2], [2], [1], [1], [0, 0, 0, 1, 1, 1], [0], [0]>} : vector<1x16x8xbf16>, vector<1x16x8xbf16>, vector<1x16x16xf32> -> vector<1x16x16xf32>
    "tpu.trace_stop"() : () -> ()
    %cst_92 = arith.constant dense<0xFF800000> : vector<1x16xf32>
    %212 = vector.multi_reduction <maximumf>, %211, %cst_92 [2] : vector<1x16x16xf32> to vector<1x16xf32>
    %213 = vector.shape_cast %212 : vector<1x16xf32> to vector<1x16x1xf32>
    %214 = vector.broadcast %213 : vector<1x16x1xf32> to vector<1x16x16xf32>
    %215 = arith.subf %211, %214 : vector<1x16x16xf32>
    %216 = math.exp %215 : vector<1x16x16xf32>
    %cst_93 = arith.constant dense<0.000000e+00> : vector<1x16xf32>
    %217 = vector.multi_reduction <add>, %216, %cst_93 [2] : vector<1x16x16xf32> to vector<1x16xf32>
    %218 = vector.shape_cast %217 : vector<1x16xf32> to vector<1x16x1xf32>
    %219 = tpu.reciprocal %218 {approx = true} : vector<1x16x1xf32> -> vector<1x16x1xf32>
    %220 = vector.broadcast %219 : vector<1x16x1xf32> to vector<1x16x16xf32>
    %221 = arith.mulf %216, %220 : vector<1x16x16xf32>
    %222 = arith.truncf %221 : vector<1x16x16xf32> to vector<1x16x16xbf16>
    "tpu.trace_start"() <{level = 10 : i32, message = "bqk,bkd->bqd"}> : () -> ()
    %cst_94 = arith.constant dense<0.000000e+00> : vector<1x16x8xf32>
    %223 = tpu.matmul %222, %210, %cst_94 {dimension_numbers = #tpu.dot_dimension_numbers<[2], [1], [1], [2], [0, 0, 0, 1, 1, 2], [0], [0]>} : vector<1x16x16xbf16>, vector<1x16x8xbf16>, vector<1x16x8xf32> -> vector<1x16x8xf32>
    "tpu.trace_stop"() : () -> ()
    %224 = vector.extract_strided_slice %175 {offsets = [0, 0, 24], sizes = [1, 16, 8], strides = [1, 1, 1]} : vector<1x16x96xbf16> to vector<1x16x8xbf16>
    %225 = vector.extract_strided_slice %175 {offsets = [0, 0, 56], sizes = [1, 16, 8], strides = [1, 1, 1]} : vector<1x16x96xbf16> to vector<1x16x8xbf16>
    %226 = vector.extract_strided_slice %175 {offsets = [0, 0, 88], sizes = [1, 16, 8], strides = [1, 1, 1]} : vector<1x16x96xbf16> to vector<1x16x8xbf16>
    "tpu.trace_start"() <{level = 10 : i32, message = "bqd,bkd->bqk"}> : () -> ()
    %cst_95 = arith.constant dense<0.000000e+00> : vector<1x16x16xf32>
    %227 = tpu.matmul %224, %225, %cst_95 {dimension_numbers = #tpu.dot_dimension_numbers<[2], [2], [1], [1], [0, 0, 0, 1, 1, 1], [0], [0]>} : vector<1x16x8xbf16>, vector<1x16x8xbf16>, vector<1x16x16xf32> -> vector<1x16x16xf32>
    "tpu.trace_stop"() : () -> ()
    %cst_96 = arith.constant dense<0xFF800000> : vector<1x16xf32>
    %228 = vector.multi_reduction <maximumf>, %227, %cst_96 [2] : vector<1x16x16xf32> to vector<1x16xf32>
    %229 = vector.shape_cast %228 : vector<1x16xf32> to vector<1x16x1xf32>
    %230 = vector.broadcast %229 : vector<1x16x1xf32> to vector<1x16x16xf32>
    %231 = arith.subf %227, %230 : vector<1x16x16xf32>
    %232 = math.exp %231 : vector<1x16x16xf32>
    %cst_97 = arith.constant dense<0.000000e+00> : vector<1x16xf32>
    %233 = vector.multi_reduction <add>, %232, %cst_97 [2] : vector<1x16x16xf32> to vector<1x16xf32>
    %234 = vector.shape_cast %233 : vector<1x16xf32> to vector<1x16x1xf32>
    %235 = tpu.reciprocal %234 {approx = true} : vector<1x16x1xf32> -> vector<1x16x1xf32>
    %236 = vector.broadcast %235 : vector<1x16x1xf32> to vector<1x16x16xf32>
    %237 = arith.mulf %232, %236 : vector<1x16x16xf32>
    %238 = arith.truncf %237 : vector<1x16x16xf32> to vector<1x16x16xbf16>
    "tpu.trace_start"() <{level = 10 : i32, message = "bqk,bkd->bqd"}> : () -> ()
    %cst_98 = arith.constant dense<0.000000e+00> : vector<1x16x8xf32>
    %239 = tpu.matmul %238, %226, %cst_98 {dimension_numbers = #tpu.dot_dimension_numbers<[2], [1], [1], [2], [0, 0, 0, 1, 1, 2], [0], [0]>} : vector<1x16x16xbf16>, vector<1x16x8xbf16>, vector<1x16x8xf32> -> vector<1x16x8xf32>
    "tpu.trace_stop"() : () -> ()
    %240 = tpu.concatenate %191, %207, %223, %239 in 2 : vector<1x16x8xf32>, vector<1x16x8xf32>, vector<1x16x8xf32>, vector<1x16x8xf32> -> vector<1x16x32xf32>
    %241 = vector.shape_cast %240 : vector<1x16x32xf32> to vector<16x32xf32>
    %242 = arith.truncf %241 : vector<16x32xf32> to vector<16x32xbf16>
    %c1_99 = arith.constant 1 : index
    %c0_100 = arith.constant 0 : index
    %c0_101 = arith.constant 0 : index
    %243 = vector.load %arg6[%c1_99, %c0_100, %c0_101] : memref<2x32x32xbf16, #tpu.memory_space<vmem>>, vector<1x32x32xbf16>
    %244 = vector.shape_cast %243 : vector<1x32x32xbf16> to vector<32x32xbf16>
    %cst_102 = arith.constant dense<0.000000e+00> : vector<16x32xf32>
    %245 = tpu.matmul %242, %244, %cst_102 {dimension_numbers = #tpu.dot_dimension_numbers<[1], [0], [0], [1], [0, 0, 1, 1], [], []>} : vector<16x32xbf16>, vector<32x32xbf16>, vector<16x32xf32> -> vector<16x32xf32>
    %c1_103 = arith.constant 1 : index
    %c0_104 = arith.constant 0 : index
    %c0_105 = arith.constant 0 : index
    %c0_106 = arith.constant 0 : index
    %246 = vector.load %arg8[%c1_103, %c0_104, %c0_105, %c0_106] : memref<2x7x1x32xf32, #tpu.memory_space<vmem>>, vector<1x1x1x32xf32>
    %247 = vector.shape_cast %246 : vector<1x1x1x32xf32> to vector<1x32xf32>
    %248 = vector.broadcast %247 : vector<1x32xf32> to vector<16x32xf32>
    %249 = arith.addf %245, %248 : vector<16x32xf32>
    %250 = arith.addf %165, %249 : vector<16x32xf32>
    %c1_107 = arith.constant 1 : index
    %c1_108 = arith.constant 1 : index
    %c0_109 = arith.constant 0 : index
    %c0_110 = arith.constant 0 : index
    %251 = vector.load %arg8[%c1_107, %c1_108, %c0_109, %c0_110] : memref<2x7x1x32xf32, #tpu.memory_space<vmem>>, vector<1x1x1x32xf32>
    %252 = vector.shape_cast %251 : vector<1x1x1x32xf32> to vector<1x32xf32>
    %c1_111 = arith.constant 1 : index
    %c2_112 = arith.constant 2 : index
    %c0_113 = arith.constant 0 : index
    %c0_114 = arith.constant 0 : index
    %253 = vector.load %arg8[%c1_111, %c2_112, %c0_113, %c0_114] : memref<2x7x1x32xf32, #tpu.memory_space<vmem>>, vector<1x1x1x32xf32>
    %254 = vector.shape_cast %253 : vector<1x1x1x32xf32> to vector<1x32xf32>
    %cst_115 = arith.constant dense<0.000000e+00> : vector<16xf32>
    %255 = vector.multi_reduction <add>, %250, %cst_115 [1] : vector<16x32xf32> to vector<16xf32>
    %256 = vector.shape_cast %255 : vector<16xf32> to vector<16x1xf32>
    %cst_116 = arith.constant 3.200000e+01 : f32
    %257 = vector.broadcast %cst_116 : f32 to vector<16x1xf32>
    %258 = arith.divf %256, %257 : vector<16x1xf32>
    %259 = vector.broadcast %258 : vector<16x1xf32> to vector<16x32xf32>
    %260 = arith.subf %250, %259 : vector<16x32xf32>
    %261 = arith.mulf %260, %260 : vector<16x32xf32>
    %cst_117 = arith.constant dense<0.000000e+00> : vector<16xf32>
    %262 = vector.multi_reduction <add>, %261, %cst_117 [1] : vector<16x32xf32> to vector<16xf32>
    %263 = vector.shape_cast %262 : vector<16xf32> to vector<16x1xf32>
    %cst_118 = arith.constant 3.200000e+01 : f32
    %264 = vector.broadcast %cst_118 : f32 to vector<16x1xf32>
    %265 = arith.divf %263, %264 : vector<16x1xf32>
    %266 = vector.broadcast %258 : vector<16x1xf32> to vector<16x32xf32>
    %267 = arith.subf %250, %266 : vector<16x32xf32>
    %cst_119 = arith.constant 9.99999974E-6 : f32
    %268 = vector.broadcast %cst_119 : f32 to vector<16x1xf32>
    %269 = arith.addf %265, %268 : vector<16x1xf32>
    %270 = math.rsqrt %269 : vector<16x1xf32>
    %271 = vector.broadcast %270 : vector<16x1xf32> to vector<16x32xf32>
    %272 = arith.mulf %267, %271 : vector<16x32xf32>
    %273 = vector.broadcast %252 : vector<1x32xf32> to vector<16x32xf32>
    %274 = arith.mulf %272, %273 : vector<16x32xf32>
    %275 = vector.broadcast %254 : vector<1x32xf32> to vector<16x32xf32>
    %276 = arith.addf %274, %275 : vector<16x32xf32>
    %277 = arith.truncf %276 : vector<16x32xf32> to vector<16x32xbf16>
    %c1_120 = arith.constant 1 : index
    %c0_121 = arith.constant 0 : index
    %c0_122 = arith.constant 0 : index
    %c0_123 = arith.constant 0 : index
    %278 = vector.load %arg7[%c1_120, %c0_121, %c0_122, %c0_123] : memref<2x2x32x32xbf16, #tpu.memory_space<vmem>>, vector<1x1x32x32xbf16>
    %279 = vector.shape_cast %278 : vector<1x1x32x32xbf16> to vector<32x32xbf16>
    %cst_124 = arith.constant dense<0.000000e+00> : vector<16x32xf32>
    %280 = tpu.matmul %277, %279, %cst_124 {dimension_numbers = #tpu.dot_dimension_numbers<[1], [0], [0], [1], [0, 0, 1, 1], [], []>} : vector<16x32xbf16>, vector<32x32xbf16>, vector<16x32xf32> -> vector<16x32xf32>
    %c1_125 = arith.constant 1 : index
    %c3_126 = arith.constant 3 : index
    %c0_127 = arith.constant 0 : index
    %c0_128 = arith.constant 0 : index
    %281 = vector.load %arg8[%c1_125, %c3_126, %c0_127, %c0_128] : memref<2x7x1x32xf32, #tpu.memory_space<vmem>>, vector<1x1x1x32xf32>
    %282 = vector.shape_cast %281 : vector<1x1x1x32xf32> to vector<1x32xf32>
    %283 = vector.broadcast %282 : vector<1x32xf32> to vector<16x32xf32>
    %284 = arith.addf %280, %283 : vector<16x32xf32>
    %cst_129 = arith.constant 0.000000e+00 : f32
    %285 = vector.broadcast %cst_129 : f32 to vector<16x32xf32>
    %286 = arith.maximumf %284, %285 : vector<16x32xf32>
    %287 = arith.truncf %286 : vector<16x32xf32> to vector<16x32xbf16>
    %c1_130 = arith.constant 1 : index
    %c1_131 = arith.constant 1 : index
    %c0_132 = arith.constant 0 : index
    %c0_133 = arith.constant 0 : index
    %288 = vector.load %arg7[%c1_130, %c1_131, %c0_132, %c0_133] : memref<2x2x32x32xbf16, #tpu.memory_space<vmem>>, vector<1x1x32x32xbf16>
    %289 = vector.shape_cast %288 : vector<1x1x32x32xbf16> to vector<32x32xbf16>
    %cst_134 = arith.constant dense<0.000000e+00> : vector<16x32xf32>
    %290 = tpu.matmul %287, %289, %cst_134 {dimension_numbers = #tpu.dot_dimension_numbers<[1], [0], [0], [1], [0, 0, 1, 1], [], []>} : vector<16x32xbf16>, vector<32x32xbf16>, vector<16x32xf32> -> vector<16x32xf32>
    %c1_135 = arith.constant 1 : index
    %c4_136 = arith.constant 4 : index
    %c0_137 = arith.constant 0 : index
    %c0_138 = arith.constant 0 : index
    %291 = vector.load %arg8[%c1_135, %c4_136, %c0_137, %c0_138] : memref<2x7x1x32xf32, #tpu.memory_space<vmem>>, vector<1x1x1x32xf32>
    %292 = vector.shape_cast %291 : vector<1x1x1x32xf32> to vector<1x32xf32>
    %293 = vector.broadcast %292 : vector<1x32xf32> to vector<16x32xf32>
    %294 = arith.addf %290, %293 : vector<16x32xf32>
    %295 = arith.addf %276, %294 : vector<16x32xf32>
    %c1_139 = arith.constant 1 : index
    %c5_140 = arith.constant 5 : index
    %c0_141 = arith.constant 0 : index
    %c0_142 = arith.constant 0 : index
    %296 = vector.load %arg8[%c1_139, %c5_140, %c0_141, %c0_142] : memref<2x7x1x32xf32, #tpu.memory_space<vmem>>, vector<1x1x1x32xf32>
    %297 = vector.shape_cast %296 : vector<1x1x1x32xf32> to vector<1x32xf32>
    %c1_143 = arith.constant 1 : index
    %c6_144 = arith.constant 6 : index
    %c0_145 = arith.constant 0 : index
    %c0_146 = arith.constant 0 : index
    %298 = vector.load %arg8[%c1_143, %c6_144, %c0_145, %c0_146] : memref<2x7x1x32xf32, #tpu.memory_space<vmem>>, vector<1x1x1x32xf32>
    %299 = vector.shape_cast %298 : vector<1x1x1x32xf32> to vector<1x32xf32>
    %cst_147 = arith.constant dense<0.000000e+00> : vector<16xf32>
    %300 = vector.multi_reduction <add>, %295, %cst_147 [1] : vector<16x32xf32> to vector<16xf32>
    %301 = vector.shape_cast %300 : vector<16xf32> to vector<16x1xf32>
    %cst_148 = arith.constant 3.200000e+01 : f32
    %302 = vector.broadcast %cst_148 : f32 to vector<16x1xf32>
    %303 = arith.divf %301, %302 : vector<16x1xf32>
    %304 = vector.broadcast %303 : vector<16x1xf32> to vector<16x32xf32>
    %305 = arith.subf %295, %304 : vector<16x32xf32>
    %306 = arith.mulf %305, %305 : vector<16x32xf32>
    %cst_149 = arith.constant dense<0.000000e+00> : vector<16xf32>
    %307 = vector.multi_reduction <add>, %306, %cst_149 [1] : vector<16x32xf32> to vector<16xf32>
    %308 = vector.shape_cast %307 : vector<16xf32> to vector<16x1xf32>
    %cst_150 = arith.constant 3.200000e+01 : f32
    %309 = vector.broadcast %cst_150 : f32 to vector<16x1xf32>
    %310 = arith.divf %308, %309 : vector<16x1xf32>
    %311 = vector.broadcast %303 : vector<16x1xf32> to vector<16x32xf32>
    %312 = arith.subf %295, %311 : vector<16x32xf32>
    %cst_151 = arith.constant 9.99999974E-6 : f32
    %313 = vector.broadcast %cst_151 : f32 to vector<16x1xf32>
    %314 = arith.addf %310, %313 : vector<16x1xf32>
    %315 = math.rsqrt %314 : vector<16x1xf32>
    %316 = vector.broadcast %315 : vector<16x1xf32> to vector<16x32xf32>
    %317 = arith.mulf %312, %316 : vector<16x32xf32>
    %318 = vector.broadcast %297 : vector<1x32xf32> to vector<16x32xf32>
    %319 = arith.mulf %317, %318 : vector<16x32xf32>
    %320 = vector.broadcast %299 : vector<1x32xf32> to vector<16x32xf32>
    %321 = arith.addf %319, %320 : vector<16x32xf32>
    %322 = arith.truncf %321 : vector<16x32xf32> to vector<16x32xbf16>
    %c0_152 = arith.constant 0 : index
    %c0_153 = arith.constant 0 : index
    %323 = vector.load %arg9[%c0_152, %c0_153] : memref<32x128xbf16, #tpu.memory_space<vmem>>, vector<32x128xbf16>
    %cst_154 = arith.constant dense<0.000000e+00> : vector<16x128xf32>
    %324 = tpu.matmul %322, %323, %cst_154 {dimension_numbers = #tpu.dot_dimension_numbers<[1], [0], [0], [1], [0, 0, 1, 1], [], []>} : vector<16x32xbf16>, vector<32x128xbf16>, vector<16x128xf32> -> vector<16x128xf32>
    %c0_155 = arith.constant 0 : index
    %c0_156 = arith.constant 0 : index
    %325 = vector.load %arg10[%c0_155, %c0_156] : memref<1x128xf32, #tpu.memory_space<vmem>>, vector<1x128xf32>
    %326 = vector.broadcast %325 : vector<1x128xf32> to vector<16x128xf32>
    %327 = arith.addf %324, %326 : vector<16x128xf32>
    %328 = vector.shape_cast %327 : vector<16x128xf32> to vector<1x16x128xf32>
    %c0_157 = arith.constant 0 : index
    %c0_158 = arith.constant 0 : index
    %c0_159 = arith.constant 0 : index
    %329 = vector.load %arg11[%c0_157, %c0_158, %c0_159] : memref<1x16x128xf32, #tpu.memory_space<vmem>>, vector<1x16x128xf32>
    tpu.vector_store %arg11[%c0_157, %c0_158, %c0_159], %328 {strides = array<i32>} : memref<1x16x128xf32, #tpu.memory_space<vmem>>, vector<1x16x128xf32>,
    return
  }
  func.func @transform_0(%arg0: i32) -> (i32, i32, i32) {
    %c0_i32 = arith.constant 0 : i32
    %c0_i32_0 = arith.constant 0 : i32
    %c0_i32_1 = arith.constant 0 : i32
    return %arg0, %c0_i32, %c0_i32_0 : i32, i32, i32
  }
  func.func @transform_1(%arg0: i32) -> (i32, i32) {
    %c0_i32 = arith.constant 0 : i32
    %c0_i32_0 = arith.constant 0 : i32
    %c0_i32_1 = arith.constant 0 : i32
    return %c0_i32, %c0_i32_0 : i32, i32
  }
  func.func @transform_2(%arg0: i32) -> (i32, i32) {
    %c0_i32 = arith.constant 0 : i32
    %c0_i32_0 = arith.constant 0 : i32
    %c0_i32_1 = arith.constant 0 : i32
    return %c0_i32, %c0_i32_0 : i32, i32
  }
  func.func @transform_3(%arg0: i32) -> (i32, i32, i32) {
    %c0_i32 = arith.constant 0 : i32
    %c0_i32_0 = arith.constant 0 : i32
    %c0_i32_1 = arith.constant 0 : i32
    %c0_i32_2 = arith.constant 0 : i32
    return %c0_i32, %c0_i32_0, %c0_i32_1 : i32, i32, i32
  }
  func.func @transform_4(%arg0: i32) -> (i32, i32, i32) {
    %c0_i32 = arith.constant 0 : i32
    %c0_i32_0 = arith.constant 0 : i32
    %c0_i32_1 = arith.constant 0 : i32
    %c0_i32_2 = arith.constant 0 : i32
    return %c0_i32, %c0_i32_0, %c0_i32_1 : i32, i32, i32
  }
  func.func @transform_5(%arg0: i32) -> (i32, i32, i32) {
    %c0_i32 = arith.constant 0 : i32
    %c0_i32_0 = arith.constant 0 : i32
    %c0_i32_1 = arith.constant 0 : i32
    %c0_i32_2 = arith.constant 0 : i32
    return %c0_i32, %c0_i32_0, %c0_i32_1 : i32, i32, i32
  }
  func.func @transform_6(%arg0: i32) -> (i32, i32, i32, i32) {
    %c0_i32 = arith.constant 0 : i32
    %c0_i32_0 = arith.constant 0 : i32
    %c0_i32_1 = arith.constant 0 : i32
    %c0_i32_2 = arith.constant 0 : i32
    %c0_i32_3 = arith.constant 0 : i32
    return %c0_i32, %c0_i32_0, %c0_i32_1, %c0_i32_2 : i32, i32, i32, i32
  }
  func.func @transform_7(%arg0: i32) -> (i32, i32, i32, i32) {
    %c0_i32 = arith.constant 0 : i32
    %c0_i32_0 = arith.constant 0 : i32
    %c0_i32_1 = arith.constant 0 : i32
    %c0_i32_2 = arith.constant 0 : i32
    %c0_i32_3 = arith.constant 0 : i32
    return %c0_i32, %c0_i32_0, %c0_i32_1, %c0_i32_2 : i32, i32, i32, i32
  }
  func.func @transform_8(%arg0: i32) -> (i32, i32) {
    %c0_i32 = arith.constant 0 : i32
    %c0_i32_0 = arith.constant 0 : i32
    %c0_i32_1 = arith.constant 0 : i32
    return %c0_i32, %c0_i32_0 : i32, i32
  }
  func.func @transform_9(%arg0: i32) -> (i32, i32) {
    %c0_i32 = arith.constant 0 : i32
    %c0_i32_0 = arith.constant 0 : i32
    %c0_i32_1 = arith.constant 0 : i32
    return %c0_i32, %c0_i32_0 : i32, i32
  }
  func.func @transform_10(%arg0: i32) -> (i32, i32, i32) {
    %c0_i32 = arith.constant 0 : i32
    %c0_i32_0 = arith.constant 0 : i32
    %c0_i32_1 = arith.constant 0 : i32
    return %arg0, %c0_i32, %c0_i32_0 : i32, i32, i32
  }
}

</mosaic_0001>

<llo_original>
// kernel: tpu_custom_call.1
$region0: #{tpu_custom_call.1}
  #allocation0 [shape = 'u32[]', space=smem, size = 0x4, offset = 0x4, fixed_abs, tag = 'smem constant byte address 0x4 - core index']
  #allocation1 [shape = 'u32[144,128]{1,0:T(1,128)}', space=vmem, size = 0x12000, scoped, tag = 'internal scratch']
  %s0 = inlined_call_operand.vmem [shape: f32[2,16,4], index: 0, kind: input, shape index: {}]
  %s1 = inlined_call_operand.hbm [shape: f32[16,32], index: 1, kind: input, shape index: {}]
  %s2 = inlined_call_operand.hbm [shape: bf16[4,32], index: 2, kind: input, shape index: {}]
  %s3 = inlined_call_operand.vmem [shape: bf16[2,32,96], index: 3, kind: input, shape index: {}]
  %s4 = inlined_call_operand.hbm [shape: f32[2,1,96], index: 4, kind: input, shape index: {}]
  %s5 = inlined_call_operand.hbm [shape: bf16[2,32,32], index: 5, kind: input, shape index: {}]
  %s6 = inlined_call_operand.hbm [shape: bf16[2,2,32,32], index: 6, kind: input, shape index: {}]
  %s7 = inlined_call_operand.hbm [shape: f32[2,7,1,32], index: 7, kind: input, shape index: {}]
  %s8 = inlined_call_operand.vmem [shape: bf16[32,128], index: 8, kind: input, shape index: {}]
  %s9 = inlined_call_operand.vmem [shape: f32[1,128], index: 9, kind: input, shape index: {}]
  %s10 = inlined_call_operand.hbm [shape: f32[2,16,128], index: 10, kind: output, shape index: {}]
  %s11 = sld [smem:[#allocation0]]
  $region97: #{tpu_custom_call.1} parent=0
    _
  %s13 = ssub.s32 1, %s11
  %s14 = scalar_select 0, %s13, %s11
  $region1: #{tpu_custom_call.1} parent=0
    #allocation2 [shape = 'u8[8192]{0}', space=vmem, size = 0x2000, scoped, tag = 'input window, operand 1, single buffered']
    #allocation3 [shape = 's32[2]{0}', space=sflag, size = 0x8, scoped, tag = 'scoped memory for tpu_custom_call.1']
    #allocation4 [shape = 's32[2]{0}', space=sflag, size = 0x8, scoped, tag = 'scoped memory for tpu_custom_call.1']
    #allocation5 [shape = 'u8[1024]{0}', space=vmem, size = 0x400, scoped, tag = 'input window, operand 2, single buffered']
    #allocation6 [shape = 's32[1]{0}', space=sflag, size = 0x4, scoped, tag = 'scoped memory for tpu_custom_call.1']
    #allocation7 [shape = 'u8[1024]{0}', space=vmem, size = 0x400, scoped, tag = 'input window, operand 4, single buffered']
    #allocation8 [shape = 'u8[16384]{0}', space=vmem, size = 0x4000, scoped, tag = 'input window, operand 5, single buffered']
    #allocation9 [shape = 's32[1]{0}', space=sflag, size = 0x4, scoped, tag = 'scoped memory for tpu_custom_call.1']
    #allocation10 [shape = 'u8[32768]{0}', space=vmem, size = 0x8000, scoped, tag = 'input window, operand 6, single buffered']
    #allocation11 [shape = 'u8[7168]{0}', space=vmem, size = 0x1c00, scoped, tag = 'input window, operand 7, single buffered']
    #allocation12 [shape = 's32[1]{0}', space=sflag, size = 0x4, scoped, tag = 'scoped memory for tpu_custom_call.1']
    #allocation13 [shape = 'u8[16384]{0}', space=vmem, size = 0x4000, scoped, tag = 'output window, operand 0']
    %15 = vsyncpa [#allocation3], 0
    %16 = vsyncpa [#allocation6], 0
    %17 = vsyncpa [#allocation9], 0
    %18 = vsyncpa [#allocation12], 0
    %19 = vsyncpa [#allocation4], 0
    %s20 = scalar_lea.sflag [#allocation4], 1
    %21 = vsyncpa %s20, 0
    loop: start=0, step=1, limit=4
    $region2: #{tpu_custom_call.1} parent=1 // loop_pre_header
      _
    $region3: #{tpu_custom_call.1} parent=1 // loop_header
      %s23 = sphi 0, %s27
      %p24 = scmp.ge.s32.totalorder %s23, 4
      %s33 = sphi 0, %s35
      %s36 = sphi 0, %s33
      %s37 = sphi 0, %s36
      %s53 = sphi 0, %s37
      %s57 = sphi 0, %s57
      %s59 = sphi 0, %s57
      %s60 = sphi 0, %s59
      %s74 = sphi 0, %s60
      %s78 = sphi 0, %s78
      %s80 = sphi 0, %s78
      %s81 = sphi 0, %s80
      %s95 = sphi 0, %s81
      %s99 = sphi 0, %s99
      %s101 = sphi 0, %s99
      %s102 = sphi 0, %s101
      %s116 = sphi 0, %s102
      %s120 = sphi 0, %s120
      %s122 = sphi 0, %s120
      %s123 = sphi 0, %s122
      %s137 = sphi 0, %s123
      %s141 = sphi 0, %s141
      %s143 = sphi 0, %s141
      %s144 = sphi 0, %s143
      %s158 = sphi 0, %s144
      %s162 = sphi 0, %s162
      %s164 = sphi 0, %s162
      %s165 = sphi 0, %s164
      %s179 = sphi 0, %s165
      %s183 = sphi 0, %s183
      %s185 = sphi 0, %s183
      %s186 = sphi 0, %s185
      %s200 = sphi 0, %s186
      %s204 = sphi 0, %s204
      %s206 = sphi 0, %s204
      %s207 = sphi 0, %s206
      %s221 = sphi 0, %s207
      %s225 = sphi 0, %s225
      %s227 = sphi 0, %s225
      %s228 = sphi 0, %s227
      %s242 = sphi 0, %s228
      %s248 = sphi 0, %s250
      %s251 = sphi 0, %s248
      %s252 = sphi 0, %s251
      %s268 = sphi 0, %s252
    $region4: #{tpu_custom_call.1} parent=1 // loop_header_branch
      %26 = sbr.rel (%p24) target = $region8
    $region5: #{tpu_custom_call.1} parent=1 // loop_body
      %s28 = ssub.s32 %s23, 1
      %s29 = ssub.s32 %s23, 2
      %s30 = sadd.s32 %s23, 1
      %s31 = ssub.s32 %s23, %s30
      %p32 = scmp.eq.s32.totalorder %s31, 0
      %s34 = sadd.s32 %s33, 1
      %s35 = scalar_select %p32, %s33, %s34
      %p38 = pneg %p32
      %p39 = scmp.eq.s32.totalorder %s23, 1
      %p40 = por %p38, %p39
      %p41 = scmp.ne.s32.totalorder %s33, %s36
      %p42 = scmp.eq.s32.totalorder %s23, 0
      %p43 = por %p41, %p42
      %p44 = scmp.ne.s32.totalorder %s33, %s36
      %p45 = scmp.eq.s32.totalorder %s28, 1
      %p46 = por %p44, %p45
      %p47 = scmp.ne.s32.totalorder %s36, %s37
      %p48 = scmp.eq.s32.totalorder %s28, 0
      %p49 = por %p47, %p48
      %p50 = scmp.ne.s32.totalorder %s36, %s37
      %p51 = scmp.eq.s32.totalorder %s29, 1
      %p52 = por %p50, %p51
      %p54 = scmp.ne.s32.totalorder %s37, %s53
      %p55 = scmp.eq.s32.totalorder %s29, 0
      %p56 = por %p54, %p55
      %s58 = sadd.s32 %s57, 1
      %p61 = scmp.eq.s32.totalorder %s23, 1
      %p62 = scmp.ne.s32.totalorder %s57, %s59
      %p63 = scmp.eq.s32.totalorder %s23, 0
      %p64 = por %p62, %p63
      %p65 = scmp.ne.s32.totalorder %s57, %s59
      %p66 = scmp.eq.s32.totalorder %s28, 1
      %p67 = por %p65, %p66
      %p68 = scmp.ne.s32.totalorder %s59, %s60
      %p69 = scmp.eq.s32.totalorder %s28, 0
      %p70 = por %p68, %p69
      %p71 = scmp.ne.s32.totalorder %s59, %s60
      %p72 = scmp.eq.s32.totalorder %s29, 1
      %p73 = por %p71, %p72
      %p75 = scmp.ne.s32.totalorder %s60, %s74
      %p76 = scmp.eq.s32.totalorder %s29, 0
      %p77 = por %p75, %p76
      %s79 = sadd.s32 %s78, 1
      %p82 = scmp.eq.s32.totalorder %s23, 1
      %p83 = scmp.ne.s32.totalorder %s78, %s80
      %p84 = scmp.eq.s32.totalorder %s23, 0
      %p85 = por %p83, %p84
      %p86 = scmp.ne.s32.totalorder %s78, %s80
      %p87 = scmp.eq.s32.totalorder %s28, 1
      %p88 = por %p86, %p87
      %p89 = scmp.ne.s32.totalorder %s80, %s81
      %p90 = scmp.eq.s32.totalorder %s28, 0
      %p91 = por %p89, %p90
      %p92 = scmp.ne.s32.totalorder %s80, %s81
      %p93 = scmp.eq.s32.totalorder %s29, 1
      %p94 = por %p92, %p93
      %p96 = scmp.ne.s32.totalorder %s81, %s95
      %p97 = scmp.eq.s32.totalorder %s29, 0
      %p98 = por %p96, %p97
      %s100 = sadd.s32 %s99, 1
      %p103 = scmp.eq.s32.totalorder %s23, 1
      %p104 = scmp.ne.s32.totalorder %s99, %s101
      %p105 = scmp.eq.s32.totalorder %s23, 0
      %p106 = por %p104, %p105
      %p107 = scmp.ne.s32.totalorder %s99, %s101
      %p108 = scmp.eq.s32.totalorder %s28, 1
      %p109 = por %p107, %p108
      %p110 = scmp.ne.s32.totalorder %s101, %s102
      %p111 = scmp.eq.s32.totalorder %s28, 0
      %p112 = por %p110, %p111
      %p113 = scmp.ne.s32.totalorder %s101, %s102
      %p114 = scmp.eq.s32.totalorder %s29, 1
      %p115 = por %p113, %p114
      %p117 = scmp.ne.s32.totalorder %s102, %s116
      %p118 = scmp.eq.s32.totalorder %s29, 0
      %p119 = por %p117, %p118
      %s121 = sadd.s32 %s120, 1
      %p124 = scmp.eq.s32.totalorder %s23, 1
      %p125 = scmp.ne.s32.totalorder %s120, %s122
      %p126 = scmp.eq.s32.totalorder %s23, 0
      %p127 = por %p125, %p126
      %p128 = scmp.ne.s32.totalorder %s120, %s122
      %p129 = scmp.eq.s32.totalorder %s28, 1
      %p130 = por %p128, %p129
      %p131 = scmp.ne.s32.totalorder %s122, %s123
      %p132 = scmp.eq.s32.totalorder %s28, 0
      %p133 = por %p131, %p132
      %p134 = scmp.ne.s32.totalorder %s122, %s123
      %p135 = scmp.eq.s32.totalorder %s29, 1
      %p136 = por %p134, %p135
      %p138 = scmp.ne.s32.totalorder %s123, %s137
      %p139 = scmp.eq.s32.totalorder %s29, 0
      %p140 = por %p138, %p139
      %s142 = sadd.s32 %s141, 1
      %p145 = scmp.eq.s32.totalorder %s23, 1
      %p146 = scmp.ne.s32.totalorder %s141, %s143
      %p147 = scmp.eq.s32.totalorder %s23, 0
      %p148 = por %p146, %p147
      %p149 = scmp.ne.s32.totalorder %s141, %s143
      %p150 = scmp.eq.s32.totalorder %s28, 1
      %p151 = por %p149, %p150
      %p152 = scmp.ne.s32.totalorder %s143, %s144
      %p153 = scmp.eq.s32.totalorder %s28, 0
      %p154 = por %p152, %p153
      %p155 = scmp.ne.s32.totalorder %s143, %s144
      %p156 = scmp.eq.s32.totalorder %s29, 1
      %p157 = por %p155, %p156
      %p159 = scmp.ne.s32.totalorder %s144, %s158
      %p160 = scmp.eq.s32.totalorder %s29, 0
      %p161 = por %p159, %p160
      %s163 = sadd.s32 %s162, 1
      %p166 = scmp.eq.s32.totalorder %s23, 1
      %p167 = scmp.ne.s32.totalorder %s162, %s164
      %p168 = scmp.eq.s32.totalorder %s23, 0
      %p169 = por %p167, %p168
      %p170 = scmp.ne.s32.totalorder %s162, %s164
      %p171 = scmp.eq.s32.totalorder %s28, 1
      %p172 = por %p170, %p171
      %p173 = scmp.ne.s32.totalorder %s164, %s165
      %p174 = scmp.eq.s32.totalorder %s28, 0
      %p175 = por %p173, %p174
      %p176 = scmp.ne.s32.totalorder %s164, %s165
      %p177 = scmp.eq.s32.totalorder %s29, 1
      %p178 = por %p176, %p177
      %p180 = scmp.ne.s32.totalorder %s165, %s179
      %p181 = scmp.eq.s32.totalorder %s29, 0
      %p182 = por %p180, %p181
      %s184 = sadd.s32 %s183, 1
      %p187 = scmp.eq.s32.totalorder %s23, 1
      %p188 = scmp.ne.s32.totalorder %s183, %s185
      %p189 = scmp.eq.s32.totalorder %s23, 0
      %p190 = por %p188, %p189
      %p191 = scmp.ne.s32.totalorder %s183, %s185
      %p192 = scmp.eq.s32.totalorder %s28, 1
      %p193 = por %p191, %p192
      %p194 = scmp.ne.s32.totalorder %s185, %s186
      %p195 = scmp.eq.s32.totalorder %s28, 0
      %p196 = por %p194, %p195
      %p197 = scmp.ne.s32.totalorder %s185, %s186
      %p198 = scmp.eq.s32.totalorder %s29, 1
      %p199 = por %p197, %p198
      %p201 = scmp.ne.s32.totalorder %s186, %s200
      %p202 = scmp.eq.s32.totalorder %s29, 0
      %p203 = por %p201, %p202
      %s205 = sadd.s32 %s204, 1
      %p208 = scmp.eq.s32.totalorder %s23, 1
      %p209 = scmp.ne.s32.totalorder %s204, %s206
      %p210 = scmp.eq.s32.totalorder %s23, 0
      %p211 = por %p209, %p210
      %p212 = scmp.ne.s32.totalorder %s204, %s206
      %p213 = scmp.eq.s32.totalorder %s28, 1
      %p214 = por %p212, %p213
      %p215 = scmp.ne.s32.totalorder %s206, %s207
      %p216 = scmp.eq.s32.totalorder %s28, 0
      %p217 = por %p215, %p216
      %p218 = scmp.ne.s32.totalorder %s206, %s207
      %p219 = scmp.eq.s32.totalorder %s29, 1
      %p220 = por %p218, %p219
      %p222 = scmp.ne.s32.totalorder %s207, %s221
      %p223 = scmp.eq.s32.totalorder %s29, 0
      %p224 = por %p222, %p223
      %s226 = sadd.s32 %s225, 1
      %p229 = scmp.eq.s32.totalorder %s23, 1
      %p230 = scmp.ne.s32.totalorder %s225, %s227
      %p231 = scmp.eq.s32.totalorder %s23, 0
      %p232 = por %p230, %p231
      %p233 = scmp.ne.s32.totalorder %s225, %s227
      %p234 = scmp.eq.s32.totalorder %s28, 1
      %p235 = por %p233, %p234
      %p236 = scmp.ne.s32.totalorder %s227, %s228
      %p237 = scmp.eq.s32.totalorder %s28, 0
      %p238 = por %p236, %p237
      %p239 = scmp.ne.s32.totalorder %s227, %s228
      %p240 = scmp.eq.s32.totalorder %s29, 1
      %p241 = por %p239, %p240
      %p243 = scmp.ne.s32.totalorder %s228, %s242
      %p244 = scmp.eq.s32.totalorder %s29, 0
      %p245 = por %p243, %p244
      %s246 = ssub.s32 %s23, %s30
      %p247 = scmp.eq.s32.totalorder %s246, 0
      %s249 = sadd.s32 %s248, 1
      %s250 = scalar_select %p247, %s248, %s249
      %p253 = pneg %p247
      %p254 = scmp.eq.s32.totalorder %s23, 1
      %p255 = por %p253, %p254
      %p256 = scmp.ne.s32.totalorder %s248, %s251
      %p257 = scmp.eq.s32.totalorder %s23, 0
      %p258 = por %p256, %p257
      %p259 = scmp.ne.s32.totalorder %s248, %s251
      %p260 = scmp.eq.s32.totalorder %s28, 1
      %p261 = por %p259, %p260
      %p262 = scmp.ne.s32.totalorder %s251, %s252
      %p263 = scmp.eq.s32.totalorder %s28, 0
      %p264 = por %p262, %p263
      %p265 = scmp.ne.s32.totalorder %s251, %s252
      %p266 = scmp.eq.s32.totalorder %s29, 1
      %p267 = por %p265, %p266
      %p269 = scmp.ne.s32.totalorder %s252, %s268
      %p270 = scmp.eq.s32.totalorder %s29, 0
      %p271 = por %p269, %p270
      %p272 = scmp.le.s32.totalorder 1, %s23
      %p273 = scmp.lt.s32.totalorder %s23, 3
      %p274 = pnand %p272, %p273
      %p275 = pneg %p274
      // Predicated region
      $region9: #{tpu_custom_call.1} parent=5 // pred_check
        _
      $region10: #{tpu_custom_call.1} parent=5 // pred_check_branch
        %277 = sbr.rel (%p274) target = $region12
      $region11: #{tpu_custom_call.1} parent=5 // pred_region
        %s278 = ssub.s32 %s23, 1
        // Predicated region
        $region13: #{tpu_custom_call.1} parent=11 // pred_check
          %p279 = pneg %p70
        $region14: #{tpu_custom_call.1} parent=11 // pred_check_branch
          %281 = sbr.rel (%p279) target = $region16
        $region15: #{tpu_custom_call.1} parent=11 // pred_region
          %s283 = ssub.s32 256, 256
          %284 = vsyncadd [#allocation3], %s283
          %s285 = sshll.u32 [#allocation2], 4
          %s286 = int_to_ptr.vmem [resolvable:$true] %s285
          %291 = dma.hbm_to_vmem [thread:$0]  %s1, 256, %s286, [#allocation3], 128, 128, 8
        $region16: #{tpu_custom_call.1} parent=11 // pred_fallthru
          _
        // Predicated region
        $region17: #{tpu_custom_call.1} parent=11 // pred_check
          %p292 = pneg %p91
        $region18: #{tpu_custom_call.1} parent=11 // pred_check_branch
          %294 = sbr.rel (%p292) target = $region20
        $region19: #{tpu_custom_call.1} parent=11 // pred_region
          %s296 = ssub.s32 32, 32
          %297 = vsyncadd [#allocation6], %s296
          %s299 = sshll.u32 [#allocation5], 4
          %s300 = int_to_ptr.vmem [resolvable:$true] %s299
          %302 = dma.hbm_to_vmem [thread:$0]  %s2, 32, %s300, [#allocation6]
        $region20: #{tpu_custom_call.1} parent=11 // pred_fallthru
          _
        // Predicated region
        $region21: #{tpu_custom_call.1} parent=11 // pred_check
          %p303 = pneg %p112
        $region22: #{tpu_custom_call.1} parent=11 // pred_check_branch
          %305 = sbr.rel (%p303) target = $region24
        $region23: #{tpu_custom_call.1} parent=11 // pred_region
          _
        $region24: #{tpu_custom_call.1} parent=11 // pred_fallthru
          _
        // Predicated region
        $region25: #{tpu_custom_call.1} parent=11 // pred_check
          %p306 = pneg %p133
        $region26: #{tpu_custom_call.1} parent=11 // pred_check_branch
          %308 = sbr.rel (%p306) target = $region28
        $region27: #{tpu_custom_call.1} parent=11 // pred_region
          %s310 = ssub.s32 32, 32
          %311 = vsyncadd [#allocation6], %s310
          %s312 = sshll.u32 [#allocation7], 4
          %s313 = int_to_ptr.vmem [resolvable:$true] %s312
          %318 = dma.hbm_to_vmem [thread:$0]  %s4, 32, %s313, [#allocation6], 16, 16, 1
        $region28: #{tpu_custom_call.1} parent=11 // pred_fallthru
          _
        // Predicated region
        $region29: #{tpu_custom_call.1} parent=11 // pred_check
          %p319 = pneg %p154
        $region30: #{tpu_custom_call.1} parent=11 // pred_check_branch
          %321 = sbr.rel (%p319) target = $region32
        $region31: #{tpu_custom_call.1} parent=11 // pred_region
          %s323 = ssub.s32 512, 512
          %324 = vsyncadd [#allocation9], %s323
          %s325 = sshll.u32 [#allocation8], 4
          %s326 = int_to_ptr.vmem [resolvable:$true] %s325
          %331 = dma.hbm_to_vmem [thread:$0]  %s5, 512, %s326, [#allocation9], 64, 64, 4
        $region32: #{tpu_custom_call.1} parent=11 // pred_fallthru
          _
        // Predicated region
        $region33: #{tpu_custom_call.1} parent=11 // pred_check
          %p332 = pneg %p175
        $region34: #{tpu_custom_call.1} parent=11 // pred_check_branch
          %334 = sbr.rel (%p332) target = $region36
        $region35: #{tpu_custom_call.1} parent=11 // pred_region
          %s336 = ssub.s32 1024, 1024
          %337 = vsyncadd [#allocation9], %s336
          %s338 = sshll.u32 [#allocation10], 4
          %s339 = int_to_ptr.vmem [resolvable:$true] %s338
          %344 = dma.hbm_to_vmem [thread:$0]  %s6, 1024, %s339, [#allocation9], 64, 64, 4
        $region36: #{tpu_custom_call.1} parent=11 // pred_fallthru
          _
        // Predicated region
        $region37: #{tpu_custom_call.1} parent=11 // pred_check
          %p345 = pneg %p196
        $region38: #{tpu_custom_call.1} parent=11 // pred_check_branch
          %347 = sbr.rel (%p345) target = $region40
        $region39: #{tpu_custom_call.1} parent=11 // pred_region
          %s349 = ssub.s32 224, 224
          %350 = vsyncadd [#allocation12], %s349
          %s351 = sshll.u32 [#allocation11], 4
          %s352 = int_to_ptr.vmem [resolvable:$true] %s351
          %357 = dma.hbm_to_vmem [thread:$0]  %s7, 224, %s352, [#allocation12], 16, 16, 1
        $region40: #{tpu_custom_call.1} parent=11 // pred_fallthru
          _
        // Predicated region
        $region41: #{tpu_custom_call.1} parent=11 // pred_check
          %p358 = pneg %p217
        $region42: #{tpu_custom_call.1} parent=11 // pred_check_branch
          %360 = sbr.rel (%p358) target = $region44
        $region43: #{tpu_custom_call.1} parent=11 // pred_region
          _
        $region44: #{tpu_custom_call.1} parent=11 // pred_fallthru
          _
        // Predicated region
        $region45: #{tpu_custom_call.1} parent=11 // pred_check
          %p361 = pneg %p238
        $region46: #{tpu_custom_call.1} parent=11 // pred_check_branch
          %363 = sbr.rel (%p361) target = $region48
        $region47: #{tpu_custom_call.1} parent=11 // pred_region
          _
        $region48: #{tpu_custom_call.1} parent=11 // pred_fallthru
          _
      $region12: #{tpu_custom_call.1} parent=5 // pred_fallthru
        _
      %p364 = scmp.lt.s32.totalorder %s23, 2
      // Predicated region
      $region49: #{tpu_custom_call.1} parent=5 // pred_check
        %p365 = pneg %p364
      $region50: #{tpu_custom_call.1} parent=5 // pred_check_branch
        %367 = sbr.rel (%p365) target = $region52
      $region51: #{tpu_custom_call.1} parent=5 // pred_region
        // Predicated region
        $region53: #{tpu_custom_call.1} parent=51 // pred_check
          %p368 = pneg %p43
        $region54: #{tpu_custom_call.1} parent=51 // pred_check_branch
          %370 = sbr.rel (%p368) target = $region56
        $region55: #{tpu_custom_call.1} parent=51 // pred_region
          %p371 = scmp.lt.s32.totalorder %s23, 1
          %s372 = scalar_select %p371, %s23, 1
          %s373 = smul.addr %s372, 2
          %s374 = smul.addr %s373, 8
          %s375 = scalar_lea.vmem %s0, %s374
        $region56: #{tpu_custom_call.1} parent=51 // pred_fallthru
          _
      $region52: #{tpu_custom_call.1} parent=5 // pred_fallthru
        _
      %p376 = scmp.le.s32.totalorder 1, %s23
      %p377 = scmp.lt.s32.totalorder %s23, 3
      %p378 = pnand %p376, %p377
      %p379 = pneg %p378
      // Predicated region
      $region57: #{tpu_custom_call.1} parent=5 // pred_check
        _
      $region58: #{tpu_custom_call.1} parent=5 // pred_check_branch
        %381 = sbr.rel (%p378) target = $region60
      $region59: #{tpu_custom_call.1} parent=5 // pred_region
        %s382 = ssub.s32 %s23, 1
        // Predicated region
        $region61: #{tpu_custom_call.1} parent=59 // pred_check
          %p383 = pneg %p70
        $region62: #{tpu_custom_call.1} parent=59 // pred_check_branch
          %385 = sbr.rel (%p383) target = $region64
        $region63: #{tpu_custom_call.1} parent=59 // pred_region
          %386 = dma.done [#allocation3], 256
        $region64: #{tpu_custom_call.1} parent=59 // pred_fallthru
          _
        // Predicated region
        $region65: #{tpu_custom_call.1} parent=59 // pred_check
          %p387 = pneg %p91
        $region66: #{tpu_custom_call.1} parent=59 // pred_check_branch
          %389 = sbr.rel (%p387) target = $region68
        $region67: #{tpu_custom_call.1} parent=59 // pred_region
          %390 = dma.done [#allocation6], 32
        $region68: #{tpu_custom_call.1} parent=59 // pred_fallthru
          _
        // Predicated region
        $region69: #{tpu_custom_call.1} parent=59 // pred_check
          %p391 = pneg %p133
        $region70: #{tpu_custom_call.1} parent=59 // pred_check_branch
          %393 = sbr.rel (%p391) target = $region72
        $region71: #{tpu_custom_call.1} parent=59 // pred_region
          %394 = dma.done [#allocation6], 32
        $region72: #{tpu_custom_call.1} parent=59 // pred_fallthru
          _
        // Predicated region
        $region73: #{tpu_custom_call.1} parent=59 // pred_check
          %p395 = pneg %p154
        $region74: #{tpu_custom_call.1} parent=59 // pred_check_branch
          %397 = sbr.rel (%p395) target = $region76
        $region75: #{tpu_custom_call.1} parent=59 // pred_region
          %398 = dma.done [#allocation9], 512
        $region76: #{tpu_custom_call.1} parent=59 // pred_fallthru
          _
        // Predicated region
        $region77: #{tpu_custom_call.1} parent=59 // pred_check
          %p399 = pneg %p175
        $region78: #{tpu_custom_call.1} parent=59 // pred_check_branch
          %401 = sbr.rel (%p399) target = $region80
        $region79: #{tpu_custom_call.1} parent=59 // pred_region
          %402 = dma.done [#allocation9], 1024
        $region80: #{tpu_custom_call.1} parent=59 // pred_fallthru
          _
        // Predicated region
        $region81: #{tpu_custom_call.1} parent=59 // pred_check
          %p403 = pneg %p196
        $region82: #{tpu_custom_call.1} parent=59 // pred_check_branch
          %405 = sbr.rel (%p403) target = $region84
        $region83: #{tpu_custom_call.1} parent=59 // pred_region
          %406 = dma.done [#allocation12], 224
        $region84: #{tpu_custom_call.1} parent=59 // pred_fallthru
          _
        %p407 = scmp.lt.s32.totalorder %s28, 1
        %s408 = scalar_select %p407, %s28, 1
        %s409 = smul.addr %s408, 2
        %s410 = smul.addr %s409, 8
        %s411 = scalar_lea.vmem %s0, %s410
        %p412 = pneg %p49
        %p413 = pneg %p46
        %p414 = pneg %p70
        %p415 = pneg %p67
        %p416 = pneg %p91
        %p417 = pneg %p88
        %p418 = pneg %p112
        %p419 = pneg %p109
        %p420 = pneg %p133
        %p421 = pneg %p130
        %p422 = pneg %p154
        %p423 = pneg %p151
        %p424 = pneg %p175
        %p425 = pneg %p172
        %p426 = pneg %p196
        %p427 = pneg %p193
        %p428 = pneg %p217
        %p429 = pneg %p214
        %p430 = pneg %p238
        %p431 = pneg %p235
        %p432 = pneg %p264
        %p433 = pneg %p261
        %s434 = sand.u32 %s251, 1
        %s435 = scalar_lea.sflag [#allocation4], %s434
        %s436 = sand.u32 %s251, 1
        %s437 = smul.addr %s436, 16
        %s438 = scalar_lea.vmem [#allocation13], %s437
        %p439 = scmp.lt.s32.totalorder %s28, 1
        %s440 = scalar_select %p439, %s28, 1
        %s441 = smul.addr %s440, 2
        %s442 = smul.addr %s441, 8
        %s443 = scalar_lea.vmem %s0, %s442
        %v445 = vld [vmem:[%s443] sm:$0xff]
        %v446 = vld [vmem:[%s443 + $0x8] sm:$0xff]
        %v447 = vpack.c.bf16 %v446, %v445
        %v448 = vld [vmem:[#allocation5] sm:$0x3]
        %vm449 = vcmask 31744
        %v451 = vsel %vm449, %v447, 0
        %vm453 = vcmask 1041408
        %v455 = vsel %vm453, %v448, 0
        %457 = vmatprep.subr.bf16.mxu0 0
        %458 = vmatpush1.bf16.msra.mxu0 0
        %459 = vmatprep.subr.bf16.mxu0 0
        %460 = vmatpush1.bf16.msra.mxu0 0
        %461 = vmatprep.subr.bf16.mxu0 0
        %462 = vmatpush1.bf16.msra.mxu0 0
        %463 = vmatprep.subr.bf16.mxu0 0
        %464 = vmatpush1.bf16.msra.mxu0 0
        %465 = vmatprep.subr.bf16.mxu0 0
        %466 = vmatpush1.bf16.msra.mxu0 0
        %467 = vmatprep.subr.bf16.mxu0 0
        %468 = vmatpush1.bf16.msra.mxu0 0
        %469 = vmatprep.subr.bf16.mxu0 0
        %470 = vmatpush1.bf16.msra.mxu0 0
        %471 = vmatprep.subr.bf16.mxu0 0
        %472 = vmatpush1.bf16.msra.mxu0 %v455
        %473 = vmatprep.subr.bf16.mxu0 0
        %474 = vmatpush2.bf16.msra.mxu0 0
        %475 = vmatprep.subr.bf16.mxu0 0
        %476 = vmatpush2.bf16.msra.mxu0 0
        %477 = vmatprep.subr.bf16.mxu0 0
        %478 = vmatpush2.bf16.msra.mxu0 0
        %479 = vmatprep.subr.bf16.mxu0 0
        %480 = vmatpush2.bf16.msra.mxu0 0
        %481 = vmatprep.subr.bf16.mxu0 0
        %482 = vmatpush2.bf16.msra.mxu0 0
        %483 = vmatprep.subr.bf16.mxu0 0
        %484 = vmatpush2.bf16.msra.mxu0 0
        %485 = vmatprep.subr.bf16.mxu0 0
        %486 = vmatpush2.bf16.msra.mxu0 0
        %487 = vmatprep.subr.bf16.mxu0 0
        %488 = vmatpush2.bf16.msra.mxu0 0
        %489 = vmatprep.mubr.bf16.mxu0 0
        %490 = vmatmul.mubr.bf16.gmra.mxu0 %v451
        %v491 = vpop.f32.mrf.mxu0
        %v492 = vadd.f32 0.0, %v491
        %v493 = vpop.f32.mrf.mxu0
        %v494 = vpop.f32.mrf.mxu0
        %v495 = vadd.f32 0.0, %v494
        %v496 = vpop.f32.mrf.mxu0
        %497 = vdwg.mxu0
        %v498 = vld [vmem:[#allocation2] sm:$0xff]
        %v499 = vld [vmem:[#allocation2 + $0x8] sm:$0xff]
        %v500 = vadd.f32 %v492, %v498
        %v501 = vadd.f32 %v495, %v499
        %v502 = vpack.c.bf16 %v501, %v500
        %v503 = vld [vmem:[%s3] sm:$0xf]
        %v504 = vld [vmem:[%s3 + $0x4] sm:$0xf]
        %v505 = vld [vmem:[%s3 + $0x8] sm:$0xf]
        %v506 = vld [vmem:[%s3 + $0xc] sm:$0xf]
        %v507 = vld [vmem:[#allocation7] sm:$0x1]
        %v509 = vlaneseq
        %v510 = vshrl.u32 %v509, 7
        %v511 = vsub.s32 0, %v510
        %v512 = vrot.slane %v507, %v511
        %v518 = vunpack.c.l.b16 %v503
        %v519 = vunpack.c.l.b16 %v504
        %v520 = vunpack.c.l.b16 %v505
        %v521 = vunpack.c.l.b16 %v506
        %v522 = vpack.c.b16 %v519, %v518
        %v523 = vpack.c.b16 %v521, %v520
        %vm526 = vcmask 261120
        %v528 = vsel %vm526, %v502, 0
        %530 = vmatprep.subr.bf16.mxu0 0
        %531 = vmatpush1.bf16.msra.mxu0 0
        %532 = vmatprep.subr.bf16.mxu0 0
        %533 = vmatpush1.bf16.msra.mxu0 0
        %534 = vmatprep.subr.bf16.mxu0 0
        %535 = vmatpush1.bf16.msra.mxu0 0
        %536 = vmatprep.subr.bf16.mxu0 0
        %537 = vmatpush1.bf16.msra.mxu0 0
        %538 = vmatprep.subr.bf16.mxu0 0
        %539 = vmatpush1.bf16.msra.mxu0 0
        %540 = vmatprep.subr.bf16.mxu0 0
        %541 = vmatpush1.bf16.msra.mxu0 0
        %542 = vmatprep.subr.bf16.mxu0 0
        %543 = vmatpush1.bf16.msra.mxu0 %v523
        %544 = vmatprep.subr.bf16.mxu0 0
        %545 = vmatpush1.bf16.msra.mxu0 %v522
        %546 = vmatprep.subr.bf16.mxu0 0
        %547 = vmatpush2.bf16.msra.mxu0 0
        %548 = vmatprep.subr.bf16.mxu0 0
        %549 = vmatpush2.bf16.msra.mxu0 0
        %550 = vmatprep.subr.bf16.mxu0 0
        %551 = vmatpush2.bf16.msra.mxu0 0
        %552 = vmatprep.subr.bf16.mxu0 0
        %553 = vmatpush2.bf16.msra.mxu0 0
        %554 = vmatprep.subr.bf16.mxu0 0
        %555 = vmatpush2.bf16.msra.mxu0 0
        %556 = vmatprep.subr.bf16.mxu0 0
        %557 = vmatpush2.bf16.msra.mxu0 0
        %558 = vmatprep.subr.bf16.mxu0 0
        %559 = vmatpush2.bf16.msra.mxu0 0
        %560 = vmatprep.subr.bf16.mxu0 0
        %561 = vmatpush2.bf16.msra.mxu0 0
        %562 = vmatprep.mubr.bf16.mxu0 0
        %563 = vmatmul.mubr.bf16.gmra.mxu0 %v528
        %v564 = vpop.f32.mrf.mxu0
        %v565 = vadd.f32 %v512, %v564
        %v566 = vpop.f32.mrf.mxu0
        %v567 = vpop.f32.mrf.mxu0
        %v568 = vadd.f32 %v512, %v567
        %v569 = vpop.f32.mrf.mxu0
        %570 = vdwg.mxu0
        %v571 = vpack.c.bf16 %v568, %v565
        %573 = vrot.lane.b32.xlu0 %v571, 96
        %v574 = vpop.permute.xlu0 %573
        %vm575 = vcmask 64512
        %v577 = vsel %vm575, %v571, 0
        %v580 = vsel %vm575, %v574, 0
        %582 = vmatprep.subr.bf16.mxu0 0
        %583 = vmatpush1.bf16.xpose.msra.mxu0 0
        %584 = vmatprep.subr.bf16.mxu0 0
        %585 = vmatpush1.bf16.xpose.msra.mxu0 0
        %586 = vmatprep.subr.bf16.mxu0 0
        %587 = vmatpush1.bf16.xpose.msra.mxu0 0
        %588 = vmatprep.subr.bf16.mxu0 0
        %589 = vmatpush1.bf16.xpose.msra.mxu0 0
        %590 = vmatprep.subr.bf16.mxu0 0
        %591 = vmatpush1.bf16.xpose.msra.mxu0 0
        %592 = vmatprep.subr.bf16.mxu0 0
        %593 = vmatpush1.bf16.xpose.msra.mxu0 0
        %594 = vmatprep.subr.bf16.mxu0 0
        %595 = vmatpush1.bf16.xpose.msra.mxu0 0
        %596 = vmatprep.subr.bf16.mxu0 0
        %597 = vmatpush1.bf16.xpose.msra.mxu0 %v580
        %598 = vmatprep.subr.bf16.mxu0 0
        %599 = vmatpush2.bf16.xpose.msra.mxu0 0
        %600 = vmatprep.subr.bf16.mxu0 0
        %601 = vmatpush2.bf16.xpose.msra.mxu0 0
        %602 = vmatprep.subr.bf16.mxu0 0
        %603 = vmatpush2.bf16.xpose.msra.mxu0 0
        %604 = vmatprep.subr.bf16.mxu0 0
        %605 = vmatpush2.bf16.xpose.msra.mxu0 0
        %606 = vmatprep.subr.bf16.mxu0 0
        %607 = vmatpush2.bf16.xpose.msra.mxu0 0
        %608 = vmatprep.subr.bf16.mxu0 0
        %609 = vmatpush2.bf16.xpose.msra.mxu0 0
        %610 = vmatprep.subr.bf16.mxu0 0
        %611 = vmatpush2.bf16.xpose.msra.mxu0 0
        %612 = vmatprep.subr.bf16.mxu0 0
        %613 = vmatpush2.bf16.xpose.msra.mxu0 0
        %614 = vmatprep.mubr.bf16.mxu0 0
        %615 = vmatmul.mubr.bf16.gmra.mxu0 %v577
        %v616 = vpop.f32.mrf.mxu0
        %v617 = vadd.f32 0.0, %v616
        %v618 = vpop.f32.mrf.mxu0
        %v619 = vpop.f32.mrf.mxu0
        %v620 = vadd.f32 0.0, %v619
        %v621 = vpop.f32.mrf.mxu0
        %622 = vdwg.mxu0
        %vm623 = vcmask 130048
        %v624 = vsel %vm623, %v617, -inf
        %625 = vmax.xlane.f32.xlu0 %v624
        %v626 = vpop.xlane.xlu0 %625
        %v627 = vsel %vm623, %v620, -inf
        %628 = vmax.xlane.f32.xlu0 %v627
        %v629 = vpop.xlane.xlu0 %628
        %v630 = vsub.f32 %v617, %v626
        %v631 = vsub.f32 %v620, %v629
        %v632 = vmul.f32 %v630, 1.442695
        %v633 = vpow.pop %v632
        %v634 = vmul.f32 %v631, 1.442695
        %v635 = vpow.pop %v634
        %v636 = vsel %vm623, %v633, 0.0
        %637 = vadd.xlane.f32.xlu0 %v636
        %v638 = vpop.xlane.xlu0 %637
        %v639 = vsel %vm623, %v635, 0.0
        %640 = vadd.xlane.f32.xlu0 %v639
        %v641 = vpop.xlane.xlu0 %640
        %v642 = vrcp.pop %v638
        %v643 = vrcp.pop %v641
        %v644 = vmul.f32 %v633, %v642
        %v645 = vmul.f32 %v635, %v643
        %v646 = vpack.c.bf16 %v645, %v644
        %647 = vrot.lane.b32.xlu0 %v571, 64
        %v648 = vpop.permute.xlu0 %647
        %v651 = vsel %vm623, %v646, 0
        %653 = vmatprep.subr.bf16.mxu0 0
        %654 = vmatpush1.bf16.msra.mxu0 0
        %655 = vmatprep.subr.bf16.mxu0 0
        %656 = vmatpush1.bf16.msra.mxu0 0
        %657 = vmatprep.subr.bf16.mxu0 0
        %658 = vmatpush1.bf16.msra.mxu0 0
        %659 = vmatprep.subr.bf16.mxu0 0
        %660 = vmatpush1.bf16.msra.mxu0 0
        %661 = vmatprep.subr.bf16.mxu0 0
        %662 = vmatpush1.bf16.msra.mxu0 0
        %663 = vmatprep.subr.bf16.mxu0 0
        %664 = vmatpush1.bf16.msra.mxu0 0
        %665 = vmatprep.subr.bf16.mxu0 0
        %666 = vmatpush1.bf16.msra.mxu0 0
        %667 = vmatprep.subr.bf16.mxu0 0
        %668 = vmatpush1.bf16.msra.mxu0 %v648
        %669 = vmatprep.subr.bf16.mxu0 0
        %670 = vmatpush2.bf16.msra.mxu0 0
        %671 = vmatprep.subr.bf16.mxu0 0
        %672 = vmatpush2.bf16.msra.mxu0 0
        %673 = vmatprep.subr.bf16.mxu0 0
        %674 = vmatpush2.bf16.msra.mxu0 0
        %675 = vmatprep.subr.bf16.mxu0 0
        %676 = vmatpush2.bf16.msra.mxu0 0
        %677 = vmatprep.subr.bf16.mxu0 0
        %678 = vmatpush2.bf16.msra.mxu0 0
        %679 = vmatprep.subr.bf16.mxu0 0
        %680 = vmatpush2.bf16.msra.mxu0 0
        %681 = vmatprep.subr.bf16.mxu0 0
        %682 = vmatpush2.bf16.msra.mxu0 0
        %683 = vmatprep.subr.bf16.mxu0 0
        %684 = vmatpush2.bf16.msra.mxu0 0
        %685 = vmatprep.mubr.bf16.mxu0 0
        %686 = vmatmul.mubr.bf16.gmra.mxu0 %v651
        %v687 = vpop.f32.mrf.mxu0
        %v688 = vadd.f32 0.0, %v687
        %v689 = vpop.f32.mrf.mxu0
        %v690 = vpop.f32.mrf.mxu0
        %v691 = vadd.f32 0.0, %v690
        %v692 = vpop.f32.mrf.mxu0
        %693 = vdwg.mxu0
        %694 = vrot.lane.b32.xlu0 %v571, 120
        %v695 = vpop.permute.xlu0 %694
        %696 = vrot.lane.b32.xlu0 %v571, 88
        %v697 = vpop.permute.xlu0 %696
        %v699 = vsel %vm575, %v695, 0
        %v702 = vsel %vm575, %v697, 0
        %704 = vmatprep.subr.bf16.mxu0 0
        %705 = vmatpush1.bf16.xpose.msra.mxu0 0
        %706 = vmatprep.subr.bf16.mxu0 0
        %707 = vmatpush1.bf16.xpose.msra.mxu0 0
        %708 = vmatprep.subr.bf16.mxu0 0
        %709 = vmatpush1.bf16.xpose.msra.mxu0 0
        %710 = vmatprep.subr.bf16.mxu0 0
        %711 = vmatpush1.bf16.xpose.msra.mxu0 0
        %712 = vmatprep.subr.bf16.mxu0 0
        %713 = vmatpush1.bf16.xpose.msra.mxu0 0
        %714 = vmatprep.subr.bf16.mxu0 0
        %715 = vmatpush1.bf16.xpose.msra.mxu0 0
        %716 = vmatprep.subr.bf16.mxu0 0
        %717 = vmatpush1.bf16.xpose.msra.mxu0 0
        %718 = vmatprep.subr.bf16.mxu0 0
        %719 = vmatpush1.bf16.xpose.msra.mxu0 %v702
        %720 = vmatprep.subr.bf16.mxu0 0
        %721 = vmatpush2.bf16.xpose.msra.mxu0 0
        %722 = vmatprep.subr.bf16.mxu0 0
        %723 = vmatpush2.bf16.xpose.msra.mxu0 0
        %724 = vmatprep.subr.bf16.mxu0 0
        %725 = vmatpush2.bf16.xpose.msra.mxu0 0
        %726 = vmatprep.subr.bf16.mxu0 0
        %727 = vmatpush2.bf16.xpose.msra.mxu0 0
        %728 = vmatprep.subr.bf16.mxu0 0
        %729 = vmatpush2.bf16.xpose.msra.mxu0 0
        %730 = vmatprep.subr.bf16.mxu0 0
        %731 = vmatpush2.bf16.xpose.msra.mxu0 0
        %732 = vmatprep.subr.bf16.mxu0 0
        %733 = vmatpush2.bf16.xpose.msra.mxu0 0
        %734 = vmatprep.subr.bf16.mxu0 0
        %735 = vmatpush2.bf16.xpose.msra.mxu0 0
        %736 = vmatprep.mubr.bf16.mxu0 0
        %737 = vmatmul.mubr.bf16.gmra.mxu0 %v699
        %v738 = vpop.f32.mrf.mxu0
        %v739 = vadd.f32 0.0, %v738
        %v740 = vpop.f32.mrf.mxu0
        %v741 = vpop.f32.mrf.mxu0
        %v742 = vadd.f32 0.0, %v741
        %v743 = vpop.f32.mrf.mxu0
        %744 = vdwg.mxu0
        %v745 = vsel %vm623, %v739, -inf
        %746 = vmax.xlane.f32.xlu0 %v745
        %v747 = vpop.xlane.xlu0 %746
        %v748 = vsel %vm623, %v742, -inf
        %749 = vmax.xlane.f32.xlu0 %v748
        %v750 = vpop.xlane.xlu0 %749
        %v751 = vsub.f32 %v739, %v747
        %v752 = vsub.f32 %v742, %v750
        %v753 = vmul.f32 %v751, 1.442695
        %v754 = vpow.pop %v753
        %v755 = vmul.f32 %v752, 1.442695
        %v756 = vpow.pop %v755
        %v757 = vsel %vm623, %v754, 0.0
        %758 = vadd.xlane.f32.xlu0 %v757
        %v759 = vpop.xlane.xlu0 %758
        %v760 = vsel %vm623, %v756, 0.0
        %761 = vadd.xlane.f32.xlu0 %v760
        %v762 = vpop.xlane.xlu0 %761
        %v763 = vrcp.pop %v759
        %v764 = vrcp.pop %v762
        %v765 = vmul.f32 %v754, %v763
        %v766 = vmul.f32 %v756, %v764
        %v767 = vpack.c.bf16 %v766, %v765
        %768 = vrot.lane.b32.xlu0 %v571, 56
        %v769 = vpop.permute.xlu0 %768
        %v772 = vsel %vm623, %v767, 0
        %774 = vmatprep.subr.bf16.mxu0 0
        %775 = vmatpush1.bf16.msra.mxu0 0
        %776 = vmatprep.subr.bf16.mxu0 0
        %777 = vmatpush1.bf16.msra.mxu0 0
        %778 = vmatprep.subr.bf16.mxu0 0
        %779 = vmatpush1.bf16.msra.mxu0 0
        %780 = vmatprep.subr.bf16.mxu0 0
        %781 = vmatpush1.bf16.msra.mxu0 0
        %782 = vmatprep.subr.bf16.mxu0 0
        %783 = vmatpush1.bf16.msra.mxu0 0
        %784 = vmatprep.subr.bf16.mxu0 0
        %785 = vmatpush1.bf16.msra.mxu0 0
        %786 = vmatprep.subr.bf16.mxu0 0
        %787 = vmatpush1.bf16.msra.mxu0 0
        %788 = vmatprep.subr.bf16.mxu0 0
        %789 = vmatpush1.bf16.msra.mxu0 %v769
        %790 = vmatprep.subr.bf16.mxu0 0
        %791 = vmatpush2.bf16.msra.mxu0 0
        %792 = vmatprep.subr.bf16.mxu0 0
        %793 = vmatpush2.bf16.msra.mxu0 0
        %794 = vmatprep.subr.bf16.mxu0 0
        %795 = vmatpush2.bf16.msra.mxu0 0
        %796 = vmatprep.subr.bf16.mxu0 0
        %797 = vmatpush2.bf16.msra.mxu0 0
        %798 = vmatprep.subr.bf16.mxu0 0
        %799 = vmatpush2.bf16.msra.mxu0 0
        %800 = vmatprep.subr.bf16.mxu0 0
        %801 = vmatpush2.bf16.msra.mxu0 0
        %802 = vmatprep.subr.bf16.mxu0 0
        %803 = vmatpush2.bf16.msra.mxu0 0
        %804 = vmatprep.subr.bf16.mxu0 0
        %805 = vmatpush2.bf16.msra.mxu0 0
        %806 = vmatprep.mubr.bf16.mxu0 0
        %807 = vmatmul.mubr.bf16.gmra.mxu0 %v772
        %v808 = vpop.f32.mrf.mxu0
        %v809 = vadd.f32 0.0, %v808
        %v810 = vpop.f32.mrf.mxu0
        %v811 = vpop.f32.mrf.mxu0
        %v812 = vadd.f32 0.0, %v811
        %v813 = vpop.f32.mrf.mxu0
        %814 = vdwg.mxu0
        %815 = vrot.lane.b32.xlu0 %v571, 112
        %v816 = vpop.permute.xlu0 %815
        %817 = vrot.lane.b32.xlu0 %v571, 80
        %v818 = vpop.permute.xlu0 %817
        %v820 = vsel %vm575, %v816, 0
        %v823 = vsel %vm575, %v818, 0
        %825 = vmatprep.subr.bf16.mxu0 0
        %826 = vmatpush1.bf16.xpose.msra.mxu0 0
        %827 = vmatprep.subr.bf16.mxu0 0
        %828 = vmatpush1.bf16.xpose.msra.mxu0 0
        %829 = vmatprep.subr.bf16.mxu0 0
        %830 = vmatpush1.bf16.xpose.msra.mxu0 0
        %831 = vmatprep.subr.bf16.mxu0 0
        %832 = vmatpush1.bf16.xpose.msra.mxu0 0
        %833 = vmatprep.subr.bf16.mxu0 0
        %834 = vmatpush1.bf16.xpose.msra.mxu0 0
        %835 = vmatprep.subr.bf16.mxu0 0
        %836 = vmatpush1.bf16.xpose.msra.mxu0 0
        %837 = vmatprep.subr.bf16.mxu0 0
        %838 = vmatpush1.bf16.xpose.msra.mxu0 0
        %839 = vmatprep.subr.bf16.mxu0 0
        %840 = vmatpush1.bf16.xpose.msra.mxu0 %v823
        %841 = vmatprep.subr.bf16.mxu0 0
        %842 = vmatpush2.bf16.xpose.msra.mxu0 0
        %843 = vmatprep.subr.bf16.mxu0 0
        %844 = vmatpush2.bf16.xpose.msra.mxu0 0
        %845 = vmatprep.subr.bf16.mxu0 0
        %846 = vmatpush2.bf16.xpose.msra.mxu0 0
        %847 = vmatprep.subr.bf16.mxu0 0
        %848 = vmatpush2.bf16.xpose.msra.mxu0 0
        %849 = vmatprep.subr.bf16.mxu0 0
        %850 = vmatpush2.bf16.xpose.msra.mxu0 0
        %851 = vmatprep.subr.bf16.mxu0 0
        %852 = vmatpush2.bf16.xpose.msra.mxu0 0
        %853 = vmatprep.subr.bf16.mxu0 0
        %854 = vmatpush2.bf16.xpose.msra.mxu0 0
        %855 = vmatprep.subr.bf16.mxu0 0
        %856 = vmatpush2.bf16.xpose.msra.mxu0 0
        %857 = vmatprep.mubr.bf16.mxu0 0
        %858 = vmatmul.mubr.bf16.gmra.mxu0 %v820
        %v859 = vpop.f32.mrf.mxu0
        %v860 = vadd.f32 0.0, %v859
        %v861 = vpop.f32.mrf.mxu0
        %v862 = vpop.f32.mrf.mxu0
        %v863 = vadd.f32 0.0, %v862
        %v864 = vpop.f32.mrf.mxu0
        %865 = vdwg.mxu0
        %v866 = vsel %vm623, %v860, -inf
        %867 = vmax.xlane.f32.xlu0 %v866
        %v868 = vpop.xlane.xlu0 %867
        %v869 = vsel %vm623, %v863, -inf
        %870 = vmax.xlane.f32.xlu0 %v869
        %v871 = vpop.xlane.xlu0 %870
        %v872 = vsub.f32 %v860, %v868
        %v873 = vsub.f32 %v863, %v871
        %v874 = vmul.f32 %v872, 1.442695
        %v875 = vpow.pop %v874
        %v876 = vmul.f32 %v873, 1.442695
        %v877 = vpow.pop %v876
        %v878 = vsel %vm623, %v875, 0.0
        %879 = vadd.xlane.f32.xlu0 %v878
        %v880 = vpop.xlane.xlu0 %879
        %v881 = vsel %vm623, %v877, 0.0
        %882 = vadd.xlane.f32.xlu0 %v881
        %v883 = vpop.xlane.xlu0 %882
        %v884 = vrcp.pop %v880
        %v885 = vrcp.pop %v883
        %v886 = vmul.f32 %v875, %v884
        %v887 = vmul.f32 %v877, %v885
        %v888 = vpack.c.bf16 %v887, %v886
        %889 = vrot.lane.b32.xlu0 %v571, 48
        %v890 = vpop.permute.xlu0 %889
        %v893 = vsel %vm623, %v888, 0
        %895 = vmatprep.subr.bf16.mxu0 0
        %896 = vmatpush1.bf16.msra.mxu0 0
        %897 = vmatprep.subr.bf16.mxu0 0
        %898 = vmatpush1.bf16.msra.mxu0 0
        %899 = vmatprep.subr.bf16.mxu0 0
        %900 = vmatpush1.bf16.msra.mxu0 0
        %901 = vmatprep.subr.bf16.mxu0 0
        %902 = vmatpush1.bf16.msra.mxu0 0
        %903 = vmatprep.subr.bf16.mxu0 0
        %904 = vmatpush1.bf16.msra.mxu0 0
        %905 = vmatprep.subr.bf16.mxu0 0
        %906 = vmatpush1.bf16.msra.mxu0 0
        %907 = vmatprep.subr.bf16.mxu0 0
        %908 = vmatpush1.bf16.msra.mxu0 0
        %909 = vmatprep.subr.bf16.mxu0 0
        %910 = vmatpush1.bf16.msra.mxu0 %v890
        %911 = vmatprep.subr.bf16.mxu0 0
        %912 = vmatpush2.bf16.msra.mxu0 0
        %913 = vmatprep.subr.bf16.mxu0 0
        %914 = vmatpush2.bf16.msra.mxu0 0
        %915 = vmatprep.subr.bf16.mxu0 0
        %916 = vmatpush2.bf16.msra.mxu0 0
        %917 = vmatprep.subr.bf16.mxu0 0
        %918 = vmatpush2.bf16.msra.mxu0 0
        %919 = vmatprep.subr.bf16.mxu0 0
        %920 = vmatpush2.bf16.msra.mxu0 0
        %921 = vmatprep.subr.bf16.mxu0 0
        %922 = vmatpush2.bf16.msra.mxu0 0
        %923 = vmatprep.subr.bf16.mxu0 0
        %924 = vmatpush2.bf16.msra.mxu0 0
        %925 = vmatprep.subr.bf16.mxu0 0
        %926 = vmatpush2.bf16.msra.mxu0 0
        %927 = vmatprep.mubr.bf16.mxu0 0
        %928 = vmatmul.mubr.bf16.gmra.mxu0 %v893
        %v929 = vpop.f32.mrf.mxu0
        %v930 = vadd.f32 0.0, %v929
        %v931 = vpop.f32.mrf.mxu0
        %v932 = vpop.f32.mrf.mxu0
        %v933 = vadd.f32 0.0, %v932
        %v934 = vpop.f32.mrf.mxu0
        %935 = vdwg.mxu0
        %936 = vrot.lane.b32.xlu0 %v571, 104
        %v937 = vpop.permute.xlu0 %936
        %938 = vrot.lane.b32.xlu0 %v571, 72
        %v939 = vpop.permute.xlu0 %938
        %v941 = vsel %vm575, %v937, 0
        %v944 = vsel %vm575, %v939, 0
        %946 = vmatprep.subr.bf16.mxu0 0
        %947 = vmatpush1.bf16.xpose.msra.mxu0 0
        %948 = vmatprep.subr.bf16.mxu0 0
        %949 = vmatpush1.bf16.xpose.msra.mxu0 0
        %950 = vmatprep.subr.bf16.mxu0 0
        %951 = vmatpush1.bf16.xpose.msra.mxu0 0
        %952 = vmatprep.subr.bf16.mxu0 0
        %953 = vmatpush1.bf16.xpose.msra.mxu0 0
        %954 = vmatprep.subr.bf16.mxu0 0
        %955 = vmatpush1.bf16.xpose.msra.mxu0 0
        %956 = vmatprep.subr.bf16.mxu0 0
        %957 = vmatpush1.bf16.xpose.msra.mxu0 0
        %958 = vmatprep.subr.bf16.mxu0 0
        %959 = vmatpush1.bf16.xpose.msra.mxu0 0
        %960 = vmatprep.subr.bf16.mxu0 0
        %961 = vmatpush1.bf16.xpose.msra.mxu0 %v944
        %962 = vmatprep.subr.bf16.mxu0 0
        %963 = vmatpush2.bf16.xpose.msra.mxu0 0
        %964 = vmatprep.subr.bf16.mxu0 0
        %965 = vmatpush2.bf16.xpose.msra.mxu0 0
        %966 = vmatprep.subr.bf16.mxu0 0
        %967 = vmatpush2.bf16.xpose.msra.mxu0 0
        %968 = vmatprep.subr.bf16.mxu0 0
        %969 = vmatpush2.bf16.xpose.msra.mxu0 0
        %970 = vmatprep.subr.bf16.mxu0 0
        %971 = vmatpush2.bf16.xpose.msra.mxu0 0
        %972 = vmatprep.subr.bf16.mxu0 0
        %973 = vmatpush2.bf16.xpose.msra.mxu0 0
        %974 = vmatprep.subr.bf16.mxu0 0
        %975 = vmatpush2.bf16.xpose.msra.mxu0 0
        %976 = vmatprep.subr.bf16.mxu0 0
        %977 = vmatpush2.bf16.xpose.msra.mxu0 0
        %978 = vmatprep.mubr.bf16.mxu0 0
        %979 = vmatmul.mubr.bf16.gmra.mxu0 %v941
        %v980 = vpop.f32.mrf.mxu0
        %v981 = vadd.f32 0.0, %v980
        %v982 = vpop.f32.mrf.mxu0
        %v983 = vpop.f32.mrf.mxu0
        %v984 = vadd.f32 0.0, %v983
        %v985 = vpop.f32.mrf.mxu0
        %986 = vdwg.mxu0
        %v987 = vsel %vm623, %v981, -inf
        %988 = vmax.xlane.f32.xlu0 %v987
        %v989 = vpop.xlane.xlu0 %988
        %v990 = vsel %vm623, %v984, -inf
        %991 = vmax.xlane.f32.xlu0 %v990
        %v992 = vpop.xlane.xlu0 %991
        %v993 = vsub.f32 %v981, %v989
        %v994 = vsub.f32 %v984, %v992
        %v995 = vmul.f32 %v993, 1.442695
        %v996 = vpow.pop %v995
        %v997 = vmul.f32 %v994, 1.442695
        %v998 = vpow.pop %v997
        %v999 = vsel %vm623, %v996, 0.0
        %1000 = vadd.xlane.f32.xlu0 %v999
        %v1001 = vpop.xlane.xlu0 %1000
        %v1002 = vsel %vm623, %v998, 0.0
        %1003 = vadd.xlane.f32.xlu0 %v1002
        %v1004 = vpop.xlane.xlu0 %1003
        %v1005 = vrcp.pop %v1001
        %v1006 = vrcp.pop %v1004
        %v1007 = vmul.f32 %v996, %v1005
        %v1008 = vmul.f32 %v998, %v1006
        %v1009 = vpack.c.bf16 %v1008, %v1007
        %1010 = vrot.lane.b32.xlu0 %v571, 40
        %v1011 = vpop.permute.xlu0 %1010
        %v1014 = vsel %vm623, %v1009, 0
        %1016 = vmatprep.subr.bf16.mxu0 0
        %1017 = vmatpush1.bf16.msra.mxu0 0
        %1018 = vmatprep.subr.bf16.mxu0 0
        %1019 = vmatpush1.bf16.msra.mxu0 0
        %1020 = vmatprep.subr.bf16.mxu0 0
        %1021 = vmatpush1.bf16.msra.mxu0 0
        %1022 = vmatprep.subr.bf16.mxu0 0
        %1023 = vmatpush1.bf16.msra.mxu0 0
        %1024 = vmatprep.subr.bf16.mxu0 0
        %1025 = vmatpush1.bf16.msra.mxu0 0
        %1026 = vmatprep.subr.bf16.mxu0 0
        %1027 = vmatpush1.bf16.msra.mxu0 0
        %1028 = vmatprep.subr.bf16.mxu0 0
        %1029 = vmatpush1.bf16.msra.mxu0 0
        %1030 = vmatprep.subr.bf16.mxu0 0
        %1031 = vmatpush1.bf16.msra.mxu0 %v1011
        %1032 = vmatprep.subr.bf16.mxu0 0
        %1033 = vmatpush2.bf16.msra.mxu0 0
        %1034 = vmatprep.subr.bf16.mxu0 0
        %1035 = vmatpush2.bf16.msra.mxu0 0
        %1036 = vmatprep.subr.bf16.mxu0 0
        %1037 = vmatpush2.bf16.msra.mxu0 0
        %1038 = vmatprep.subr.bf16.mxu0 0
        %1039 = vmatpush2.bf16.msra.mxu0 0
        %1040 = vmatprep.subr.bf16.mxu0 0
        %1041 = vmatpush2.bf16.msra.mxu0 0
        %1042 = vmatprep.subr.bf16.mxu0 0
        %1043 = vmatpush2.bf16.msra.mxu0 0
        %1044 = vmatprep.subr.bf16.mxu0 0
        %1045 = vmatpush2.bf16.msra.mxu0 0
        %1046 = vmatprep.subr.bf16.mxu0 0
        %1047 = vmatpush2.bf16.msra.mxu0 0
        %1048 = vmatprep.mubr.bf16.mxu0 0
        %1049 = vmatmul.mubr.bf16.gmra.mxu0 %v1014
        %v1050 = vpop.f32.mrf.mxu0
        %v1051 = vadd.f32 0.0, %v1050
        %v1052 = vpop.f32.mrf.mxu0
        %v1053 = vpop.f32.mrf.mxu0
        %v1054 = vadd.f32 0.0, %v1053
        %v1055 = vpop.f32.mrf.mxu0
        %1056 = vdwg.mxu0
        %1059 = vrot.lane.b32.xlu0 %v809, 8
        %v1060 = vpop.permute.xlu0 %1059
        %1061 = vrot.lane.b32.xlu0 %v812, 8
        %v1062 = vpop.permute.xlu0 %1061
        %1067 = vrot.lane.b32.xlu0 %v930, 16
        %v1068 = vpop.permute.xlu0 %1067
        %1069 = vrot.lane.b32.xlu0 %v933, 16
        %v1070 = vpop.permute.xlu0 %1069
        %1075 = vrot.lane.b32.xlu0 %v1051, 24
        %v1076 = vpop.permute.xlu0 %1075
        %1077 = vrot.lane.b32.xlu0 %v1054, 24
        %v1078 = vpop.permute.xlu0 %1077
        %v1081 = vsel %vm575, %v688, %v1060
        %v1082 = vsel %vm575, %v691, %v1062
        %v1083 = vsel %vm623, %v1081, %v1068
        %v1084 = vsel %vm623, %v1082, %v1070
        %vm1085 = vcmask 195584
        %v1086 = vsel %vm1085, %v1083, %v1076
        %v1087 = vsel %vm1085, %v1084, %v1078
        %v1088 = vpack.c.bf16 %v1087, %v1086
        %v1089 = vld [vmem:[#allocation8] sm:$0xf]
        %v1090 = vld [vmem:[#allocation8 + $0x4] sm:$0xf]
        %v1091 = vld [vmem:[#allocation8 + $0x8] sm:$0xf]
        %v1092 = vld [vmem:[#allocation8 + $0xc] sm:$0xf]
        %v1093 = vld [vmem:[#allocation11] sm:$0x1]
        %v1095 = vlaneseq
        %v1096 = vshrl.u32 %v1095, 7
        %v1097 = vsub.s32 0, %v1096
        %v1098 = vrot.slane %v1093, %v1097
        %v1104 = vunpack.c.l.b16 %v1089
        %v1105 = vunpack.c.l.b16 %v1090
        %v1106 = vunpack.c.l.b16 %v1091
        %v1107 = vunpack.c.l.b16 %v1092
        %v1108 = vpack.c.b16 %v1105, %v1104
        %v1109 = vpack.c.b16 %v1107, %v1106
        %v1113 = vsel %vm526, %v1088, 0
        %1115 = vmatprep.subr.bf16.mxu0 0
        %1116 = vmatpush1.bf16.msra.mxu0 0
        %1117 = vmatprep.subr.bf16.mxu0 0
        %1118 = vmatpush1.bf16.msra.mxu0 0
        %1119 = vmatprep.subr.bf16.mxu0 0
        %1120 = vmatpush1.bf16.msra.mxu0 0
        %1121 = vmatprep.subr.bf16.mxu0 0
        %1122 = vmatpush1.bf16.msra.mxu0 0
        %1123 = vmatprep.subr.bf16.mxu0 0
        %1124 = vmatpush1.bf16.msra.mxu0 0
        %1125 = vmatprep.subr.bf16.mxu0 0
        %1126 = vmatpush1.bf16.msra.mxu0 0
        %1127 = vmatprep.subr.bf16.mxu0 0
        %1128 = vmatpush1.bf16.msra.mxu0 %v1109
        %1129 = vmatprep.subr.bf16.mxu0 0
        %1130 = vmatpush1.bf16.msra.mxu0 %v1108
        %1131 = vmatprep.subr.bf16.mxu0 0
        %1132 = vmatpush2.bf16.msra.mxu0 0
        %1133 = vmatprep.subr.bf16.mxu0 0
        %1134 = vmatpush2.bf16.msra.mxu0 0
        %1135 = vmatprep.subr.bf16.mxu0 0
        %1136 = vmatpush2.bf16.msra.mxu0 0
        %1137 = vmatprep.subr.bf16.mxu0 0
        %1138 = vmatpush2.bf16.msra.mxu0 0
        %1139 = vmatprep.subr.bf16.mxu0 0
        %1140 = vmatpush2.bf16.msra.mxu0 0
        %1141 = vmatprep.subr.bf16.mxu0 0
        %1142 = vmatpush2.bf16.msra.mxu0 0
        %1143 = vmatprep.subr.bf16.mxu0 0
        %1144 = vmatpush2.bf16.msra.mxu0 0
        %1145 = vmatprep.subr.bf16.mxu0 0
        %1146 = vmatpush2.bf16.msra.mxu0 0
        %1147 = vmatprep.mubr.bf16.mxu0 0
        %1148 = vmatmul.mubr.bf16.gmra.mxu0 %v1113
        %v1149 = vpop.f32.mrf.mxu0
        %v1150 = vadd.f32 %v1098, %v1149
        %v1151 = vpop.f32.mrf.mxu0
        %v1152 = vpop.f32.mrf.mxu0
        %v1153 = vadd.f32 %v1098, %v1152
        %v1154 = vpop.f32.mrf.mxu0
        %1155 = vdwg.mxu0
        %v1156 = vadd.f32 %v500, %v1150
        %v1157 = vadd.f32 %v501, %v1153
        %s1158 = scalar_lea.vmem [#allocation11], 1
        %v1159 = vld [vmem:[%s1158] sm:$0x1]
        %s1160 = scalar_lea.vmem [#allocation11], 2
        %v1161 = vld [vmem:[%s1160] sm:$0x1]
        %v1162 = vsel %vm526, %v1156, 0.0
        %1163 = vadd.xlane.f32.xlu0 %v1162
        %v1164 = vpop.xlane.xlu0 %1163
        %v1165 = vsel %vm526, %v1157, 0.0
        %1166 = vadd.xlane.f32.xlu0 %v1165
        %v1167 = vpop.xlane.xlu0 %1166
        %v1168 = vrcp.pop 32.0
        %v1169 = vmul.f32 %v1164, %v1168
        %v1170 = vmul.f32 %v1167, %v1168
        %v1171 = vsub.f32 %v1156, %v1169
        %v1172 = vsub.f32 %v1157, %v1170
        %v1173 = vmul.f32 %v1171, %v1171
        %v1174 = vmul.f32 %v1172, %v1172
        %v1175 = vsel %vm526, %v1173, 0.0
        %1176 = vadd.xlane.f32.xlu0 %v1175
        %v1177 = vpop.xlane.xlu0 %1176
        %v1178 = vsel %vm526, %v1174, 0.0
        %1179 = vadd.xlane.f32.xlu0 %v1178
        %v1180 = vpop.xlane.xlu0 %1179
        %v1181 = vmul.f32 %v1177, %v1168
        %v1182 = vmul.f32 %v1180, %v1168
        %v1183 = vadd.f32 %v1181, 1e-05
        %v1184 = vadd.f32 %v1182, 1e-05
        %v1185 = vrsqrt.pop %v1183
        %v1186 = vrsqrt.pop %v1184
        %v1187 = vmul.f32 %v1171, %v1185
        %v1188 = vmul.f32 %v1172, %v1186
        %v1190 = vlaneseq
        %v1191 = vshrl.u32 %v1190, 7
        %v1192 = vsub.s32 0, %v1191
        %v1193 = vrot.slane %v1159, %v1192
        %v1195 = vmul.f32 %v1187, %v1193
        %v1196 = vmul.f32 %v1188, %v1193
        %v1198 = vlaneseq
        %v1199 = vshrl.u32 %v1198, 7
        %v1200 = vsub.s32 0, %v1199
        %v1201 = vrot.slane %v1161, %v1200
        %v1203 = vadd.f32 %v1195, %v1201
        %v1204 = vadd.f32 %v1196, %v1201
        %v1205 = vpack.c.bf16 %v1204, %v1203
        %v1206 = vld [vmem:[#allocation10] sm:$0xf]
        %v1207 = vld [vmem:[#allocation10 + $0x4] sm:$0xf]
        %v1208 = vld [vmem:[#allocation10 + $0x8] sm:$0xf]
        %v1209 = vld [vmem:[#allocation10 + $0xc] sm:$0xf]
        %s1210 = scalar_lea.vmem [#allocation11], 3
        %v1211 = vld [vmem:[%s1210] sm:$0x1]
        %v1213 = vlaneseq
        %v1214 = vshrl.u32 %v1213, 7
        %v1215 = vsub.s32 0, %v1214
        %v1216 = vrot.slane %v1211, %v1215
        %v1222 = vunpack.c.l.b16 %v1206
        %v1223 = vunpack.c.l.b16 %v1207
        %v1224 = vunpack.c.l.b16 %v1208
        %v1225 = vunpack.c.l.b16 %v1209
        %v1226 = vpack.c.b16 %v1223, %v1222
        %v1227 = vpack.c.b16 %v1225, %v1224
        %v1231 = vsel %vm526, %v1205, 0
        %1233 = vmatprep.subr.bf16.mxu0 0
        %1234 = vmatpush1.bf16.msra.mxu0 0
        %1235 = vmatprep.subr.bf16.mxu0 0
        %1236 = vmatpush1.bf16.msra.mxu0 0
        %1237 = vmatprep.subr.bf16.mxu0 0
        %1238 = vmatpush1.bf16.msra.mxu0 0
        %1239 = vmatprep.subr.bf16.mxu0 0
        %1240 = vmatpush1.bf16.msra.mxu0 0
        %1241 = vmatprep.subr.bf16.mxu0 0
        %1242 = vmatpush1.bf16.msra.mxu0 0
        %1243 = vmatprep.subr.bf16.mxu0 0
        %1244 = vmatpush1.bf16.msra.mxu0 0
        %1245 = vmatprep.subr.bf16.mxu0 0
        %1246 = vmatpush1.bf16.msra.mxu0 %v1227
        %1247 = vmatprep.subr.bf16.mxu0 0
        %1248 = vmatpush1.bf16.msra.mxu0 %v1226
        %1249 = vmatprep.subr.bf16.mxu0 0
        %1250 = vmatpush2.bf16.msra.mxu0 0
        %1251 = vmatprep.subr.bf16.mxu0 0
        %1252 = vmatpush2.bf16.msra.mxu0 0
        %1253 = vmatprep.subr.bf16.mxu0 0
        %1254 = vmatpush2.bf16.msra.mxu0 0
        %1255 = vmatprep.subr.bf16.mxu0 0
        %1256 = vmatpush2.bf16.msra.mxu0 0
        %1257 = vmatprep.subr.bf16.mxu0 0
        %1258 = vmatpush2.bf16.msra.mxu0 0
        %1259 = vmatprep.subr.bf16.mxu0 0
        %1260 = vmatpush2.bf16.msra.mxu0 0
        %1261 = vmatprep.subr.bf16.mxu0 0
        %1262 = vmatpush2.bf16.msra.mxu0 0
        %1263 = vmatprep.subr.bf16.mxu0 0
        %1264 = vmatpush2.bf16.msra.mxu0 0
        %1265 = vmatprep.mubr.bf16.mxu0 0
        %1266 = vmatmul.mubr.bf16.gmra.mxu0 %v1231
        %v1267 = vpop.f32.mrf.mxu0
        %v1268 = vadd.f32 %v1216, %v1267
        %v1269 = vpop.f32.mrf.mxu0
        %v1270 = vpop.f32.mrf.mxu0
        %v1271 = vadd.f32 %v1216, %v1270
        %v1272 = vpop.f32.mrf.mxu0
        %1273 = vdwg.mxu0
        %v1274 = vmax.f32 %v1268, 0.0
        %v1275 = vmax.f32 %v1271, 0.0
        %v1276 = vpack.c.bf16 %v1275, %v1274
        %s1277 = scalar_lea.vmem [#allocation10], 16
        %v1278 = vld [vmem:[%s1277] sm:$0xf]
        %v1279 = vld [vmem:[%s1277 + $0x4] sm:$0xf]
        %v1280 = vld [vmem:[%s1277 + $0x8] sm:$0xf]
        %v1281 = vld [vmem:[%s1277 + $0xc] sm:$0xf]
        %s1282 = scalar_lea.vmem [#allocation11], 4
        %v1283 = vld [vmem:[%s1282] sm:$0x1]
        %v1285 = vlaneseq
        %v1286 = vshrl.u32 %v1285, 7
        %v1287 = vsub.s32 0, %v1286
        %v1288 = vrot.slane %v1283, %v1287
        %v1294 = vunpack.c.l.b16 %v1278
        %v1295 = vunpack.c.l.b16 %v1279
        %v1296 = vunpack.c.l.b16 %v1280
        %v1297 = vunpack.c.l.b16 %v1281
        %v1298 = vpack.c.b16 %v1295, %v1294
        %v1299 = vpack.c.b16 %v1297, %v1296
        %v1303 = vsel %vm526, %v1276, 0
        %1305 = vmatprep.subr.bf16.mxu0 0
        %1306 = vmatpush1.bf16.msra.mxu0 0
        %1307 = vmatprep.subr.bf16.mxu0 0
        %1308 = vmatpush1.bf16.msra.mxu0 0
        %1309 = vmatprep.subr.bf16.mxu0 0
        %1310 = vmatpush1.bf16.msra.mxu0 0
        %1311 = vmatprep.subr.bf16.mxu0 0
        %1312 = vmatpush1.bf16.msra.mxu0 0
        %1313 = vmatprep.subr.bf16.mxu0 0
        %1314 = vmatpush1.bf16.msra.mxu0 0
        %1315 = vmatprep.subr.bf16.mxu0 0
        %1316 = vmatpush1.bf16.msra.mxu0 0
        %1317 = vmatprep.subr.bf16.mxu0 0
        %1318 = vmatpush1.bf16.msra.mxu0 %v1299
        %1319 = vmatprep.subr.bf16.mxu0 0
        %1320 = vmatpush1.bf16.msra.mxu0 %v1298
        %1321 = vmatprep.subr.bf16.mxu0 0
        %1322 = vmatpush2.bf16.msra.mxu0 0
        %1323 = vmatprep.subr.bf16.mxu0 0
        %1324 = vmatpush2.bf16.msra.mxu0 0
        %1325 = vmatprep.subr.bf16.mxu0 0
        %1326 = vmatpush2.bf16.msra.mxu0 0
        %1327 = vmatprep.subr.bf16.mxu0 0
        %1328 = vmatpush2.bf16.msra.mxu0 0
        %1329 = vmatprep.subr.bf16.mxu0 0
        %1330 = vmatpush2.bf16.msra.mxu0 0
        %1331 = vmatprep.subr.bf16.mxu0 0
        %1332 = vmatpush2.bf16.msra.mxu0 0
        %1333 = vmatprep.subr.bf16.mxu0 0
        %1334 = vmatpush2.bf16.msra.mxu0 0
        %1335 = vmatprep.subr.bf16.mxu0 0
        %1336 = vmatpush2.bf16.msra.mxu0 0
        %1337 = vmatprep.mubr.bf16.mxu0 0
        %1338 = vmatmul.mubr.bf16.gmra.mxu0 %v1303
        %v1339 = vpop.f32.mrf.mxu0
        %v1340 = vadd.f32 %v1288, %v1339
        %v1341 = vpop.f32.mrf.mxu0
        %v1342 = vpop.f32.mrf.mxu0
        %v1343 = vadd.f32 %v1288, %v1342
        %v1344 = vpop.f32.mrf.mxu0
        %1345 = vdwg.mxu0
        %v1346 = vadd.f32 %v1203, %v1340
        %v1347 = vadd.f32 %v1204, %v1343
        %s1348 = scalar_lea.vmem [#allocation11], 5
        %v1349 = vld [vmem:[%s1348] sm:$0x1]
        %s1350 = scalar_lea.vmem [#allocation11], 6
        %v1351 = vld [vmem:[%s1350] sm:$0x1]
        %v1352 = vsel %vm526, %v1346, 0.0
        %1353 = vadd.xlane.f32.xlu0 %v1352
        %v1354 = vpop.xlane.xlu0 %1353
        %v1355 = vsel %vm526, %v1347, 0.0
        %1356 = vadd.xlane.f32.xlu0 %v1355
        %v1357 = vpop.xlane.xlu0 %1356
        %v1358 = vmul.f32 %v1354, %v1168
        %v1359 = vmul.f32 %v1357, %v1168
        %v1360 = vsub.f32 %v1346, %v1358
        %v1361 = vsub.f32 %v1347, %v1359
        %v1362 = vmul.f32 %v1360, %v1360
        %v1363 = vmul.f32 %v1361, %v1361
        %v1364 = vsel %vm526, %v1362, 0.0
        %1365 = vadd.xlane.f32.xlu0 %v1364
        %v1366 = vpop.xlane.xlu0 %1365
        %v1367 = vsel %vm526, %v1363, 0.0
        %1368 = vadd.xlane.f32.xlu0 %v1367
        %v1369 = vpop.xlane.xlu0 %1368
        %v1370 = vmul.f32 %v1366, %v1168
        %v1371 = vmul.f32 %v1369, %v1168
        %v1372 = vadd.f32 %v1370, 1e-05
        %v1373 = vadd.f32 %v1371, 1e-05
        %v1374 = vrsqrt.pop %v1372
        %v1375 = vrsqrt.pop %v1373
        %v1376 = vmul.f32 %v1360, %v1374
        %v1377 = vmul.f32 %v1361, %v1375
        %v1379 = vlaneseq
        %v1380 = vshrl.u32 %v1379, 7
        %v1381 = vsub.s32 0, %v1380
        %v1382 = vrot.slane %v1349, %v1381
        %v1384 = vmul.f32 %v1376, %v1382
        %v1385 = vmul.f32 %v1377, %v1382
        %v1387 = vlaneseq
        %v1388 = vshrl.u32 %v1387, 7
        %v1389 = vsub.s32 0, %v1388
        %v1390 = vrot.slane %v1351, %v1389
        %v1392 = vadd.f32 %v1384, %v1390
        %v1393 = vadd.f32 %v1385, %v1390
        %v1394 = vpack.c.bf16 %v1393, %v1392
        %s1395 = scalar_lea.vmem %s3, 16
        %v1396 = vld [vmem:[%s1395] sm:$0xf]
        %v1397 = vld [vmem:[%s1395 + $0x4] sm:$0xf]
        %v1398 = vld [vmem:[%s1395 + $0x8] sm:$0xf]
        %v1399 = vld [vmem:[%s1395 + $0xc] sm:$0xf]
        %s1400 = scalar_lea.vmem [#allocation7], 1
        %v1401 = vld [vmem:[%s1400] sm:$0x1]
        %v1403 = vlaneseq
        %v1404 = vshrl.u32 %v1403, 7
        %v1405 = vsub.s32 0, %v1404
        %v1406 = vrot.slane %v1401, %v1405
        %v1412 = vunpack.c.l.b16 %v1396
        %v1413 = vunpack.c.l.b16 %v1397
        %v1414 = vunpack.c.l.b16 %v1398
        %v1415 = vunpack.c.l.b16 %v1399
        %v1416 = vpack.c.b16 %v1413, %v1412
        %v1417 = vpack.c.b16 %v1415, %v1414
        %v1421 = vsel %vm526, %v1394, 0
        %1423 = vmatprep.subr.bf16.mxu0 0
        %1424 = vmatpush1.bf16.msra.mxu0 0
        %1425 = vmatprep.subr.bf16.mxu0 0
        %1426 = vmatpush1.bf16.msra.mxu0 0
        %1427 = vmatprep.subr.bf16.mxu0 0
        %1428 = vmatpush1.bf16.msra.mxu0 0
        %1429 = vmatprep.subr.bf16.mxu0 0
        %1430 = vmatpush1.bf16.msra.mxu0 0
        %1431 = vmatprep.subr.bf16.mxu0 0
        %1432 = vmatpush1.bf16.msra.mxu0 0
        %1433 = vmatprep.subr.bf16.mxu0 0
        %1434 = vmatpush1.bf16.msra.mxu0 0
        %1435 = vmatprep.subr.bf16.mxu0 0
        %1436 = vmatpush1.bf16.msra.mxu0 %v1417
        %1437 = vmatprep.subr.bf16.mxu0 0
        %1438 = vmatpush1.bf16.msra.mxu0 %v1416
        %1439 = vmatprep.subr.bf16.mxu0 0
        %1440 = vmatpush2.bf16.msra.mxu0 0
        %1441 = vmatprep.subr.bf16.mxu0 0
        %1442 = vmatpush2.bf16.msra.mxu0 0
        %1443 = vmatprep.subr.bf16.mxu0 0
        %1444 = vmatpush2.bf16.msra.mxu0 0
        %1445 = vmatprep.subr.bf16.mxu0 0
        %1446 = vmatpush2.bf16.msra.mxu0 0
        %1447 = vmatprep.subr.bf16.mxu0 0
        %1448 = vmatpush2.bf16.msra.mxu0 0
        %1449 = vmatprep.subr.bf16.mxu0 0
        %1450 = vmatpush2.bf16.msra.mxu0 0
        %1451 = vmatprep.subr.bf16.mxu0 0
        %1452 = vmatpush2.bf16.msra.mxu0 0
        %1453 = vmatprep.subr.bf16.mxu0 0
        %1454 = vmatpush2.bf16.msra.mxu0 0
        %1455 = vmatprep.mubr.bf16.mxu0 0
        %1456 = vmatmul.mubr.bf16.gmra.mxu0 %v1421
        %v1457 = vpop.f32.mrf.mxu0
        %v1458 = vadd.f32 %v1406, %v1457
        %v1459 = vpop.f32.mrf.mxu0
        %v1460 = vpop.f32.mrf.mxu0
        %v1461 = vadd.f32 %v1406, %v1460
        %v1462 = vpop.f32.mrf.mxu0
        %1463 = vdwg.mxu0
        %v1464 = vpack.c.bf16 %v1461, %v1458
        %1466 = vrot.lane.b32.xlu0 %v1464, 96
        %v1467 = vpop.permute.xlu0 %1466
        %v1469 = vsel %vm575, %v1464, 0
        %v1472 = vsel %vm575, %v1467, 0
        %1474 = vmatprep.subr.bf16.mxu0 0
        %1475 = vmatpush1.bf16.xpose.msra.mxu0 0
        %1476 = vmatprep.subr.bf16.mxu0 0
        %1477 = vmatpush1.bf16.xpose.msra.mxu0 0
        %1478 = vmatprep.subr.bf16.mxu0 0
        %1479 = vmatpush1.bf16.xpose.msra.mxu0 0
        %1480 = vmatprep.subr.bf16.mxu0 0
        %1481 = vmatpush1.bf16.xpose.msra.mxu0 0
        %1482 = vmatprep.subr.bf16.mxu0 0
        %1483 = vmatpush1.bf16.xpose.msra.mxu0 0
        %1484 = vmatprep.subr.bf16.mxu0 0
        %1485 = vmatpush1.bf16.xpose.msra.mxu0 0
        %1486 = vmatprep.subr.bf16.mxu0 0
        %1487 = vmatpush1.bf16.xpose.msra.mxu0 0
        %1488 = vmatprep.subr.bf16.mxu0 0
        %1489 = vmatpush1.bf16.xpose.msra.mxu0 %v1472
        %1490 = vmatprep.subr.bf16.mxu0 0
        %1491 = vmatpush2.bf16.xpose.msra.mxu0 0
        %1492 = vmatprep.subr.bf16.mxu0 0
        %1493 = vmatpush2.bf16.xpose.msra.mxu0 0
        %1494 = vmatprep.subr.bf16.mxu0 0
        %1495 = vmatpush2.bf16.xpose.msra.mxu0 0
        %1496 = vmatprep.subr.bf16.mxu0 0
        %1497 = vmatpush2.bf16.xpose.msra.mxu0 0
        %1498 = vmatprep.subr.bf16.mxu0 0
        %1499 = vmatpush2.bf16.xpose.msra.mxu0 0
        %1500 = vmatprep.subr.bf16.mxu0 0
        %1501 = vmatpush2.bf16.xpose.msra.mxu0 0
        %1502 = vmatprep.subr.bf16.mxu0 0
        %1503 = vmatpush2.bf16.xpose.msra.mxu0 0
        %1504 = vmatprep.subr.bf16.mxu0 0
        %1505 = vmatpush2.bf16.xpose.msra.mxu0 0
        %1506 = vmatprep.mubr.bf16.mxu0 0
        %1507 = vmatmul.mubr.bf16.gmra.mxu0 %v1469
        %v1508 = vpop.f32.mrf.mxu0
        %v1509 = vadd.f32 0.0, %v1508
        %v1510 = vpop.f32.mrf.mxu0
        %v1511 = vpop.f32.mrf.mxu0
        %v1512 = vadd.f32 0.0, %v1511
        %v1513 = vpop.f32.mrf.mxu0
        %1514 = vdwg.mxu0
        %v1515 = vsel %vm623, %v1509, -inf
        %1516 = vmax.xlane.f32.xlu0 %v1515
        %v1517 = vpop.xlane.xlu0 %1516
        %v1518 = vsel %vm623, %v1512, -inf
        %1519 = vmax.xlane.f32.xlu0 %v1518
        %v1520 = vpop.xlane.xlu0 %1519
        %v1521 = vsub.f32 %v1509, %v1517
        %v1522 = vsub.f32 %v1512, %v1520
        %v1523 = vmul.f32 %v1521, 1.442695
        %v1524 = vpow.pop %v1523
        %v1525 = vmul.f32 %v1522, 1.442695
        %v1526 = vpow.pop %v1525
        %v1527 = vsel %vm623, %v1524, 0.0
        %1528 = vadd.xlane.f32.xlu0 %v1527
        %v1529 = vpop.xlane.xlu0 %1528
        %v1530 = vsel %vm623, %v1526, 0.0
        %1531 = vadd.xlane.f32.xlu0 %v1530
        %v1532 = vpop.xlane.xlu0 %1531
        %v1533 = vrcp.pop %v1529
        %v1534 = vrcp.pop %v1532
        %v1535 = vmul.f32 %v1524, %v1533
        %v1536 = vmul.f32 %v1526, %v1534
        %v1537 = vpack.c.bf16 %v1536, %v1535
        %1538 = vrot.lane.b32.xlu0 %v1464, 64
        %v1539 = vpop.permute.xlu0 %1538
        %v1542 = vsel %vm623, %v1537, 0
        %1544 = vmatprep.subr.bf16.mxu0 0
        %1545 = vmatpush1.bf16.msra.mxu0 0
        %1546 = vmatprep.subr.bf16.mxu0 0
        %1547 = vmatpush1.bf16.msra.mxu0 0
        %1548 = vmatprep.subr.bf16.mxu0 0
        %1549 = vmatpush1.bf16.msra.mxu0 0
        %1550 = vmatprep.subr.bf16.mxu0 0
        %1551 = vmatpush1.bf16.msra.mxu0 0
        %1552 = vmatprep.subr.bf16.mxu0 0
        %1553 = vmatpush1.bf16.msra.mxu0 0
        %1554 = vmatprep.subr.bf16.mxu0 0
        %1555 = vmatpush1.bf16.msra.mxu0 0
        %1556 = vmatprep.subr.bf16.mxu0 0
        %1557 = vmatpush1.bf16.msra.mxu0 0
        %1558 = vmatprep.subr.bf16.mxu0 0
        %1559 = vmatpush1.bf16.msra.mxu0 %v1539
        %1560 = vmatprep.subr.bf16.mxu0 0
        %1561 = vmatpush2.bf16.msra.mxu0 0
        %1562 = vmatprep.subr.bf16.mxu0 0
        %1563 = vmatpush2.bf16.msra.mxu0 0
        %1564 = vmatprep.subr.bf16.mxu0 0
        %1565 = vmatpush2.bf16.msra.mxu0 0
        %1566 = vmatprep.subr.bf16.mxu0 0
        %1567 = vmatpush2.bf16.msra.mxu0 0
        %1568 = vmatprep.subr.bf16.mxu0 0
        %1569 = vmatpush2.bf16.msra.mxu0 0
        %1570 = vmatprep.subr.bf16.mxu0 0
        %1571 = vmatpush2.bf16.msra.mxu0 0
        %1572 = vmatprep.subr.bf16.mxu0 0
        %1573 = vmatpush2.bf16.msra.mxu0 0
        %1574 = vmatprep.subr.bf16.mxu0 0
        %1575 = vmatpush2.bf16.msra.mxu0 0
        %1576 = vmatprep.mubr.bf16.mxu0 0
        %1577 = vmatmul.mubr.bf16.gmra.mxu0 %v1542
        %v1578 = vpop.f32.mrf.mxu0
        %v1579 = vadd.f32 0.0, %v1578
        %v1580 = vpop.f32.mrf.mxu0
        %v1581 = vpop.f32.mrf.mxu0
        %v1582 = vadd.f32 0.0, %v1581
        %v1583 = vpop.f32.mrf.mxu0
        %1584 = vdwg.mxu0
        %1585 = vrot.lane.b32.xlu0 %v1464, 120
        %v1586 = vpop.permute.xlu0 %1585
        %1587 = vrot.lane.b32.xlu0 %v1464, 88
        %v1588 = vpop.permute.xlu0 %1587
        %v1590 = vsel %vm575, %v1586, 0
        %v1593 = vsel %vm575, %v1588, 0
        %1595 = vmatprep.subr.bf16.mxu0 0
        %1596 = vmatpush1.bf16.xpose.msra.mxu0 0
        %1597 = vmatprep.subr.bf16.mxu0 0
        %1598 = vmatpush1.bf16.xpose.msra.mxu0 0
        %1599 = vmatprep.subr.bf16.mxu0 0
        %1600 = vmatpush1.bf16.xpose.msra.mxu0 0
        %1601 = vmatprep.subr.bf16.mxu0 0
        %1602 = vmatpush1.bf16.xpose.msra.mxu0 0
        %1603 = vmatprep.subr.bf16.mxu0 0
        %1604 = vmatpush1.bf16.xpose.msra.mxu0 0
        %1605 = vmatprep.subr.bf16.mxu0 0
        %1606 = vmatpush1.bf16.xpose.msra.mxu0 0
        %1607 = vmatprep.subr.bf16.mxu0 0
        %1608 = vmatpush1.bf16.xpose.msra.mxu0 0
        %1609 = vmatprep.subr.bf16.mxu0 0
        %1610 = vmatpush1.bf16.xpose.msra.mxu0 %v1593
        %1611 = vmatprep.subr.bf16.mxu0 0
        %1612 = vmatpush2.bf16.xpose.msra.mxu0 0
        %1613 = vmatprep.subr.bf16.mxu0 0
        %1614 = vmatpush2.bf16.xpose.msra.mxu0 0
        %1615 = vmatprep.subr.bf16.mxu0 0
        %1616 = vmatpush2.bf16.xpose.msra.mxu0 0
        %1617 = vmatprep.subr.bf16.mxu0 0
        %1618 = vmatpush2.bf16.xpose.msra.mxu0 0
        %1619 = vmatprep.subr.bf16.mxu0 0
        %1620 = vmatpush2.bf16.xpose.msra.mxu0 0
        %1621 = vmatprep.subr.bf16.mxu0 0
        %1622 = vmatpush2.bf16.xpose.msra.mxu0 0
        %1623 = vmatprep.subr.bf16.mxu0 0
        %1624 = vmatpush2.bf16.xpose.msra.mxu0 0
        %1625 = vmatprep.subr.bf16.mxu0 0
        %1626 = vmatpush2.bf16.xpose.msra.mxu0 0
        %1627 = vmatprep.mubr.bf16.mxu0 0
        %1628 = vmatmul.mubr.bf16.gmra.mxu0 %v1590
        %v1629 = vpop.f32.mrf.mxu0
        %v1630 = vadd.f32 0.0, %v1629
        %v1631 = vpop.f32.mrf.mxu0
        %v1632 = vpop.f32.mrf.mxu0
        %v1633 = vadd.f32 0.0, %v1632
        %v1634 = vpop.f32.mrf.mxu0
        %1635 = vdwg.mxu0
        %v1636 = vsel %vm623, %v1630, -inf
        %1637 = vmax.xlane.f32.xlu0 %v1636
        %v1638 = vpop.xlane.xlu0 %1637
        %v1639 = vsel %vm623, %v1633, -inf
        %1640 = vmax.xlane.f32.xlu0 %v1639
        %v1641 = vpop.xlane.xlu0 %1640
        %v1642 = vsub.f32 %v1630, %v1638
        %v1643 = vsub.f32 %v1633, %v1641
        %v1644 = vmul.f32 %v1642, 1.442695
        %v1645 = vpow.pop %v1644
        %v1646 = vmul.f32 %v1643, 1.442695
        %v1647 = vpow.pop %v1646
        %v1648 = vsel %vm623, %v1645, 0.0
        %1649 = vadd.xlane.f32.xlu0 %v1648
        %v1650 = vpop.xlane.xlu0 %1649
        %v1651 = vsel %vm623, %v1647, 0.0
        %1652 = vadd.xlane.f32.xlu0 %v1651
        %v1653 = vpop.xlane.xlu0 %1652
        %v1654 = vrcp.pop %v1650
        %v1655 = vrcp.pop %v1653
        %v1656 = vmul.f32 %v1645, %v1654
        %v1657 = vmul.f32 %v1647, %v1655
        %v1658 = vpack.c.bf16 %v1657, %v1656
        %1659 = vrot.lane.b32.xlu0 %v1464, 56
        %v1660 = vpop.permute.xlu0 %1659
        %v1663 = vsel %vm623, %v1658, 0
        %1665 = vmatprep.subr.bf16.mxu0 0
        %1666 = vmatpush1.bf16.msra.mxu0 0
        %1667 = vmatprep.subr.bf16.mxu0 0
        %1668 = vmatpush1.bf16.msra.mxu0 0
        %1669 = vmatprep.subr.bf16.mxu0 0
        %1670 = vmatpush1.bf16.msra.mxu0 0
        %1671 = vmatprep.subr.bf16.mxu0 0
        %1672 = vmatpush1.bf16.msra.mxu0 0
        %1673 = vmatprep.subr.bf16.mxu0 0
        %1674 = vmatpush1.bf16.msra.mxu0 0
        %1675 = vmatprep.subr.bf16.mxu0 0
        %1676 = vmatpush1.bf16.msra.mxu0 0
        %1677 = vmatprep.subr.bf16.mxu0 0
        %1678 = vmatpush1.bf16.msra.mxu0 0
        %1679 = vmatprep.subr.bf16.mxu0 0
        %1680 = vmatpush1.bf16.msra.mxu0 %v1660
        %1681 = vmatprep.subr.bf16.mxu0 0
        %1682 = vmatpush2.bf16.msra.mxu0 0
        %1683 = vmatprep.subr.bf16.mxu0 0
        %1684 = vmatpush2.bf16.msra.mxu0 0
        %1685 = vmatprep.subr.bf16.mxu0 0
        %1686 = vmatpush2.bf16.msra.mxu0 0
        %1687 = vmatprep.subr.bf16.mxu0 0
        %1688 = vmatpush2.bf16.msra.mxu0 0
        %1689 = vmatprep.subr.bf16.mxu0 0
        %1690 = vmatpush2.bf16.msra.mxu0 0
        %1691 = vmatprep.subr.bf16.mxu0 0
        %1692 = vmatpush2.bf16.msra.mxu0 0
        %1693 = vmatprep.subr.bf16.mxu0 0
        %1694 = vmatpush2.bf16.msra.mxu0 0
        %1695 = vmatprep.subr.bf16.mxu0 0
        %1696 = vmatpush2.bf16.msra.mxu0 0
        %1697 = vmatprep.mubr.bf16.mxu0 0
        %1698 = vmatmul.mubr.bf16.gmra.mxu0 %v1663
        %v1699 = vpop.f32.mrf.mxu0
        %v1700 = vadd.f32 0.0, %v1699
        %v1701 = vpop.f32.mrf.mxu0
        %v1702 = vpop.f32.mrf.mxu0
        %v1703 = vadd.f32 0.0, %v1702
        %v1704 = vpop.f32.mrf.mxu0
        %1705 = vdwg.mxu0
        %1706 = vrot.lane.b32.xlu0 %v1464, 112
        %v1707 = vpop.permute.xlu0 %1706
        %1708 = vrot.lane.b32.xlu0 %v1464, 80
        %v1709 = vpop.permute.xlu0 %1708
        %v1711 = vsel %vm575, %v1707, 0
        %v1714 = vsel %vm575, %v1709, 0
        %1716 = vmatprep.subr.bf16.mxu0 0
        %1717 = vmatpush1.bf16.xpose.msra.mxu0 0
        %1718 = vmatprep.subr.bf16.mxu0 0
        %1719 = vmatpush1.bf16.xpose.msra.mxu0 0
        %1720 = vmatprep.subr.bf16.mxu0 0
        %1721 = vmatpush1.bf16.xpose.msra.mxu0 0
        %1722 = vmatprep.subr.bf16.mxu0 0
        %1723 = vmatpush1.bf16.xpose.msra.mxu0 0
        %1724 = vmatprep.subr.bf16.mxu0 0
        %1725 = vmatpush1.bf16.xpose.msra.mxu0 0
        %1726 = vmatprep.subr.bf16.mxu0 0
        %1727 = vmatpush1.bf16.xpose.msra.mxu0 0
        %1728 = vmatprep.subr.bf16.mxu0 0
        %1729 = vmatpush1.bf16.xpose.msra.mxu0 0
        %1730 = vmatprep.subr.bf16.mxu0 0
        %1731 = vmatpush1.bf16.xpose.msra.mxu0 %v1714
        %1732 = vmatprep.subr.bf16.mxu0 0
        %1733 = vmatpush2.bf16.xpose.msra.mxu0 0
        %1734 = vmatprep.subr.bf16.mxu0 0
        %1735 = vmatpush2.bf16.xpose.msra.mxu0 0
        %1736 = vmatprep.subr.bf16.mxu0 0
        %1737 = vmatpush2.bf16.xpose.msra.mxu0 0
        %1738 = vmatprep.subr.bf16.mxu0 0
        %1739 = vmatpush2.bf16.xpose.msra.mxu0 0
        %1740 = vmatprep.subr.bf16.mxu0 0
        %1741 = vmatpush2.bf16.xpose.msra.mxu0 0
        %1742 = vmatprep.subr.bf16.mxu0 0
        %1743 = vmatpush2.bf16.xpose.msra.mxu0 0
        %1744 = vmatprep.subr.bf16.mxu0 0
        %1745 = vmatpush2.bf16.xpose.msra.mxu0 0
        %1746 = vmatprep.subr.bf16.mxu0 0
        %1747 = vmatpush2.bf16.xpose.msra.mxu0 0
        %1748 = vmatprep.mubr.bf16.mxu0 0
        %1749 = vmatmul.mubr.bf16.gmra.mxu0 %v1711
        %v1750 = vpop.f32.mrf.mxu0
        %v1751 = vadd.f32 0.0, %v1750
        %v1752 = vpop.f32.mrf.mxu0
        %v1753 = vpop.f32.mrf.mxu0
        %v1754 = vadd.f32 0.0, %v1753
        %v1755 = vpop.f32.mrf.mxu0
        %1756 = vdwg.mxu0
        %v1757 = vsel %vm623, %v1751, -inf
        %1758 = vmax.xlane.f32.xlu0 %v1757
        %v1759 = vpop.xlane.xlu0 %1758
        %v1760 = vsel %vm623, %v1754, -inf
        %1761 = vmax.xlane.f32.xlu0 %v1760
        %v1762 = vpop.xlane.xlu0 %1761
        %v1763 = vsub.f32 %v1751, %v1759
        %v1764 = vsub.f32 %v1754, %v1762
        %v1765 = vmul.f32 %v1763, 1.442695
        %v1766 = vpow.pop %v1765
        %v1767 = vmul.f32 %v1764, 1.442695
        %v1768 = vpow.pop %v1767
        %v1769 = vsel %vm623, %v1766, 0.0
        %1770 = vadd.xlane.f32.xlu0 %v1769
        %v1771 = vpop.xlane.xlu0 %1770
        %v1772 = vsel %vm623, %v1768, 0.0
        %1773 = vadd.xlane.f32.xlu0 %v1772
        %v1774 = vpop.xlane.xlu0 %1773
        %v1775 = vrcp.pop %v1771
        %v1776 = vrcp.pop %v1774
        %v1777 = vmul.f32 %v1766, %v1775
        %v1778 = vmul.f32 %v1768, %v1776
        %v1779 = vpack.c.bf16 %v1778, %v1777
        %1780 = vrot.lane.b32.xlu0 %v1464, 48
        %v1781 = vpop.permute.xlu0 %1780
        %v1784 = vsel %vm623, %v1779, 0
        %1786 = vmatprep.subr.bf16.mxu0 0
        %1787 = vmatpush1.bf16.msra.mxu0 0
        %1788 = vmatprep.subr.bf16.mxu0 0
        %1789 = vmatpush1.bf16.msra.mxu0 0
        %1790 = vmatprep.subr.bf16.mxu0 0
        %1791 = vmatpush1.bf16.msra.mxu0 0
        %1792 = vmatprep.subr.bf16.mxu0 0
        %1793 = vmatpush1.bf16.msra.mxu0 0
        %1794 = vmatprep.subr.bf16.mxu0 0
        %1795 = vmatpush1.bf16.msra.mxu0 0
        %1796 = vmatprep.subr.bf16.mxu0 0
        %1797 = vmatpush1.bf16.msra.mxu0 0
        %1798 = vmatprep.subr.bf16.mxu0 0
        %1799 = vmatpush1.bf16.msra.mxu0 0
        %1800 = vmatprep.subr.bf16.mxu0 0
        %1801 = vmatpush1.bf16.msra.mxu0 %v1781
        %1802 = vmatprep.subr.bf16.mxu0 0
        %1803 = vmatpush2.bf16.msra.mxu0 0
        %1804 = vmatprep.subr.bf16.mxu0 0
        %1805 = vmatpush2.bf16.msra.mxu0 0
        %1806 = vmatprep.subr.bf16.mxu0 0
        %1807 = vmatpush2.bf16.msra.mxu0 0
        %1808 = vmatprep.subr.bf16.mxu0 0
        %1809 = vmatpush2.bf16.msra.mxu0 0
        %1810 = vmatprep.subr.bf16.mxu0 0
        %1811 = vmatpush2.bf16.msra.mxu0 0
        %1812 = vmatprep.subr.bf16.mxu0 0
        %1813 = vmatpush2.bf16.msra.mxu0 0
        %1814 = vmatprep.subr.bf16.mxu0 0
        %1815 = vmatpush2.bf16.msra.mxu0 0
        %1816 = vmatprep.subr.bf16.mxu0 0
        %1817 = vmatpush2.bf16.msra.mxu0 0
        %1818 = vmatprep.mubr.bf16.mxu0 0
        %1819 = vmatmul.mubr.bf16.gmra.mxu0 %v1784
        %v1820 = vpop.f32.mrf.mxu0
        %v1821 = vadd.f32 0.0, %v1820
        %v1822 = vpop.f32.mrf.mxu0
        %v1823 = vpop.f32.mrf.mxu0
        %v1824 = vadd.f32 0.0, %v1823
        %v1825 = vpop.f32.mrf.mxu0
        %1826 = vdwg.mxu0
        %1827 = vrot.lane.b32.xlu0 %v1464, 104
        %v1828 = vpop.permute.xlu0 %1827
        %1829 = vrot.lane.b32.xlu0 %v1464, 72
        %v1830 = vpop.permute.xlu0 %1829
        %v1832 = vsel %vm575, %v1828, 0
        %v1835 = vsel %vm575, %v1830, 0
        %1837 = vmatprep.subr.bf16.mxu0 0
        %1838 = vmatpush1.bf16.xpose.msra.mxu0 0
        %1839 = vmatprep.subr.bf16.mxu0 0
        %1840 = vmatpush1.bf16.xpose.msra.mxu0 0
        %1841 = vmatprep.subr.bf16.mxu0 0
        %1842 = vmatpush1.bf16.xpose.msra.mxu0 0
        %1843 = vmatprep.subr.bf16.mxu0 0
        %1844 = vmatpush1.bf16.xpose.msra.mxu0 0
        %1845 = vmatprep.subr.bf16.mxu0 0
        %1846 = vmatpush1.bf16.xpose.msra.mxu0 0
        %1847 = vmatprep.subr.bf16.mxu0 0
        %1848 = vmatpush1.bf16.xpose.msra.mxu0 0
        %1849 = vmatprep.subr.bf16.mxu0 0
        %1850 = vmatpush1.bf16.xpose.msra.mxu0 0
        %1851 = vmatprep.subr.bf16.mxu0 0
        %1852 = vmatpush1.bf16.xpose.msra.mxu0 %v1835
        %1853 = vmatprep.subr.bf16.mxu0 0
        %1854 = vmatpush2.bf16.xpose.msra.mxu0 0
        %1855 = vmatprep.subr.bf16.mxu0 0
        %1856 = vmatpush2.bf16.xpose.msra.mxu0 0
        %1857 = vmatprep.subr.bf16.mxu0 0
        %1858 = vmatpush2.bf16.xpose.msra.mxu0 0
        %1859 = vmatprep.subr.bf16.mxu0 0
        %1860 = vmatpush2.bf16.xpose.msra.mxu0 0
        %1861 = vmatprep.subr.bf16.mxu0 0
        %1862 = vmatpush2.bf16.xpose.msra.mxu0 0
        %1863 = vmatprep.subr.bf16.mxu0 0
        %1864 = vmatpush2.bf16.xpose.msra.mxu0 0
        %1865 = vmatprep.subr.bf16.mxu0 0
        %1866 = vmatpush2.bf16.xpose.msra.mxu0 0
        %1867 = vmatprep.subr.bf16.mxu0 0
        %1868 = vmatpush2.bf16.xpose.msra.mxu0 0
        %1869 = vmatprep.mubr.bf16.mxu0 0
        %1870 = vmatmul.mubr.bf16.gmra.mxu0 %v1832
        %v1871 = vpop.f32.mrf.mxu0
        %v1872 = vadd.f32 0.0, %v1871
        %v1873 = vpop.f32.mrf.mxu0
        %v1874 = vpop.f32.mrf.mxu0
        %v1875 = vadd.f32 0.0, %v1874
        %v1876 = vpop.f32.mrf.mxu0
        %1877 = vdwg.mxu0
        %v1878 = vsel %vm623, %v1872, -inf
        %1879 = vmax.xlane.f32.xlu0 %v1878
        %v1880 = vpop.xlane.xlu0 %1879
        %v1881 = vsel %vm623, %v1875, -inf
        %1882 = vmax.xlane.f32.xlu0 %v1881
        %v1883 = vpop.xlane.xlu0 %1882
        %v1884 = vsub.f32 %v1872, %v1880
        %v1885 = vsub.f32 %v1875, %v1883
        %v1886 = vmul.f32 %v1884, 1.442695
        %v1887 = vpow.pop %v1886
        %v1888 = vmul.f32 %v1885, 1.442695
        %v1889 = vpow.pop %v1888
        %v1890 = vsel %vm623, %v1887, 0.0
        %1891 = vadd.xlane.f32.xlu0 %v1890
        %v1892 = vpop.xlane.xlu0 %1891
        %v1893 = vsel %vm623, %v1889, 0.0
        %1894 = vadd.xlane.f32.xlu0 %v1893
        %v1895 = vpop.xlane.xlu0 %1894
        %v1896 = vrcp.pop %v1892
        %v1897 = vrcp.pop %v1895
        %v1898 = vmul.f32 %v1887, %v1896
        %v1899 = vmul.f32 %v1889, %v1897
        %v1900 = vpack.c.bf16 %v1899, %v1898
        %1901 = vrot.lane.b32.xlu0 %v1464, 40
        %v1902 = vpop.permute.xlu0 %1901
        %v1905 = vsel %vm623, %v1900, 0
        %1907 = vmatprep.subr.bf16.mxu0 0
        %1908 = vmatpush1.bf16.msra.mxu0 0
        %1909 = vmatprep.subr.bf16.mxu0 0
        %1910 = vmatpush1.bf16.msra.mxu0 0
        %1911 = vmatprep.subr.bf16.mxu0 0
        %1912 = vmatpush1.bf16.msra.mxu0 0
        %1913 = vmatprep.subr.bf16.mxu0 0
        %1914 = vmatpush1.bf16.msra.mxu0 0
        %1915 = vmatprep.subr.bf16.mxu0 0
        %1916 = vmatpush1.bf16.msra.mxu0 0
        %1917 = vmatprep.subr.bf16.mxu0 0
        %1918 = vmatpush1.bf16.msra.mxu0 0
        %1919 = vmatprep.subr.bf16.mxu0 0
        %1920 = vmatpush1.bf16.msra.mxu0 0
        %1921 = vmatprep.subr.bf16.mxu0 0
        %1922 = vmatpush1.bf16.msra.mxu0 %v1902
        %1923 = vmatprep.subr.bf16.mxu0 0
        %1924 = vmatpush2.bf16.msra.mxu0 0
        %1925 = vmatprep.subr.bf16.mxu0 0
        %1926 = vmatpush2.bf16.msra.mxu0 0
        %1927 = vmatprep.subr.bf16.mxu0 0
        %1928 = vmatpush2.bf16.msra.mxu0 0
        %1929 = vmatprep.subr.bf16.mxu0 0
        %1930 = vmatpush2.bf16.msra.mxu0 0
        %1931 = vmatprep.subr.bf16.mxu0 0
        %1932 = vmatpush2.bf16.msra.mxu0 0
        %1933 = vmatprep.subr.bf16.mxu0 0
        %1934 = vmatpush2.bf16.msra.mxu0 0
        %1935 = vmatprep.subr.bf16.mxu0 0
        %1936 = vmatpush2.bf16.msra.mxu0 0
        %1937 = vmatprep.subr.bf16.mxu0 0
        %1938 = vmatpush2.bf16.msra.mxu0 0
        %1939 = vmatprep.mubr.bf16.mxu0 0
        %1940 = vmatmul.mubr.bf16.gmra.mxu0 %v1905
        %v1941 = vpop.f32.mrf.mxu0
        %v1942 = vadd.f32 0.0, %v1941
        %v1943 = vpop.f32.mrf.mxu0
        %v1944 = vpop.f32.mrf.mxu0
        %v1945 = vadd.f32 0.0, %v1944
        %v1946 = vpop.f32.mrf.mxu0
        %1947 = vdwg.mxu0
        %1950 = vrot.lane.b32.xlu0 %v1700, 8
        %v1951 = vpop.permute.xlu0 %1950
        %1952 = vrot.lane.b32.xlu0 %v1703, 8
        %v1953 = vpop.permute.xlu0 %1952
        %1958 = vrot.lane.b32.xlu0 %v1821, 16
        %v1959 = vpop.permute.xlu0 %1958
        %1960 = vrot.lane.b32.xlu0 %v1824, 16
        %v1961 = vpop.permute.xlu0 %1960
        %1966 = vrot.lane.b32.xlu0 %v1942, 24
        %v1967 = vpop.permute.xlu0 %1966
        %1968 = vrot.lane.b32.xlu0 %v1945, 24
        %v1969 = vpop.permute.xlu0 %1968
        %v1972 = vsel %vm575, %v1579, %v1951
        %v1973 = vsel %vm575, %v1582, %v1953
        %v1974 = vsel %vm623, %v1972, %v1959
        %v1975 = vsel %vm623, %v1973, %v1961
        %v1976 = vsel %vm1085, %v1974, %v1967
        %v1977 = vsel %vm1085, %v1975, %v1969
        %v1978 = vpack.c.bf16 %v1977, %v1976
        %s1979 = scalar_lea.vmem [#allocation8], 16
        %v1980 = vld [vmem:[%s1979] sm:$0xf]
        %v1981 = vld [vmem:[%s1979 + $0x4] sm:$0xf]
        %v1982 = vld [vmem:[%s1979 + $0x8] sm:$0xf]
        %v1983 = vld [vmem:[%s1979 + $0xc] sm:$0xf]
        %s1984 = scalar_lea.vmem [#allocation11], 7
        %v1985 = vld [vmem:[%s1984] sm:$0x1]
        %v1987 = vlaneseq
        %v1988 = vshrl.u32 %v1987, 7
        %v1989 = vsub.s32 0, %v1988
        %v1990 = vrot.slane %v1985, %v1989
        %v1996 = vunpack.c.l.b16 %v1980
        %v1997 = vunpack.c.l.b16 %v1981
        %v1998 = vunpack.c.l.b16 %v1982
        %v1999 = vunpack.c.l.b16 %v1983
        %v2000 = vpack.c.b16 %v1997, %v1996
        %v2001 = vpack.c.b16 %v1999, %v1998
        %v2005 = vsel %vm526, %v1978, 0
        %2007 = vmatprep.subr.bf16.mxu0 0
        %2008 = vmatpush1.bf16.msra.mxu0 0
        %2009 = vmatprep.subr.bf16.mxu0 0
        %2010 = vmatpush1.bf16.msra.mxu0 0
        %2011 = vmatprep.subr.bf16.mxu0 0
        %2012 = vmatpush1.bf16.msra.mxu0 0
        %2013 = vmatprep.subr.bf16.mxu0 0
        %2014 = vmatpush1.bf16.msra.mxu0 0
        %2015 = vmatprep.subr.bf16.mxu0 0
        %2016 = vmatpush1.bf16.msra.mxu0 0
        %2017 = vmatprep.subr.bf16.mxu0 0
        %2018 = vmatpush1.bf16.msra.mxu0 0
        %2019 = vmatprep.subr.bf16.mxu0 0
        %2020 = vmatpush1.bf16.msra.mxu0 %v2001
        %2021 = vmatprep.subr.bf16.mxu0 0
        %2022 = vmatpush1.bf16.msra.mxu0 %v2000
        %2023 = vmatprep.subr.bf16.mxu0 0
        %2024 = vmatpush2.bf16.msra.mxu0 0
        %2025 = vmatprep.subr.bf16.mxu0 0
        %2026 = vmatpush2.bf16.msra.mxu0 0
        %2027 = vmatprep.subr.bf16.mxu0 0
        %2028 = vmatpush2.bf16.msra.mxu0 0
        %2029 = vmatprep.subr.bf16.mxu0 0
        %2030 = vmatpush2.bf16.msra.mxu0 0
        %2031 = vmatprep.subr.bf16.mxu0 0
        %2032 = vmatpush2.bf16.msra.mxu0 0
        %2033 = vmatprep.subr.bf16.mxu0 0
        %2034 = vmatpush2.bf16.msra.mxu0 0
        %2035 = vmatprep.subr.bf16.mxu0 0
        %2036 = vmatpush2.bf16.msra.mxu0 0
        %2037 = vmatprep.subr.bf16.mxu0 0
        %2038 = vmatpush2.bf16.msra.mxu0 0
        %2039 = vmatprep.mubr.bf16.mxu0 0
        %2040 = vmatmul.mubr.bf16.gmra.mxu0 %v2005
        %v2041 = vpop.f32.mrf.mxu0
        %v2042 = vadd.f32 %v1990, %v2041
        %v2043 = vpop.f32.mrf.mxu0
        %v2044 = vpop.f32.mrf.mxu0
        %v2045 = vadd.f32 %v1990, %v2044
        %v2046 = vpop.f32.mrf.mxu0
        %2047 = vdwg.mxu0
        %v2048 = vadd.f32 %v1392, %v2042
        %v2049 = vadd.f32 %v1393, %v2045
        %s2050 = scalar_lea.vmem [#allocation11], 8
        %v2051 = vld [vmem:[%s2050] sm:$0x1]
        %s2052 = scalar_lea.vmem [#allocation11], 9
        %v2053 = vld [vmem:[%s2052] sm:$0x1]
        %v2054 = vsel %vm526, %v2048, 0.0
        %2055 = vadd.xlane.f32.xlu0 %v2054
        %v2056 = vpop.xlane.xlu0 %2055
        %v2057 = vsel %vm526, %v2049, 0.0
        %2058 = vadd.xlane.f32.xlu0 %v2057
        %v2059 = vpop.xlane.xlu0 %2058
        %v2060 = vmul.f32 %v2056, %v1168
        %v2061 = vmul.f32 %v2059, %v1168
        %v2062 = vsub.f32 %v2048, %v2060
        %v2063 = vsub.f32 %v2049, %v2061
        %v2064 = vmul.f32 %v2062, %v2062
        %v2065 = vmul.f32 %v2063, %v2063
        %v2066 = vsel %vm526, %v2064, 0.0
        %2067 = vadd.xlane.f32.xlu0 %v2066
        %v2068 = vpop.xlane.xlu0 %2067
        %v2069 = vsel %vm526, %v2065, 0.0
        %2070 = vadd.xlane.f32.xlu0 %v2069
        %v2071 = vpop.xlane.xlu0 %2070
        %v2072 = vmul.f32 %v2068, %v1168
        %v2073 = vmul.f32 %v2071, %v1168
        %v2074 = vadd.f32 %v2072, 1e-05
        %v2075 = vadd.f32 %v2073, 1e-05
        %v2076 = vrsqrt.pop %v2074
        %v2077 = vrsqrt.pop %v2075
        %v2078 = vmul.f32 %v2062, %v2076
        %v2079 = vmul.f32 %v2063, %v2077
        %v2081 = vlaneseq
        %v2082 = vshrl.u32 %v2081, 7
        %v2083 = vsub.s32 0, %v2082
        %v2084 = vrot.slane %v2051, %v2083
        %v2086 = vmul.f32 %v2078, %v2084
        %v2087 = vmul.f32 %v2079, %v2084
        %v2089 = vlaneseq
        %v2090 = vshrl.u32 %v2089, 7
        %v2091 = vsub.s32 0, %v2090
        %v2092 = vrot.slane %v2053, %v2091
        %v2094 = vadd.f32 %v2086, %v2092
        %v2095 = vadd.f32 %v2087, %v2092
        %v2096 = vpack.c.bf16 %v2095, %v2094
        %s2097 = scalar_lea.vmem [#allocation10], 32
        %v2098 = vld [vmem:[%s2097] sm:$0xf]
        %v2099 = vld [vmem:[%s2097 + $0x4] sm:$0xf]
        %v2100 = vld [vmem:[%s2097 + $0x8] sm:$0xf]
        %v2101 = vld [vmem:[%s2097 + $0xc] sm:$0xf]
        %s2102 = scalar_lea.vmem [#allocation11], 10
        %v2103 = vld [vmem:[%s2102] sm:$0x1]
        %v2105 = vlaneseq
        %v2106 = vshrl.u32 %v2105, 7
        %v2107 = vsub.s32 0, %v2106
        %v2108 = vrot.slane %v2103, %v2107
        %v2114 = vunpack.c.l.b16 %v2098
        %v2115 = vunpack.c.l.b16 %v2099
        %v2116 = vunpack.c.l.b16 %v2100
        %v2117 = vunpack.c.l.b16 %v2101
        %v2118 = vpack.c.b16 %v2115, %v2114
        %v2119 = vpack.c.b16 %v2117, %v2116
        %v2123 = vsel %vm526, %v2096, 0
        %2125 = vmatprep.subr.bf16.mxu0 0
        %2126 = vmatpush1.bf16.msra.mxu0 0
        %2127 = vmatprep.subr.bf16.mxu0 0
        %2128 = vmatpush1.bf16.msra.mxu0 0
        %2129 = vmatprep.subr.bf16.mxu0 0
        %2130 = vmatpush1.bf16.msra.mxu0 0
        %2131 = vmatprep.subr.bf16.mxu0 0
        %2132 = vmatpush1.bf16.msra.mxu0 0
        %2133 = vmatprep.subr.bf16.mxu0 0
        %2134 = vmatpush1.bf16.msra.mxu0 0
        %2135 = vmatprep.subr.bf16.mxu0 0
        %2136 = vmatpush1.bf16.msra.mxu0 0
        %2137 = vmatprep.subr.bf16.mxu0 0
        %2138 = vmatpush1.bf16.msra.mxu0 %v2119
        %2139 = vmatprep.subr.bf16.mxu0 0
        %2140 = vmatpush1.bf16.msra.mxu0 %v2118
        %2141 = vmatprep.subr.bf16.mxu0 0
        %2142 = vmatpush2.bf16.msra.mxu0 0
        %2143 = vmatprep.subr.bf16.mxu0 0
        %2144 = vmatpush2.bf16.msra.mxu0 0
        %2145 = vmatprep.subr.bf16.mxu0 0
        %2146 = vmatpush2.bf16.msra.mxu0 0
        %2147 = vmatprep.subr.bf16.mxu0 0
        %2148 = vmatpush2.bf16.msra.mxu0 0
        %2149 = vmatprep.subr.bf16.mxu0 0
        %2150 = vmatpush2.bf16.msra.mxu0 0
        %2151 = vmatprep.subr.bf16.mxu0 0
        %2152 = vmatpush2.bf16.msra.mxu0 0
        %2153 = vmatprep.subr.bf16.mxu0 0
        %2154 = vmatpush2.bf16.msra.mxu0 0
        %2155 = vmatprep.subr.bf16.mxu0 0
        %2156 = vmatpush2.bf16.msra.mxu0 0
        %2157 = vmatprep.mubr.bf16.mxu0 0
        %2158 = vmatmul.mubr.bf16.gmra.mxu0 %v2123
        %v2159 = vpop.f32.mrf.mxu0
        %v2160 = vadd.f32 %v2108, %v2159
        %v2161 = vpop.f32.mrf.mxu0
        %v2162 = vpop.f32.mrf.mxu0
        %v2163 = vadd.f32 %v2108, %v2162
        %v2164 = vpop.f32.mrf.mxu0
        %2165 = vdwg.mxu0
        %v2166 = vmax.f32 %v2160, 0.0
        %v2167 = vmax.f32 %v2163, 0.0
        %v2168 = vpack.c.bf16 %v2167, %v2166
        %s2169 = scalar_lea.vmem [#allocation10], 48
        %v2170 = vld [vmem:[%s2169] sm:$0xf]
        %v2171 = vld [vmem:[%s2169 + $0x4] sm:$0xf]
        %v2172 = vld [vmem:[%s2169 + $0x8] sm:$0xf]
        %v2173 = vld [vmem:[%s2169 + $0xc] sm:$0xf]
        %s2174 = scalar_lea.vmem [#allocation11], 11
        %v2175 = vld [vmem:[%s2174] sm:$0x1]
        %v2177 = vlaneseq
        %v2178 = vshrl.u32 %v2177, 7
        %v2179 = vsub.s32 0, %v2178
        %v2180 = vrot.slane %v2175, %v2179
        %v2186 = vunpack.c.l.b16 %v2170
        %v2187 = vunpack.c.l.b16 %v2171
        %v2188 = vunpack.c.l.b16 %v2172
        %v2189 = vunpack.c.l.b16 %v2173
        %v2190 = vpack.c.b16 %v2187, %v2186
        %v2191 = vpack.c.b16 %v2189, %v2188
        %v2195 = vsel %vm526, %v2168, 0
        %2197 = vmatprep.subr.bf16.mxu0 0
        %2198 = vmatpush1.bf16.msra.mxu0 0
        %2199 = vmatprep.subr.bf16.mxu0 0
        %2200 = vmatpush1.bf16.msra.mxu0 0
        %2201 = vmatprep.subr.bf16.mxu0 0
        %2202 = vmatpush1.bf16.msra.mxu0 0
        %2203 = vmatprep.subr.bf16.mxu0 0
        %2204 = vmatpush1.bf16.msra.mxu0 0
        %2205 = vmatprep.subr.bf16.mxu0 0
        %2206 = vmatpush1.bf16.msra.mxu0 0
        %2207 = vmatprep.subr.bf16.mxu0 0
        %2208 = vmatpush1.bf16.msra.mxu0 0
        %2209 = vmatprep.subr.bf16.mxu0 0
        %2210 = vmatpush1.bf16.msra.mxu0 %v2191
        %2211 = vmatprep.subr.bf16.mxu0 0
        %2212 = vmatpush1.bf16.msra.mxu0 %v2190
        %2213 = vmatprep.subr.bf16.mxu0 0
        %2214 = vmatpush2.bf16.msra.mxu0 0
        %2215 = vmatprep.subr.bf16.mxu0 0
        %2216 = vmatpush2.bf16.msra.mxu0 0
        %2217 = vmatprep.subr.bf16.mxu0 0
        %2218 = vmatpush2.bf16.msra.mxu0 0
        %2219 = vmatprep.subr.bf16.mxu0 0
        %2220 = vmatpush2.bf16.msra.mxu0 0
        %2221 = vmatprep.subr.bf16.mxu0 0
        %2222 = vmatpush2.bf16.msra.mxu0 0
        %2223 = vmatprep.subr.bf16.mxu0 0
        %2224 = vmatpush2.bf16.msra.mxu0 0
        %2225 = vmatprep.subr.bf16.mxu0 0
        %2226 = vmatpush2.bf16.msra.mxu0 0
        %2227 = vmatprep.subr.bf16.mxu0 0
        %2228 = vmatpush2.bf16.msra.mxu0 0
        %2229 = vmatprep.mubr.bf16.mxu0 0
        %2230 = vmatmul.mubr.bf16.gmra.mxu0 %v2195
        %v2231 = vpop.f32.mrf.mxu0
        %v2232 = vadd.f32 %v2180, %v2231
        %v2233 = vpop.f32.mrf.mxu0
        %v2234 = vpop.f32.mrf.mxu0
        %v2235 = vadd.f32 %v2180, %v2234
        %v2236 = vpop.f32.mrf.mxu0
        %2237 = vdwg.mxu0
        %v2238 = vadd.f32 %v2094, %v2232
        %v2239 = vadd.f32 %v2095, %v2235
        %s2240 = scalar_lea.vmem [#allocation11], 12
        %v2241 = vld [vmem:[%s2240] sm:$0x1]
        %s2242 = scalar_lea.vmem [#allocation11], 13
        %v2243 = vld [vmem:[%s2242] sm:$0x1]
        %v2244 = vsel %vm526, %v2238, 0.0
        %2245 = vadd.xlane.f32.xlu0 %v2244
        %v2246 = vpop.xlane.xlu0 %2245
        %v2247 = vsel %vm526, %v2239, 0.0
        %2248 = vadd.xlane.f32.xlu0 %v2247
        %v2249 = vpop.xlane.xlu0 %2248
        %v2250 = vmul.f32 %v2246, %v1168
        %v2251 = vmul.f32 %v2249, %v1168
        %v2252 = vsub.f32 %v2238, %v2250
        %v2253 = vsub.f32 %v2239, %v2251
        %v2254 = vmul.f32 %v2252, %v2252
        %v2255 = vmul.f32 %v2253, %v2253
        %v2256 = vsel %vm526, %v2254, 0.0
        %2257 = vadd.xlane.f32.xlu0 %v2256
        %v2258 = vpop.xlane.xlu0 %2257
        %v2259 = vsel %vm526, %v2255, 0.0
        %2260 = vadd.xlane.f32.xlu0 %v2259
        %v2261 = vpop.xlane.xlu0 %2260
        %v2262 = vmul.f32 %v2258, %v1168
        %v2263 = vmul.f32 %v2261, %v1168
        %v2264 = vadd.f32 %v2262, 1e-05
        %v2265 = vadd.f32 %v2263, 1e-05
        %v2266 = vrsqrt.pop %v2264
        %v2267 = vrsqrt.pop %v2265
        %v2268 = vmul.f32 %v2252, %v2266
        %v2269 = vmul.f32 %v2253, %v2267
        %v2271 = vlaneseq
        %v2272 = vshrl.u32 %v2271, 7
        %v2273 = vsub.s32 0, %v2272
        %v2274 = vrot.slane %v2241, %v2273
        %v2276 = vmul.f32 %v2268, %v2274
        %v2277 = vmul.f32 %v2269, %v2274
        %v2279 = vlaneseq
        %v2280 = vshrl.u32 %v2279, 7
        %v2281 = vsub.s32 0, %v2280
        %v2282 = vrot.slane %v2243, %v2281
        %v2284 = vadd.f32 %v2276, %v2282
        %v2285 = vadd.f32 %v2277, %v2282
        %v2286 = vpack.c.bf16 %v2285, %v2284
        %v2287 = vld [vmem:[%s8] sm:$0xf]
        %v2288 = vld [vmem:[%s8 + $0x4] sm:$0xf]
        %v2289 = vld [vmem:[%s8 + $0x8] sm:$0xf]
        %v2290 = vld [vmem:[%s8 + $0xc] sm:$0xf]
        %v2291 = vld [vmem:[%s9] sm:$0x1]
        %v2293 = vlaneseq
        %v2294 = vshrl.u32 %v2293, 7
        %v2295 = vsub.s32 0, %v2294
        %v2296 = vrot.slane %v2291, %v2295
        %v2302 = vunpack.c.l.b16 %v2287
        %v2303 = vunpack.c.l.b16 %v2288
        %v2304 = vunpack.c.l.b16 %v2289
        %v2305 = vunpack.c.l.b16 %v2290
        %v2306 = vpack.c.b16 %v2303, %v2302
        %v2307 = vpack.c.b16 %v2305, %v2304
        %v2311 = vsel %vm526, %v2286, 0
        %2313 = vmatprep.subr.bf16.mxu0 0
        %2314 = vmatpush1.bf16.msra.mxu0 0
        %2315 = vmatprep.subr.bf16.mxu0 0
        %2316 = vmatpush1.bf16.msra.mxu0 0
        %2317 = vmatprep.subr.bf16.mxu0 0
        %2318 = vmatpush1.bf16.msra.mxu0 0
        %2319 = vmatprep.subr.bf16.mxu0 0
        %2320 = vmatpush1.bf16.msra.mxu0 0
        %2321 = vmatprep.subr.bf16.mxu0 0
        %2322 = vmatpush1.bf16.msra.mxu0 0
        %2323 = vmatprep.subr.bf16.mxu0 0
        %2324 = vmatpush1.bf16.msra.mxu0 0
        %2325 = vmatprep.subr.bf16.mxu0 0
        %2326 = vmatpush1.bf16.msra.mxu0 %v2307
        %2327 = vmatprep.subr.bf16.mxu0 0
        %2328 = vmatpush1.bf16.msra.mxu0 %v2306
        %2329 = vmatprep.subr.bf16.mxu0 0
        %2330 = vmatpush2.bf16.msra.mxu0 0
        %2331 = vmatprep.subr.bf16.mxu0 0
        %2332 = vmatpush2.bf16.msra.mxu0 0
        %2333 = vmatprep.subr.bf16.mxu0 0
        %2334 = vmatpush2.bf16.msra.mxu0 0
        %2335 = vmatprep.subr.bf16.mxu0 0
        %2336 = vmatpush2.bf16.msra.mxu0 0
        %2337 = vmatprep.subr.bf16.mxu0 0
        %2338 = vmatpush2.bf16.msra.mxu0 0
        %2339 = vmatprep.subr.bf16.mxu0 0
        %2340 = vmatpush2.bf16.msra.mxu0 0
        %2341 = vmatprep.subr.bf16.mxu0 0
        %2342 = vmatpush2.bf16.msra.mxu0 0
        %2343 = vmatprep.subr.bf16.mxu0 0
        %2344 = vmatpush2.bf16.msra.mxu0 0
        %2345 = vmatprep.mubr.bf16.mxu0 0
        %2346 = vmatmul.mubr.bf16.gmra.mxu0 %v2311
        %v2347 = vpop.f32.mrf.mxu0
        %v2348 = vadd.f32 %v2296, %v2347
        %v2349 = vpop.f32.mrf.mxu0
        %v2350 = vpop.f32.mrf.mxu0
        %v2351 = vadd.f32 %v2296, %v2350
        %v2352 = vpop.f32.mrf.mxu0
        %2353 = vdwg.mxu0
        %2354 = vst [vmem:[%s438] sm:$0xff] %v2348
        %2355 = vst [vmem:[%s438 + $0x8] sm:$0xff] %v2351
        %s2356 = sand.u32 %s251, 1
        %s2357 = scalar_lea.sflag [#allocation4], %s2356
        %s2358 = sand.u32 %s251, 1
        %s2359 = smul.addr %s2358, 16
        %s2360 = scalar_lea.vmem [#allocation13], %s2359
        // Predicated region
        $region85: #{tpu_custom_call.1} parent=59 // pred_check
          %p2361 = pneg %p261
        $region86: #{tpu_custom_call.1} parent=59 // pred_check_branch
          %2363 = sbr.rel (%p2361) target = $region88
        $region87: #{tpu_custom_call.1} parent=59 // pred_region
          %s2365 = ssub.s32 256, 256
          %2366 = vsyncadd %s2357, %s2365
          %s2367 = smul.addr %s28, 2
          %s2368 = smul.addr %s2367, 128
          %s2369 = scalar_lea.hbm %s10, %s2368
          %s2370 = sshll.u32 %s2360, 4
          %s2371 = int_to_ptr.vmem [resolvable:$true] %s2370
          %2376 = dma.vmem_to_hbm [thread:$0]  %s2371, 256, %s2369, %s2357, 128, 128, 8
        $region88: #{tpu_custom_call.1} parent=59 // pred_fallthru
          _
      $region60: #{tpu_custom_call.1} parent=5 // pred_fallthru
        _
      %p2377 = scmp.le.s32.totalorder 2, %s23
      // Predicated region
      $region89: #{tpu_custom_call.1} parent=5 // pred_check
        %p2378 = pneg %p2377
      $region90: #{tpu_custom_call.1} parent=5 // pred_check_branch
        %2380 = sbr.rel (%p2378) target = $region92
      $region91: #{tpu_custom_call.1} parent=5 // pred_region
        %s2381 = ssub.s32 %s23, 2
        // Predicated region
        $region93: #{tpu_custom_call.1} parent=91 // pred_check
          %p2382 = pneg %p267
        $region94: #{tpu_custom_call.1} parent=91 // pred_check_branch
          %2384 = sbr.rel (%p2382) target = $region96
        $region95: #{tpu_custom_call.1} parent=91 // pred_region
          %s2385 = sand.u32 %s252, 1
          %s2386 = scalar_lea.sflag [#allocation4], %s2385
          %s2387 = sand.u32 %s252, 1
          %s2388 = smul.addr %s2387, 16
          %s2389 = scalar_lea.vmem [#allocation13], %s2388
          %2390 = dma.done %s2386, 256
        $region96: #{tpu_custom_call.1} parent=91 // pred_fallthru
          _
      $region92: #{tpu_custom_call.1} parent=5 // pred_fallthru
        _
    $region6: #{tpu_custom_call.1} parent=1 // loop_footer
      %s27 = sadd.s32 1, %s23
    $region7: #{tpu_custom_call.1} parent=1 // loop_footer_branch
      %22 = sbr.rel target = $region3
    $region8: #{tpu_custom_call.1} parent=1 // loop_exit
      _
    %2391 = vsyncpa [#allocation3], 1
    %s2392 = scalar_lea.sflag [#allocation3], 1
    %2393 = vsyncpa %s2392, 1
    %2394 = vsyncpa [#allocation6], 1
    %2395 = vsyncpa [#allocation9], 1
    %2396 = vsyncpa [#allocation12], 1
    %2397 = vsyncpa [#allocation4], 1
    %s2398 = scalar_lea.sflag [#allocation4], 1
    %2399 = vsyncpa %s2398, 1

</llo_original>
